<compile_context>
chip_gen: v7x
topology: tpu7x:2x2x1
jax: 0.10.0
libtpu: 0.0.40
codegen_flags: <defaults>
</compile_context>

<pallas_src>
import jax
import jax.numpy as jnp
from jax.experimental import pallas as pl
from jax.experimental.pallas import tpu as pltpu

NUM_MODULES = 3
EMB_SIZE_ATTENTION = 12
NUM_RADIAL = 32

IN_SIZE = 2 * EMB_SIZE_ATTENTION        # 24  (GatedLayer in_size)
OUT_SIZE = 2 * NUM_RADIAL               # 64  (GatedLayer out_size)
CAT_IN = NUM_MODULES * IN_SIZE          # 72  (fused relu width)
CAT_OUT = NUM_MODULES * OUT_SIZE        # 192 (fused gate width)
FINAL_OUT = NUM_RADIAL                  # 32  (final linear out)


def me_kernel(h_emb_ref, rbf_ref, w1_ref, b1_ref, w2_ref, b2_ref,
              wf_ref, bf_ref, out_ref):
    """Fused MEModule forward on one tile of edges.

    h_emb_ref : (TE, 24)   bf16
    rbf_ref   : (TE, 64)   bf16
    w1_ref    : (24, 72)   bf16   (w1 of all modules concat along out axis)
    b1_ref    : (1, 72)    f32
    w2_ref    : (72, 192)  bf16   (block-diagonal: module i at [24i:24i+24, 64i:64i+64])
    b2_ref    : (1, 192)   f32
    wf_ref    : (192, 32)  bf16   (final Linear weight, transposed)
    bf_ref    : (1, 32)    f32
    out_ref   : (TE, 32)   f32
    """
    h_emb = h_emb_ref[...]                                  # (TE, 24) bf16
    rbf = rbf_ref[...].astype(jnp.float32)                  # (TE, 64) f32

    # Fused GatedLayer stage 1: relu(linear1) for all 3 modules at once.
    x = jnp.dot(h_emb, w1_ref[...],
                preferred_element_type=jnp.float32) + b1_ref[...]
    x = jnp.maximum(x, 0.0)                                 # (TE, 72) f32

    # Fused GatedLayer stage 2 via block-diagonal w2 (zero blocks are exactly
    # zero -> no cross-module leakage).
    g = jnp.dot(x.astype(jnp.bfloat16), w2_ref[...],
                preferred_element_type=jnp.float32) + b2_ref[...]
    g = jax.nn.sigmoid(g)                                   # (TE, 192) f32

    # Lane-dense gating: rbf replicated per module, one wide f32 multiply.
    rbf3 = jnp.concatenate([rbf, rbf, rbf], axis=1)         # (TE, 192) f32
    gated = (rbf3 * g).astype(jnp.bfloat16)                 # (TE, 192) bf16

    # Final linear over hstack(me_blocks).
    acc = jnp.dot(gated, wf_ref[...],
                  preferred_element_type=jnp.float32) + bf_ref[...]
    out_ref[...] = acc.astype(out_ref.dtype)


def fuse_params(params):
    """Build the fused / block-diagonal bf16 weight layout used by the kernel."""
    w1, b1, w2, b2, wf, bf = (params["w1"], params["b1"], params["w2"],
                              params["b2"], params["wf"], params["bf"])
    w1_cat = jnp.concatenate(list(w1), axis=1)              # (24, 72)
    b1_cat = jnp.concatenate(list(b1), axis=1)              # (1, 72)
    w2_bd = jnp.zeros((CAT_IN, CAT_OUT), jnp.float32)
    for i in range(NUM_MODULES):
        w2_bd = w2_bd.at[i * IN_SIZE:(i + 1) * IN_SIZE,
                         i * OUT_SIZE:(i + 1) * OUT_SIZE].set(w2[i])
    b2_cat = jnp.concatenate(list(b2), axis=1)              # (1, 192)
    wf_cat = jnp.concatenate(list(wf), axis=0)              # (192, 32)
    return (w1_cat.astype(jnp.bfloat16), b1_cat.astype(jnp.float32),
            w2_bd.astype(jnp.bfloat16), b2_cat.astype(jnp.float32),
            wf_cat.astype(jnp.bfloat16), bf.astype(jnp.float32))


def me_module_forward(rbf, h, idx_s, idx_t, params, *, tile_e=512):
    """Pallas-backed MEModule.forward.

    rbf   : (E, 64) f32
    h     : (N, 12) f32
    idx_s : (E,) int32
    idx_t : (E,) int32
    returns (E, 32) f32
    """
    # Glue: gather + concat (index gather; not the kernel hot path).
    h_emb = jnp.concatenate((h[idx_s], h[idx_t]), axis=1)   # (E, 24)

    E = h_emb.shape[0]
    E_pad = ((E + tile_e - 1) // tile_e) * tile_e
    h_emb = h_emb.astype(jnp.bfloat16)
    rbf_bf = rbf.astype(jnp.bfloat16)
    if E_pad != E:
        h_emb = jnp.pad(h_emb, ((0, E_pad - E), (0, 0)))
        rbf_bf = jnp.pad(rbf_bf, ((0, E_pad - E), (0, 0)))

    w1_cat, b1_cat, w2_bd, b2_cat, wf_cat, bf = fuse_params(params)

    grid = (E_pad // tile_e,)
    const2 = lambda e: (0, 0)

    out = pl.pallas_call(
        me_kernel,
        out_shape=jax.ShapeDtypeStruct((E_pad, FINAL_OUT), jnp.float32),
        grid_spec=pltpu.PrefetchScalarGridSpec(
            num_scalar_prefetch=0,
            grid=grid,
            in_specs=[
                pl.BlockSpec((tile_e, IN_SIZE), lambda e: (e, 0)),   # h_emb tile
                pl.BlockSpec((tile_e, OUT_SIZE), lambda e: (e, 0)),  # rbf tile
                pl.BlockSpec((IN_SIZE, CAT_IN), const2),             # w1 fused
                pl.BlockSpec((1, CAT_IN), const2),                   # b1 fused
                pl.BlockSpec((CAT_IN, CAT_OUT), const2),             # w2 block-diag
                pl.BlockSpec((1, CAT_OUT), const2),                  # b2 fused
                pl.BlockSpec((CAT_OUT, FINAL_OUT), const2),          # wf fused
                pl.BlockSpec((1, FINAL_OUT), const2),                # bf
            ],
            out_specs=pl.BlockSpec((tile_e, FINAL_OUT), lambda e: (e, 0)),
        ),
        compiler_params=pltpu.CompilerParams(
            dimension_semantics=("parallel",)),
    )(h_emb, rbf_bf, w1_cat, b1_cat, w2_bd, b2_cat, wf_cat, bf)

    # torch.squeeze(..., dim=-1) is a no-op here since last dim == NUM_RADIAL != 1.
    return out[:E]


def init_params(key):
    """Deterministic synthetic parameters matching MEModule.__init__ shapes."""
    ks = jax.random.split(key, 6)
    # GatedLayer weights, stored transposed to (in, out) for row-major matmuls.
    w1 = 0.1 * jax.random.normal(ks[0], (NUM_MODULES, IN_SIZE, IN_SIZE), jnp.float32)
    b1 = 0.1 * jax.random.normal(ks[1], (NUM_MODULES, 1, IN_SIZE), jnp.float32)
    w2 = 0.1 * jax.random.normal(ks[2], (NUM_MODULES, IN_SIZE, OUT_SIZE), jnp.float32)
    b2 = 0.1 * jax.random.normal(ks[3], (NUM_MODULES, 1, OUT_SIZE), jnp.float32)
    # Final Linear(num_modules*2*num_radial, num_radial): stored per module.
    wf = 0.1 * jax.random.normal(ks[4], (NUM_MODULES, OUT_SIZE, FINAL_OUT), jnp.float32)
    bf = 0.1 * jax.random.normal(ks[5], (1, FINAL_OUT), jnp.float32)
    return dict(w1=w1, b1=b1, w2=w2, b2=b2, wf=wf, bf=bf)


def me_module_reference(rbf, h, idx_s, idx_t, params):
    """Pure-JAX f32 reference replicating the PyTorch forward exactly."""
    h_emb = jnp.concatenate((h[idx_s], h[idx_t]), axis=1)
    blocks = []
    for i in range(NUM_MODULES):
        x = jnp.maximum(h_emb @ params["w1"][i] + params["b1"][i], 0.0)
        g = jax.nn.sigmoid(x @ params["w2"][i] + params["b2"][i])
        blocks.append(rbf * g)
    stacked = jnp.concatenate(blocks, axis=1)               # hstack -> (E, 192)
    wf_full = jnp.concatenate([params["wf"][i] for i in range(NUM_MODULES)], axis=0)
    return stacked @ wf_full + params["bf"]                 # (E, 32)


if __name__ == "__main__":
    key = jax.random.PRNGKey(0)
    k_rbf, k_h, k_s, k_t, k_p = jax.random.split(key, 5)

    N = 32      # nodes
    E = 1000    # edges (not a multiple of tile_e -> exercises padding path)

    rbf = jax.random.normal(k_rbf, (E, 2 * NUM_RADIAL), jnp.float32)
    h = jax.random.normal(k_h, (N, EMB_SIZE_ATTENTION), jnp.float32)
    idx_s = jax.random.randint(k_s, (E,), 0, N, jnp.int32)
    idx_t = jax.random.randint(k_t, (E,), 0, N, jnp.int32)

    params = init_params(k_p)

    out = me_module_forward(rbf, h, idx_s, idx_t, params, tile_e=512)
    out = jax.block_until_ready(out)

    ref = me_module_reference(rbf, h, idx_s, idx_t, params)
    assert out.shape == (E, NUM_RADIAL), out.shape
    # bf16 matmul operands with f32 accumulation -> loose tolerance vs f32 ref.
    assert jnp.allclose(out, ref, atol=3e-2, rtol=3e-2), (
        "mismatch vs reference: max abs err = "
        f"{float(jnp.max(jnp.abs(out - ref)))}")

    print("KERNEL_OK")
</pallas_src>

<mosaic_0001>
module attributes {stable_mosaic.version = 11 : i64} {
  func.func @me_kernel(%arg0: i32, %arg1: memref<512x24xbf16, #tpu.memory_space<vmem>>, %arg2: memref<512x64xbf16, #tpu.memory_space<vmem>>, %arg3: memref<24x72xbf16, #tpu.memory_space<vmem>>, %arg4: memref<1x72xf32, #tpu.memory_space<vmem>>, %arg5: memref<72x192xbf16, #tpu.memory_space<vmem>>, %arg6: memref<1x192xf32, #tpu.memory_space<vmem>>, %arg7: memref<192x32xbf16, #tpu.memory_space<vmem>>, %arg8: memref<1x32xf32, #tpu.memory_space<vmem>>, %arg9: memref<512x32xf32, #tpu.memory_space<vmem>>) attributes {dimension_semantics = [#tpu.dimension_semantics<parallel>], iteration_bounds = array<i64: 2>, scalar_prefetch = 0 : i64, scratch_operands = 0 : i64, tpu.core_type = #tpu.core_type<tc>, window_params = [{transform_indices = @transform_0, window_bounds = array<i64: 512, 24>}, {transform_indices = @transform_1, window_bounds = array<i64: 512, 64>}, {pipeline_mode = #tpu.pipeline_mode<synchronous>, transform_indices = @transform_2, window_bounds = array<i64: 24, 72>}, {pipeline_mode = #tpu.pipeline_mode<synchronous>, transform_indices = @transform_3, window_bounds = array<i64: 1, 72>}, {pipeline_mode = #tpu.pipeline_mode<synchronous>, transform_indices = @transform_4, window_bounds = array<i64: 72, 192>}, {pipeline_mode = #tpu.pipeline_mode<synchronous>, transform_indices = @transform_5, window_bounds = array<i64: 1, 192>}, {pipeline_mode = #tpu.pipeline_mode<synchronous>, transform_indices = @transform_6, window_bounds = array<i64: 192, 32>}, {pipeline_mode = #tpu.pipeline_mode<synchronous>, transform_indices = @transform_7, window_bounds = array<i64: 1, 32>}, {transform_indices = @transform_8, window_bounds = array<i64: 512, 32>}]} {
    %c0 = arith.constant 0 : index
    %c0_0 = arith.constant 0 : index
    %0 = vector.load %arg1[%c0, %c0_0] : memref<512x24xbf16, #tpu.memory_space<vmem>>, vector<512x24xbf16>
    %c0_1 = arith.constant 0 : index
    %c0_2 = arith.constant 0 : index
    %1 = vector.load %arg2[%c0_1, %c0_2] : memref<512x64xbf16, #tpu.memory_space<vmem>>, vector<512x64xbf16>
    %2 = arith.extf %1 : vector<512x64xbf16> to vector<512x64xf32>
    %c0_3 = arith.constant 0 : index
    %c0_4 = arith.constant 0 : index
    %3 = vector.load %arg3[%c0_3, %c0_4] : memref<24x72xbf16, #tpu.memory_space<vmem>>, vector<24x72xbf16>
    %cst = arith.constant dense<0.000000e+00> : vector<512x72xf32>
    %4 = tpu.matmul %0, %3, %cst {dimension_numbers = #tpu.dot_dimension_numbers<[1], [0], [0], [1], [0, 0, 1, 1], [], []>} : vector<512x24xbf16>, vector<24x72xbf16>, vector<512x72xf32> -> vector<512x72xf32>
    %c0_5 = arith.constant 0 : index
    %c0_6 = arith.constant 0 : index
    %5 = vector.load %arg4[%c0_5, %c0_6] : memref<1x72xf32, #tpu.memory_space<vmem>>, vector<1x72xf32>
    %6 = vector.broadcast %5 : vector<1x72xf32> to vector<512x72xf32>
    %7 = arith.addf %4, %6 : vector<512x72xf32>
    %cst_7 = arith.constant 0.000000e+00 : f32
    %8 = vector.broadcast %cst_7 : f32 to vector<512x72xf32>
    %9 = arith.maximumf %7, %8 : vector<512x72xf32>
    %10 = arith.truncf %9 : vector<512x72xf32> to vector<512x72xbf16>
    %c0_8 = arith.constant 0 : index
    %c0_9 = arith.constant 0 : index
    %11 = vector.load %arg5[%c0_8, %c0_9] : memref<72x192xbf16, #tpu.memory_space<vmem>>, vector<72x192xbf16>
    %cst_10 = arith.constant dense<0.000000e+00> : vector<512x192xf32>
    %12 = tpu.matmul %10, %11, %cst_10 {dimension_numbers = #tpu.dot_dimension_numbers<[1], [0], [0], [1], [0, 0, 1, 1], [], []>} : vector<512x72xbf16>, vector<72x192xbf16>, vector<512x192xf32> -> vector<512x192xf32>
    %c0_11 = arith.constant 0 : index
    %c0_12 = arith.constant 0 : index
    %13 = vector.load %arg6[%c0_11, %c0_12] : memref<1x192xf32, #tpu.memory_space<vmem>>, vector<1x192xf32>
    %14 = vector.broadcast %13 : vector<1x192xf32> to vector<512x192xf32>
    %15 = arith.addf %12, %14 : vector<512x192xf32>
    %16 = arith.negf %15 : vector<512x192xf32>
    %17 = math.exp %16 : vector<512x192xf32>
    %cst_13 = arith.constant 1.000000e+00 : f32
    %18 = vector.broadcast %cst_13 : f32 to vector<512x192xf32>
    %19 = arith.addf %18, %17 : vector<512x192xf32>
    %20 = arith.divf %18, %19 : vector<512x192xf32>
    %21 = tpu.concatenate %2, %2, %2 in 1 : vector<512x64xf32>, vector<512x64xf32>, vector<512x64xf32> -> vector<512x192xf32>
    %22 = arith.mulf %21, %20 : vector<512x192xf32>
    %23 = arith.truncf %22 : vector<512x192xf32> to vector<512x192xbf16>
    %c0_14 = arith.constant 0 : index
    %c0_15 = arith.constant 0 : index
    %24 = vector.load %arg7[%c0_14, %c0_15] : memref<192x32xbf16, #tpu.memory_space<vmem>>, vector<192x32xbf16>
    %cst_16 = arith.constant dense<0.000000e+00> : vector<512x32xf32>
    %25 = tpu.matmul %23, %24, %cst_16 {dimension_numbers = #tpu.dot_dimension_numbers<[1], [0], [0], [1], [0, 0, 1, 1], [], []>} : vector<512x192xbf16>, vector<192x32xbf16>, vector<512x32xf32> -> vector<512x32xf32>
    %c0_17 = arith.constant 0 : index
    %c0_18 = arith.constant 0 : index
    %26 = vector.load %arg8[%c0_17, %c0_18] : memref<1x32xf32, #tpu.memory_space<vmem>>, vector<1x32xf32>
    %27 = vector.broadcast %26 : vector<1x32xf32> to vector<512x32xf32>
    %28 = arith.addf %25, %27 : vector<512x32xf32>
    %c0_19 = arith.constant 0 : index
    %c0_20 = arith.constant 0 : index
    %29 = vector.load %arg9[%c0_19, %c0_20] : memref<512x32xf32, #tpu.memory_space<vmem>>, vector<512x32xf32>
    tpu.vector_store %arg9[%c0_19, %c0_20], %28 {strides = array<i32>} : memref<512x32xf32, #tpu.memory_space<vmem>>, vector<512x32xf32>,
    return
  }
  func.func @transform_0(%arg0: i32) -> (i32, i32) {
    %c0_i32 = arith.constant 0 : i32
    %c0_i32_0 = arith.constant 0 : i32
    return %arg0, %c0_i32 : i32, i32
  }
  func.func @transform_1(%arg0: i32) -> (i32, i32) {
    %c0_i32 = arith.constant 0 : i32
    %c0_i32_0 = arith.constant 0 : i32
    return %arg0, %c0_i32 : i32, i32
  }
  func.func @transform_2(%arg0: i32) -> (i32, i32) {
    %c0_i32 = arith.constant 0 : i32
    %c0_i32_0 = arith.constant 0 : i32
    %c0_i32_1 = arith.constant 0 : i32
    return %c0_i32, %c0_i32_0 : i32, i32
  }
  func.func @transform_3(%arg0: i32) -> (i32, i32) {
    %c0_i32 = arith.constant 0 : i32
    %c0_i32_0 = arith.constant 0 : i32
    %c0_i32_1 = arith.constant 0 : i32
    return %c0_i32, %c0_i32_0 : i32, i32
  }
  func.func @transform_4(%arg0: i32) -> (i32, i32) {
    %c0_i32 = arith.constant 0 : i32
    %c0_i32_0 = arith.constant 0 : i32
    %c0_i32_1 = arith.constant 0 : i32
    return %c0_i32, %c0_i32_0 : i32, i32
  }
  func.func @transform_5(%arg0: i32) -> (i32, i32) {
    %c0_i32 = arith.constant 0 : i32
    %c0_i32_0 = arith.constant 0 : i32
    %c0_i32_1 = arith.constant 0 : i32
    return %c0_i32, %c0_i32_0 : i32, i32
  }
  func.func @transform_6(%arg0: i32) -> (i32, i32) {
    %c0_i32 = arith.constant 0 : i32
    %c0_i32_0 = arith.constant 0 : i32
    %c0_i32_1 = arith.constant 0 : i32
    return %c0_i32, %c0_i32_0 : i32, i32
  }
  func.func @transform_7(%arg0: i32) -> (i32, i32) {
    %c0_i32 = arith.constant 0 : i32
    %c0_i32_0 = arith.constant 0 : i32
    %c0_i32_1 = arith.constant 0 : i32
    return %c0_i32, %c0_i32_0 : i32, i32
  }
  func.func @transform_8(%arg0: i32) -> (i32, i32) {
    %c0_i32 = arith.constant 0 : i32
    %c0_i32_0 = arith.constant 0 : i32
    return %arg0, %c0_i32 : i32, i32
  }
}

</mosaic_0001>

<llo_original>
// kernel: tpu_custom_call.1
$region0: #{tpu_custom_call.1}
  #allocation0 [shape = 'u32[]', space=smem, size = 0x4, offset = 0x4, fixed_abs, tag = 'smem constant byte address 0x4 - core index']
  #allocation1 [shape = 'u32[144,128]{1,0:T(1,128)}', space=vmem, size = 0x12000, scoped, tag = 'internal scratch']
  %s0 = inlined_call_operand.vmem [shape: bf16[1024,24], index: 0, kind: input, shape index: {}]
  %s1 = inlined_call_operand.vmem [shape: bf16[1024,64], index: 1, kind: input, shape index: {}]
  %s2 = inlined_call_operand.vmem [shape: bf16[24,72], index: 2, kind: input, shape index: {}]
  %s3 = inlined_call_operand.vmem [shape: f32[1,72], index: 3, kind: input, shape index: {}]
  %s4 = inlined_call_operand.vmem [shape: bf16[72,192], index: 4, kind: input, shape index: {}]
  %s5 = inlined_call_operand.vmem [shape: f32[1,192], index: 5, kind: input, shape index: {}]
  %s6 = inlined_call_operand.vmem [shape: bf16[192,32], index: 6, kind: input, shape index: {}]
  %s7 = inlined_call_operand.vmem [shape: f32[1,32], index: 7, kind: input, shape index: {}]
  %s8 = inlined_call_operand.vmem [shape: f32[1024,32], index: 8, kind: output, shape index: {}]
  %s9 = sld [smem:[#allocation0]]
  $region65: #{tpu_custom_call.1} parent=0
    _
  %s11 = ssub.s32 1, %s9
  %s12 = scalar_select 0, %s11, %s9
  loop: start=0, step=1, limit=4
  $region2: #{tpu_custom_call.1} parent=0 // loop_pre_header
    _
  $region3: #{tpu_custom_call.1} parent=0 // loop_header
    %s14 = sphi 0, %s18
    %p15 = scmp.ge.s32.totalorder %s14, 4
    %s24 = sphi 0, %s26
    %s27 = sphi 0, %s24
    %s28 = sphi 0, %s27
    %s44 = sphi 0, %s28
    %s50 = sphi 0, %s52
    %s53 = sphi 0, %s50
    %s54 = sphi 0, %s53
    %s70 = sphi 0, %s54
    %s74 = sphi 0, %s74
    %s76 = sphi 0, %s74
    %s77 = sphi 0, %s76
    %s91 = sphi 0, %s77
    %s95 = sphi 0, %s95
    %s97 = sphi 0, %s95
    %s98 = sphi 0, %s97
    %s112 = sphi 0, %s98
    %s116 = sphi 0, %s116
    %s118 = sphi 0, %s116
    %s119 = sphi 0, %s118
    %s133 = sphi 0, %s119
    %s137 = sphi 0, %s137
    %s139 = sphi 0, %s137
    %s140 = sphi 0, %s139
    %s154 = sphi 0, %s140
    %s158 = sphi 0, %s158
    %s160 = sphi 0, %s158
    %s161 = sphi 0, %s160
    %s175 = sphi 0, %s161
    %s179 = sphi 0, %s179
    %s181 = sphi 0, %s179
    %s182 = sphi 0, %s181
    %s196 = sphi 0, %s182
    %s202 = sphi 0, %s204
    %s205 = sphi 0, %s202
    %s206 = sphi 0, %s205
    %s222 = sphi 0, %s206
  $region4: #{tpu_custom_call.1} parent=0 // loop_header_branch
    %17 = sbr.rel (%p15) target = $region8
  $region5: #{tpu_custom_call.1} parent=0 // loop_body
    %s19 = ssub.s32 %s14, 1
    %s20 = ssub.s32 %s14, 2
    %s21 = sadd.s32 %s14, 1
    %s22 = ssub.s32 %s14, %s21
    %p23 = scmp.eq.s32.totalorder %s22, 0
    %s25 = sadd.s32 %s24, 1
    %s26 = scalar_select %p23, %s24, %s25
    %p29 = pneg %p23
    %p30 = scmp.eq.s32.totalorder %s14, 1
    %p31 = por %p29, %p30
    %p32 = scmp.ne.s32.totalorder %s24, %s27
    %p33 = scmp.eq.s32.totalorder %s14, 0
    %p34 = por %p32, %p33
    %p35 = scmp.ne.s32.totalorder %s24, %s27
    %p36 = scmp.eq.s32.totalorder %s19, 1
    %p37 = por %p35, %p36
    %p38 = scmp.ne.s32.totalorder %s27, %s28
    %p39 = scmp.eq.s32.totalorder %s19, 0
    %p40 = por %p38, %p39
    %p41 = scmp.ne.s32.totalorder %s27, %s28
    %p42 = scmp.eq.s32.totalorder %s20, 1
    %p43 = por %p41, %p42
    %p45 = scmp.ne.s32.totalorder %s28, %s44
    %p46 = scmp.eq.s32.totalorder %s20, 0
    %p47 = por %p45, %p46
    %s48 = ssub.s32 %s14, %s21
    %p49 = scmp.eq.s32.totalorder %s48, 0
    %s51 = sadd.s32 %s50, 1
    %s52 = scalar_select %p49, %s50, %s51
    %p55 = pneg %p49
    %p56 = scmp.eq.s32.totalorder %s14, 1
    %p57 = por %p55, %p56
    %p58 = scmp.ne.s32.totalorder %s50, %s53
    %p59 = scmp.eq.s32.totalorder %s14, 0
    %p60 = por %p58, %p59
    %p61 = scmp.ne.s32.totalorder %s50, %s53
    %p62 = scmp.eq.s32.totalorder %s19, 1
    %p63 = por %p61, %p62
    %p64 = scmp.ne.s32.totalorder %s53, %s54
    %p65 = scmp.eq.s32.totalorder %s19, 0
    %p66 = por %p64, %p65
    %p67 = scmp.ne.s32.totalorder %s53, %s54
    %p68 = scmp.eq.s32.totalorder %s20, 1
    %p69 = por %p67, %p68
    %p71 = scmp.ne.s32.totalorder %s54, %s70
    %p72 = scmp.eq.s32.totalorder %s20, 0
    %p73 = por %p71, %p72
    %s75 = sadd.s32 %s74, 1
    %p78 = scmp.eq.s32.totalorder %s14, 1
    %p79 = scmp.ne.s32.totalorder %s74, %s76
    %p80 = scmp.eq.s32.totalorder %s14, 0
    %p81 = por %p79, %p80
    %p82 = scmp.ne.s32.totalorder %s74, %s76
    %p83 = scmp.eq.s32.totalorder %s19, 1
    %p84 = por %p82, %p83
    %p85 = scmp.ne.s32.totalorder %s76, %s77
    %p86 = scmp.eq.s32.totalorder %s19, 0
    %p87 = por %p85, %p86
    %p88 = scmp.ne.s32.totalorder %s76, %s77
    %p89 = scmp.eq.s32.totalorder %s20, 1
    %p90 = por %p88, %p89
    %p92 = scmp.ne.s32.totalorder %s77, %s91
    %p93 = scmp.eq.s32.totalorder %s20, 0
    %p94 = por %p92, %p93
    %s96 = sadd.s32 %s95, 1
    %p99 = scmp.eq.s32.totalorder %s14, 1
    %p100 = scmp.ne.s32.totalorder %s95, %s97
    %p101 = scmp.eq.s32.totalorder %s14, 0
    %p102 = por %p100, %p101
    %p103 = scmp.ne.s32.totalorder %s95, %s97
    %p104 = scmp.eq.s32.totalorder %s19, 1
    %p105 = por %p103, %p104
    %p106 = scmp.ne.s32.totalorder %s97, %s98
    %p107 = scmp.eq.s32.totalorder %s19, 0
    %p108 = por %p106, %p107
    %p109 = scmp.ne.s32.totalorder %s97, %s98
    %p110 = scmp.eq.s32.totalorder %s20, 1
    %p111 = por %p109, %p110
    %p113 = scmp.ne.s32.totalorder %s98, %s112
    %p114 = scmp.eq.s32.totalorder %s20, 0
    %p115 = por %p113, %p114
    %s117 = sadd.s32 %s116, 1
    %p120 = scmp.eq.s32.totalorder %s14, 1
    %p121 = scmp.ne.s32.totalorder %s116, %s118
    %p122 = scmp.eq.s32.totalorder %s14, 0
    %p123 = por %p121, %p122
    %p124 = scmp.ne.s32.totalorder %s116, %s118
    %p125 = scmp.eq.s32.totalorder %s19, 1
    %p126 = por %p124, %p125
    %p127 = scmp.ne.s32.totalorder %s118, %s119
    %p128 = scmp.eq.s32.totalorder %s19, 0
    %p129 = por %p127, %p128
    %p130 = scmp.ne.s32.totalorder %s118, %s119
    %p131 = scmp.eq.s32.totalorder %s20, 1
    %p132 = por %p130, %p131
    %p134 = scmp.ne.s32.totalorder %s119, %s133
    %p135 = scmp.eq.s32.totalorder %s20, 0
    %p136 = por %p134, %p135
    %s138 = sadd.s32 %s137, 1
    %p141 = scmp.eq.s32.totalorder %s14, 1
    %p142 = scmp.ne.s32.totalorder %s137, %s139
    %p143 = scmp.eq.s32.totalorder %s14, 0
    %p144 = por %p142, %p143
    %p145 = scmp.ne.s32.totalorder %s137, %s139
    %p146 = scmp.eq.s32.totalorder %s19, 1
    %p147 = por %p145, %p146
    %p148 = scmp.ne.s32.totalorder %s139, %s140
    %p149 = scmp.eq.s32.totalorder %s19, 0
    %p150 = por %p148, %p149
    %p151 = scmp.ne.s32.totalorder %s139, %s140
    %p152 = scmp.eq.s32.totalorder %s20, 1
    %p153 = por %p151, %p152
    %p155 = scmp.ne.s32.totalorder %s140, %s154
    %p156 = scmp.eq.s32.totalorder %s20, 0
    %p157 = por %p155, %p156
    %s159 = sadd.s32 %s158, 1
    %p162 = scmp.eq.s32.totalorder %s14, 1
    %p163 = scmp.ne.s32.totalorder %s158, %s160
    %p164 = scmp.eq.s32.totalorder %s14, 0
    %p165 = por %p163, %p164
    %p166 = scmp.ne.s32.totalorder %s158, %s160
    %p167 = scmp.eq.s32.totalorder %s19, 1
    %p168 = por %p166, %p167
    %p169 = scmp.ne.s32.totalorder %s160, %s161
    %p170 = scmp.eq.s32.totalorder %s19, 0
    %p171 = por %p169, %p170
    %p172 = scmp.ne.s32.totalorder %s160, %s161
    %p173 = scmp.eq.s32.totalorder %s20, 1
    %p174 = por %p172, %p173
    %p176 = scmp.ne.s32.totalorder %s161, %s175
    %p177 = scmp.eq.s32.totalorder %s20, 0
    %p178 = por %p176, %p177
    %s180 = sadd.s32 %s179, 1
    %p183 = scmp.eq.s32.totalorder %s14, 1
    %p184 = scmp.ne.s32.totalorder %s179, %s181
    %p185 = scmp.eq.s32.totalorder %s14, 0
    %p186 = por %p184, %p185
    %p187 = scmp.ne.s32.totalorder %s179, %s181
    %p188 = scmp.eq.s32.totalorder %s19, 1
    %p189 = por %p187, %p188
    %p190 = scmp.ne.s32.totalorder %s181, %s182
    %p191 = scmp.eq.s32.totalorder %s19, 0
    %p192 = por %p190, %p191
    %p193 = scmp.ne.s32.totalorder %s181, %s182
    %p194 = scmp.eq.s32.totalorder %s20, 1
    %p195 = por %p193, %p194
    %p197 = scmp.ne.s32.totalorder %s182, %s196
    %p198 = scmp.eq.s32.totalorder %s20, 0
    %p199 = por %p197, %p198
    %s200 = ssub.s32 %s14, %s21
    %p201 = scmp.eq.s32.totalorder %s200, 0
    %s203 = sadd.s32 %s202, 1
    %s204 = scalar_select %p201, %s202, %s203
    %p207 = pneg %p201
    %p208 = scmp.eq.s32.totalorder %s14, 1
    %p209 = por %p207, %p208
    %p210 = scmp.ne.s32.totalorder %s202, %s205
    %p211 = scmp.eq.s32.totalorder %s14, 0
    %p212 = por %p210, %p211
    %p213 = scmp.ne.s32.totalorder %s202, %s205
    %p214 = scmp.eq.s32.totalorder %s19, 1
    %p215 = por %p213, %p214
    %p216 = scmp.ne.s32.totalorder %s205, %s206
    %p217 = scmp.eq.s32.totalorder %s19, 0
    %p218 = por %p216, %p217
    %p219 = scmp.ne.s32.totalorder %s205, %s206
    %p220 = scmp.eq.s32.totalorder %s20, 1
    %p221 = por %p219, %p220
    %p223 = scmp.ne.s32.totalorder %s206, %s222
    %p224 = scmp.eq.s32.totalorder %s20, 0
    %p225 = por %p223, %p224
    %p226 = scmp.le.s32.totalorder 1, %s14
    %p227 = scmp.lt.s32.totalorder %s14, 3
    %p228 = pnand %p226, %p227
    %p229 = pneg %p228
    // Predicated region
    $region9: #{tpu_custom_call.1} parent=5 // pred_check
      _
    $region10: #{tpu_custom_call.1} parent=5 // pred_check_branch
      %231 = sbr.rel (%p228) target = $region12
    $region11: #{tpu_custom_call.1} parent=5 // pred_region
      %s232 = ssub.s32 %s14, 1
      // Predicated region
      $region13: #{tpu_custom_call.1} parent=11 // pred_check
        %p233 = pneg %p87
      $region14: #{tpu_custom_call.1} parent=11 // pred_check_branch
        %235 = sbr.rel (%p233) target = $region16
      $region15: #{tpu_custom_call.1} parent=11 // pred_region
        _
      $region16: #{tpu_custom_call.1} parent=11 // pred_fallthru
        _
      // Predicated region
      $region17: #{tpu_custom_call.1} parent=11 // pred_check
        %p236 = pneg %p108
      $region18: #{tpu_custom_call.1} parent=11 // pred_check_branch
        %238 = sbr.rel (%p236) target = $region20
      $region19: #{tpu_custom_call.1} parent=11 // pred_region
        _
      $region20: #{tpu_custom_call.1} parent=11 // pred_fallthru
        _
      // Predicated region
      $region21: #{tpu_custom_call.1} parent=11 // pred_check
        %p239 = pneg %p129
      $region22: #{tpu_custom_call.1} parent=11 // pred_check_branch
        %241 = sbr.rel (%p239) target = $region24
      $region23: #{tpu_custom_call.1} parent=11 // pred_region
        _
      $region24: #{tpu_custom_call.1} parent=11 // pred_fallthru
        _
      // Predicated region
      $region25: #{tpu_custom_call.1} parent=11 // pred_check
        %p242 = pneg %p150
      $region26: #{tpu_custom_call.1} parent=11 // pred_check_branch
        %244 = sbr.rel (%p242) target = $region28
      $region27: #{tpu_custom_call.1} parent=11 // pred_region
        _
      $region28: #{tpu_custom_call.1} parent=11 // pred_fallthru
        _
      // Predicated region
      $region29: #{tpu_custom_call.1} parent=11 // pred_check
        %p245 = pneg %p171
      $region30: #{tpu_custom_call.1} parent=11 // pred_check_branch
        %247 = sbr.rel (%p245) target = $region32
      $region31: #{tpu_custom_call.1} parent=11 // pred_region
        _
      $region32: #{tpu_custom_call.1} parent=11 // pred_fallthru
        _
      // Predicated region
      $region33: #{tpu_custom_call.1} parent=11 // pred_check
        %p248 = pneg %p192
      $region34: #{tpu_custom_call.1} parent=11 // pred_check_branch
        %250 = sbr.rel (%p248) target = $region36
      $region35: #{tpu_custom_call.1} parent=11 // pred_region
        _
      $region36: #{tpu_custom_call.1} parent=11 // pred_fallthru
        _
    $region12: #{tpu_custom_call.1} parent=5 // pred_fallthru
      _
    %p251 = scmp.lt.s32.totalorder %s14, 2
    // Predicated region
    $region37: #{tpu_custom_call.1} parent=5 // pred_check
      %p252 = pneg %p251
    $region38: #{tpu_custom_call.1} parent=5 // pred_check_branch
      %254 = sbr.rel (%p252) target = $region40
    $region39: #{tpu_custom_call.1} parent=5 // pred_region
      // Predicated region
      $region41: #{tpu_custom_call.1} parent=39 // pred_check
        %p255 = pneg %p34
      $region42: #{tpu_custom_call.1} parent=39 // pred_check_branch
        %257 = sbr.rel (%p255) target = $region44
      $region43: #{tpu_custom_call.1} parent=39 // pred_region
        %s258 = smul.u32 64, %s14
        %p259 = scmp.lt.s32.totalorder %s258, 127
        %s260 = scalar_select %p259, %s258, 127
        %s261 = smul.addr %s260, 4
        %s262 = scalar_lea.vmem %s0, %s261
        %s263 = smul.u32 64, %s14
      $region44: #{tpu_custom_call.1} parent=39 // pred_fallthru
        _
      // Predicated region
      $region45: #{tpu_custom_call.1} parent=39 // pred_check
        %p264 = pneg %p60
      $region46: #{tpu_custom_call.1} parent=39 // pred_check_branch
        %266 = sbr.rel (%p264) target = $region48
      $region47: #{tpu_custom_call.1} parent=39 // pred_region
        %s267 = smul.u32 64, %s14
        %p268 = scmp.lt.s32.totalorder %s267, 127
        %s269 = scalar_select %p268, %s267, 127
        %s270 = smul.addr %s269, 4
        %s271 = scalar_lea.vmem %s1, %s270
        %s272 = smul.u32 64, %s14
      $region48: #{tpu_custom_call.1} parent=39 // pred_fallthru
        _
    $region40: #{tpu_custom_call.1} parent=5 // pred_fallthru
      _
    %p273 = scmp.le.s32.totalorder 1, %s14
    %p274 = scmp.lt.s32.totalorder %s14, 3
    %p275 = pnand %p273, %p274
    %p276 = pneg %p275
    // Predicated region
    $region49: #{tpu_custom_call.1} parent=5 // pred_check
      _
    $region50: #{tpu_custom_call.1} parent=5 // pred_check_branch
      %278 = sbr.rel (%p275) target = $region52
    $region51: #{tpu_custom_call.1} parent=5 // pred_region
      %s279 = ssub.s32 %s14, 1
      %s280 = smul.u32 64, %s19
      %p281 = scmp.lt.s32.totalorder %s280, 127
      %s282 = scalar_select %p281, %s280, 127
      %s283 = smul.addr %s282, 4
      %s284 = scalar_lea.vmem %s0, %s283
      %p285 = pneg %p40
      %p286 = pneg %p37
      %s287 = smul.u32 64, %s19
      %p288 = scmp.lt.s32.totalorder %s287, 127
      %s289 = scalar_select %p288, %s287, 127
      %s290 = smul.addr %s289, 4
      %s291 = scalar_lea.vmem %s1, %s290
      %p292 = pneg %p66
      %p293 = pneg %p63
      %p294 = pneg %p87
      %p295 = pneg %p84
      %p296 = pneg %p108
      %p297 = pneg %p105
      %p298 = pneg %p129
      %p299 = pneg %p126
      %p300 = pneg %p150
      %p301 = pneg %p147
      %p302 = pneg %p171
      %p303 = pneg %p168
      %p304 = pneg %p192
      %p305 = pneg %p189
      %p306 = pneg %p218
      %p307 = pneg %p215
      %s308 = smul.u32 64, %s19
      %p309 = scmp.lt.s32.totalorder %s308, 127
      %s310 = scalar_select %p309, %s308, 127
      %s311 = smul.addr %s310, 8
      %s312 = scalar_lea.vmem %s8, %s311
      %s313 = smul.u32 64, %s19
      %p314 = scmp.lt.s32.totalorder %s313, 127
      %s315 = scalar_select %p314, %s313, 127
      %s316 = smul.addr %s315, 4
      %s317 = scalar_lea.vmem %s0, %s316
      %s318 = smul.u32 64, %s19
      %s319 = smul.u32 64, %s19
      %p320 = scmp.lt.s32.totalorder %s319, 127
      %s321 = scalar_select %p320, %s319, 127
      %s322 = smul.addr %s321, 4
      %s323 = scalar_lea.vmem %s1, %s322
      %s324 = smul.u32 64, %s19
      %s325 = smul.u32 64, %s19
      %p326 = scmp.lt.s32.totalorder %s325, 127
      %s327 = scalar_select %p326, %s325, 127
      %s328 = smul.addr %s327, 8
      %s329 = scalar_lea.vmem %s8, %s328
      %s330 = smul.u32 64, %s19
      %v332 = vld [vmem:[%s317] sm:$0xf]
      %v333 = vld [vmem:[%s317 + $0x4] sm:$0xf]
      %v334 = vld [vmem:[%s317 + $0x8] sm:$0xf]
      %v335 = vld [vmem:[%s317 + $0xc] sm:$0xf]
      %v336 = vld [vmem:[%s317 + $0x10] sm:$0xf]
      %v337 = vld [vmem:[%s317 + $0x14] sm:$0xf]
      %v338 = vld [vmem:[%s317 + $0x18] sm:$0xf]
      %v339 = vld [vmem:[%s317 + $0x1c] sm:$0xf]
      %v340 = vld [vmem:[%s317 + $0x20] sm:$0xf]
      %v341 = vld [vmem:[%s317 + $0x24] sm:$0xf]
      %v342 = vld [vmem:[%s317 + $0x28] sm:$0xf]
      %v343 = vld [vmem:[%s317 + $0x2c] sm:$0xf]
      %v344 = vld [vmem:[%s317 + $0x30] sm:$0xf]
      %v345 = vld [vmem:[%s317 + $0x34] sm:$0xf]
      %v346 = vld [vmem:[%s317 + $0x38] sm:$0xf]
      %v347 = vld [vmem:[%s317 + $0x3c] sm:$0xf]
      %v348 = vld [vmem:[%s317 + $0x40] sm:$0xf]
      %v349 = vld [vmem:[%s317 + $0x44] sm:$0xf]
      %v350 = vld [vmem:[%s317 + $0x48] sm:$0xf]
      %v351 = vld [vmem:[%s317 + $0x4c] sm:$0xf]
      %v352 = vld [vmem:[%s317 + $0x50] sm:$0xf]
      %v353 = vld [vmem:[%s317 + $0x54] sm:$0xf]
      %v354 = vld [vmem:[%s317 + $0x58] sm:$0xf]
      %v355 = vld [vmem:[%s317 + $0x5c] sm:$0xf]
      %v356 = vld [vmem:[%s317 + $0x60] sm:$0xf]
      %v357 = vld [vmem:[%s317 + $0x64] sm:$0xf]
      %v358 = vld [vmem:[%s317 + $0x68] sm:$0xf]
      %v359 = vld [vmem:[%s317 + $0x6c] sm:$0xf]
      %v360 = vld [vmem:[%s317 + $0x70] sm:$0xf]
      %v361 = vld [vmem:[%s317 + $0x74] sm:$0xf]
      %v362 = vld [vmem:[%s317 + $0x78] sm:$0xf]
      %v363 = vld [vmem:[%s317 + $0x7c] sm:$0xf]
      %v364 = vld [vmem:[%s317 + $0x80] sm:$0xf]
      %v365 = vld [vmem:[%s317 + $0x84] sm:$0xf]
      %v366 = vld [vmem:[%s317 + $0x88] sm:$0xf]
      %v367 = vld [vmem:[%s317 + $0x8c] sm:$0xf]
      %v368 = vld [vmem:[%s317 + $0x90] sm:$0xf]
      %v369 = vld [vmem:[%s317 + $0x94] sm:$0xf]
      %v370 = vld [vmem:[%s317 + $0x98] sm:$0xf]
      %v371 = vld [vmem:[%s317 + $0x9c] sm:$0xf]
      %v372 = vld [vmem:[%s317 + $0xa0] sm:$0xf]
      %v373 = vld [vmem:[%s317 + $0xa4] sm:$0xf]
      %v374 = vld [vmem:[%s317 + $0xa8] sm:$0xf]
      %v375 = vld [vmem:[%s317 + $0xac] sm:$0xf]
      %v376 = vld [vmem:[%s317 + $0xb0] sm:$0xf]
      %v377 = vld [vmem:[%s317 + $0xb4] sm:$0xf]
      %v378 = vld [vmem:[%s317 + $0xb8] sm:$0xf]
      %v379 = vld [vmem:[%s317 + $0xbc] sm:$0xf]
      %v380 = vld [vmem:[%s317 + $0xc0] sm:$0xf]
      %v381 = vld [vmem:[%s317 + $0xc4] sm:$0xf]
      %v382 = vld [vmem:[%s317 + $0xc8] sm:$0xf]
      %v383 = vld [vmem:[%s317 + $0xcc] sm:$0xf]
      %v384 = vld [vmem:[%s317 + $0xd0] sm:$0xf]
      %v385 = vld [vmem:[%s317 + $0xd4] sm:$0xf]
      %v386 = vld [vmem:[%s317 + $0xd8] sm:$0xf]
      %v387 = vld [vmem:[%s317 + $0xdc] sm:$0xf]
      %v388 = vld [vmem:[%s317 + $0xe0] sm:$0xf]
      %v389 = vld [vmem:[%s317 + $0xe4] sm:$0xf]
      %v390 = vld [vmem:[%s317 + $0xe8] sm:$0xf]
      %v391 = vld [vmem:[%s317 + $0xec] sm:$0xf]
      %v392 = vld [vmem:[%s317 + $0xf0] sm:$0xf]
      %v393 = vld [vmem:[%s317 + $0xf4] sm:$0xf]
      %v394 = vld [vmem:[%s317 + $0xf8] sm:$0xf]
      %v395 = vld [vmem:[%s317 + $0xfc] sm:$0xf]
      %v396 = vld [vmem:[%s323] sm:$0xf]
      %v397 = vld [vmem:[%s323 + $0x4] sm:$0xf]
      %v398 = vld [vmem:[%s323 + $0x8] sm:$0xf]
      %v399 = vld [vmem:[%s323 + $0xc] sm:$0xf]
      %v400 = vld [vmem:[%s323 + $0x10] sm:$0xf]
      %v401 = vld [vmem:[%s323 + $0x14] sm:$0xf]
      %v402 = vld [vmem:[%s323 + $0x18] sm:$0xf]
      %v403 = vld [vmem:[%s323 + $0x1c] sm:$0xf]
      %v404 = vld [vmem:[%s323 + $0x20] sm:$0xf]
      %v405 = vld [vmem:[%s323 + $0x24] sm:$0xf]
      %v406 = vld [vmem:[%s323 + $0x28] sm:$0xf]
      %v407 = vld [vmem:[%s323 + $0x2c] sm:$0xf]
      %v408 = vld [vmem:[%s323 + $0x30] sm:$0xf]
      %v409 = vld [vmem:[%s323 + $0x34] sm:$0xf]
      %v410 = vld [vmem:[%s323 + $0x38] sm:$0xf]
      %v411 = vld [vmem:[%s323 + $0x3c] sm:$0xf]
      %v412 = vld [vmem:[%s323 + $0x40] sm:$0xf]
      %v413 = vld [vmem:[%s323 + $0x44] sm:$0xf]
      %v414 = vld [vmem:[%s323 + $0x48] sm:$0xf]
      %v415 = vld [vmem:[%s323 + $0x4c] sm:$0xf]
      %v416 = vld [vmem:[%s323 + $0x50] sm:$0xf]
      %v417 = vld [vmem:[%s323 + $0x54] sm:$0xf]
      %v418 = vld [vmem:[%s323 + $0x58] sm:$0xf]
      %v419 = vld [vmem:[%s323 + $0x5c] sm:$0xf]
      %v420 = vld [vmem:[%s323 + $0x60] sm:$0xf]
      %v421 = vld [vmem:[%s323 + $0x64] sm:$0xf]
      %v422 = vld [vmem:[%s323 + $0x68] sm:$0xf]
      %v423 = vld [vmem:[%s323 + $0x6c] sm:$0xf]
      %v424 = vld [vmem:[%s323 + $0x70] sm:$0xf]
      %v425 = vld [vmem:[%s323 + $0x74] sm:$0xf]
      %v426 = vld [vmem:[%s323 + $0x78] sm:$0xf]
      %v427 = vld [vmem:[%s323 + $0x7c] sm:$0xf]
      %v428 = vld [vmem:[%s323 + $0x80] sm:$0xf]
      %v429 = vld [vmem:[%s323 + $0x84] sm:$0xf]
      %v430 = vld [vmem:[%s323 + $0x88] sm:$0xf]
      %v431 = vld [vmem:[%s323 + $0x8c] sm:$0xf]
      %v432 = vld [vmem:[%s323 + $0x90] sm:$0xf]
      %v433 = vld [vmem:[%s323 + $0x94] sm:$0xf]
      %v434 = vld [vmem:[%s323 + $0x98] sm:$0xf]
      %v435 = vld [vmem:[%s323 + $0x9c] sm:$0xf]
      %v436 = vld [vmem:[%s323 + $0xa0] sm:$0xf]
      %v437 = vld [vmem:[%s323 + $0xa4] sm:$0xf]
      %v438 = vld [vmem:[%s323 + $0xa8] sm:$0xf]
      %v439 = vld [vmem:[%s323 + $0xac] sm:$0xf]
      %v440 = vld [vmem:[%s323 + $0xb0] sm:$0xf]
      %v441 = vld [vmem:[%s323 + $0xb4] sm:$0xf]
      %v442 = vld [vmem:[%s323 + $0xb8] sm:$0xf]
      %v443 = vld [vmem:[%s323 + $0xbc] sm:$0xf]
      %v444 = vld [vmem:[%s323 + $0xc0] sm:$0xf]
      %v445 = vld [vmem:[%s323 + $0xc4] sm:$0xf]
      %v446 = vld [vmem:[%s323 + $0xc8] sm:$0xf]
      %v447 = vld [vmem:[%s323 + $0xcc] sm:$0xf]
      %v448 = vld [vmem:[%s323 + $0xd0] sm:$0xf]
      %v449 = vld [vmem:[%s323 + $0xd4] sm:$0xf]
      %v450 = vld [vmem:[%s323 + $0xd8] sm:$0xf]
      %v451 = vld [vmem:[%s323 + $0xdc] sm:$0xf]
      %v452 = vld [vmem:[%s323 + $0xe0] sm:$0xf]
      %v453 = vld [vmem:[%s323 + $0xe4] sm:$0xf]
      %v454 = vld [vmem:[%s323 + $0xe8] sm:$0xf]
      %v455 = vld [vmem:[%s323 + $0xec] sm:$0xf]
      %v456 = vld [vmem:[%s323 + $0xf0] sm:$0xf]
      %v457 = vld [vmem:[%s323 + $0xf4] sm:$0xf]
      %v458 = vld [vmem:[%s323 + $0xf8] sm:$0xf]
      %v459 = vld [vmem:[%s323 + $0xfc] sm:$0xf]
      %v460 = vunpack.c.l.bf16 %v396
      %v461 = vunpack.c.l.bf16 %v397
      %v462 = vunpack.c.l.bf16 %v398
      %v463 = vunpack.c.l.bf16 %v399
      %v464 = vunpack.c.l.bf16 %v400
      %v465 = vunpack.c.l.bf16 %v401
      %v466 = vunpack.c.l.bf16 %v402
      %v467 = vunpack.c.l.bf16 %v403
      %v468 = vunpack.c.l.bf16 %v404
      %v469 = vunpack.c.l.bf16 %v405
      %v470 = vunpack.c.l.bf16 %v406
      %v471 = vunpack.c.l.bf16 %v407
      %v472 = vunpack.c.l.bf16 %v408
      %v473 = vunpack.c.l.bf16 %v409
      %v474 = vunpack.c.l.bf16 %v410
      %v475 = vunpack.c.l.bf16 %v411
      %v476 = vunpack.c.l.bf16 %v412
      %v477 = vunpack.c.l.bf16 %v413
      %v478 = vunpack.c.l.bf16 %v414
      %v479 = vunpack.c.l.bf16 %v415
      %v480 = vunpack.c.l.bf16 %v416
      %v481 = vunpack.c.l.bf16 %v417
      %v482 = vunpack.c.l.bf16 %v418
      %v483 = vunpack.c.l.bf16 %v419
      %v484 = vunpack.c.l.bf16 %v420
      %v485 = vunpack.c.l.bf16 %v421
      %v486 = vunpack.c.l.bf16 %v422
      %v487 = vunpack.c.l.bf16 %v423
      %v488 = vunpack.c.l.bf16 %v424
      %v489 = vunpack.c.l.bf16 %v425
      %v490 = vunpack.c.l.bf16 %v426
      %v491 = vunpack.c.l.bf16 %v427
      %v492 = vunpack.c.l.bf16 %v428
      %v493 = vunpack.c.l.bf16 %v429
      %v494 = vunpack.c.l.bf16 %v430
      %v495 = vunpack.c.l.bf16 %v431
      %v496 = vunpack.c.l.bf16 %v432
      %v497 = vunpack.c.l.bf16 %v433
      %v498 = vunpack.c.l.bf16 %v434
      %v499 = vunpack.c.l.bf16 %v435
      %v500 = vunpack.c.l.bf16 %v436
      %v501 = vunpack.c.l.bf16 %v437
      %v502 = vunpack.c.l.bf16 %v438
      %v503 = vunpack.c.l.bf16 %v439
      %v504 = vunpack.c.l.bf16 %v440
      %v505 = vunpack.c.l.bf16 %v441
      %v506 = vunpack.c.l.bf16 %v442
      %v507 = vunpack.c.l.bf16 %v443
      %v508 = vunpack.c.l.bf16 %v444
      %v509 = vunpack.c.l.bf16 %v445
      %v510 = vunpack.c.l.bf16 %v446
      %v511 = vunpack.c.l.bf16 %v447
      %v512 = vunpack.c.l.bf16 %v448
      %v513 = vunpack.c.l.bf16 %v449
      %v514 = vunpack.c.l.bf16 %v450
      %v515 = vunpack.c.l.bf16 %v451
      %v516 = vunpack.c.l.bf16 %v452
      %v517 = vunpack.c.l.bf16 %v453
      %v518 = vunpack.c.l.bf16 %v454
      %v519 = vunpack.c.l.bf16 %v455
      %v520 = vunpack.c.l.bf16 %v456
      %v521 = vunpack.c.l.bf16 %v457
      %v522 = vunpack.c.l.bf16 %v458
      %v523 = vunpack.c.l.bf16 %v459
      %v524 = vld [vmem:[%s2] sm:$0xf]
      %v525 = vld [vmem:[%s2 + $0x4] sm:$0xf]
      %v526 = vld [vmem:[%s2 + $0x8] sm:$0xf]
      %v527 = vld [vmem:[%s3] sm:$0x1]
      %v529 = vlaneseq
      %v530 = vshrl.u32 %v529, 7
      %v531 = vsub.s32 0, %v530
      %v532 = vrot.slane %v527, %v531
      %v598 = vunpack.c.l.b16 %v332
      %v599 = vunpack.c.l.b16 %v333
      %v600 = vunpack.c.l.b16 %v334
      %v601 = vunpack.c.l.b16 %v335
      %v602 = vunpack.c.l.b16 %v336
      %v603 = vunpack.c.l.b16 %v337
      %v604 = vunpack.c.l.b16 %v338
      %v605 = vunpack.c.l.b16 %v339
      %v606 = vunpack.c.l.b16 %v340
      %v607 = vunpack.c.l.b16 %v341
      %v608 = vunpack.c.l.b16 %v342
      %v609 = vunpack.c.l.b16 %v343
      %v610 = vunpack.c.l.b16 %v344
      %v611 = vunpack.c.l.b16 %v345
      %v612 = vunpack.c.l.b16 %v346
      %v613 = vunpack.c.l.b16 %v347
      %v614 = vunpack.c.l.b16 %v348
      %v615 = vunpack.c.l.b16 %v349
      %v616 = vunpack.c.l.b16 %v350
      %v617 = vunpack.c.l.b16 %v351
      %v618 = vunpack.c.l.b16 %v352
      %v619 = vunpack.c.l.b16 %v353
      %v620 = vunpack.c.l.b16 %v354
      %v621 = vunpack.c.l.b16 %v355
      %v622 = vunpack.c.l.b16 %v356
      %v623 = vunpack.c.l.b16 %v357
      %v624 = vunpack.c.l.b16 %v358
      %v625 = vunpack.c.l.b16 %v359
      %v626 = vunpack.c.l.b16 %v360
      %v627 = vunpack.c.l.b16 %v361
      %v628 = vunpack.c.l.b16 %v362
      %v629 = vunpack.c.l.b16 %v363
      %v630 = vunpack.c.l.b16 %v364
      %v631 = vunpack.c.l.b16 %v365
      %v632 = vunpack.c.l.b16 %v366
      %v633 = vunpack.c.l.b16 %v367
      %v634 = vunpack.c.l.b16 %v368
      %v635 = vunpack.c.l.b16 %v369
      %v636 = vunpack.c.l.b16 %v370
      %v637 = vunpack.c.l.b16 %v371
      %v638 = vunpack.c.l.b16 %v372
      %v639 = vunpack.c.l.b16 %v373
      %v640 = vunpack.c.l.b16 %v374
      %v641 = vunpack.c.l.b16 %v375
      %v642 = vunpack.c.l.b16 %v376
      %v643 = vunpack.c.l.b16 %v377
      %v644 = vunpack.c.l.b16 %v378
      %v645 = vunpack.c.l.b16 %v379
      %v646 = vunpack.c.l.b16 %v380
      %v647 = vunpack.c.l.b16 %v381
      %v648 = vunpack.c.l.b16 %v382
      %v649 = vunpack.c.l.b16 %v383
      %v650 = vunpack.c.l.b16 %v384
      %v651 = vunpack.c.l.b16 %v385
      %v652 = vunpack.c.l.b16 %v386
      %v653 = vunpack.c.l.b16 %v387
      %v654 = vunpack.c.l.b16 %v388
      %v655 = vunpack.c.l.b16 %v389
      %v656 = vunpack.c.l.b16 %v390
      %v657 = vunpack.c.l.b16 %v391
      %v658 = vunpack.c.l.b16 %v392
      %v659 = vunpack.c.l.b16 %v393
      %v660 = vunpack.c.l.b16 %v394
      %v661 = vunpack.c.l.b16 %v395
      %v662 = vpack.c.b16 %v599, %v598
      %v663 = vpack.c.b16 %v601, %v600
      %v664 = vpack.c.b16 %v603, %v602
      %v665 = vpack.c.b16 %v605, %v604
      %v666 = vpack.c.b16 %v607, %v606
      %v667 = vpack.c.b16 %v609, %v608
      %v668 = vpack.c.b16 %v611, %v610
      %v669 = vpack.c.b16 %v613, %v612
      %v670 = vpack.c.b16 %v615, %v614
      %v671 = vpack.c.b16 %v617, %v616
      %v672 = vpack.c.b16 %v619, %v618
      %v673 = vpack.c.b16 %v621, %v620
      %v674 = vpack.c.b16 %v623, %v622
      %v675 = vpack.c.b16 %v625, %v624
      %v676 = vpack.c.b16 %v627, %v626
      %v677 = vpack.c.b16 %v629, %v628
      %v678 = vpack.c.b16 %v631, %v630
      %v679 = vpack.c.b16 %v633, %v632
      %v680 = vpack.c.b16 %v635, %v634
      %v681 = vpack.c.b16 %v637, %v636
      %v682 = vpack.c.b16 %v639, %v638
      %v683 = vpack.c.b16 %v641, %v640
      %v684 = vpack.c.b16 %v643, %v642
      %v685 = vpack.c.b16 %v645, %v644
      %v686 = vpack.c.b16 %v647, %v646
      %v687 = vpack.c.b16 %v649, %v648
      %v688 = vpack.c.b16 %v651, %v650
      %v689 = vpack.c.b16 %v653, %v652
      %v690 = vpack.c.b16 %v655, %v654
      %v691 = vpack.c.b16 %v657, %v656
      %v692 = vpack.c.b16 %v659, %v658
      %v693 = vpack.c.b16 %v661, %v660
      %v697 = vunpack.c.l.b16 %v524
      %v698 = vunpack.c.l.b16 %v525
      %v699 = vunpack.c.l.b16 %v526
      %v700 = vpack.c.b16 %v698, %v697
      %v701 = vpack.c.b16 %v699, %v699
      %vm703 = vcmask 195584
      %v705 = vsel %vm703, %v662, 0
      %v708 = vsel %vm703, %v663, 0
      %v711 = vsel %vm703, %v664, 0
      %v714 = vsel %vm703, %v665, 0
      %v717 = vsel %vm703, %v666, 0
      %v720 = vsel %vm703, %v667, 0
      %v723 = vsel %vm703, %v668, 0
      %v726 = vsel %vm703, %v669, 0
      %v729 = vsel %vm703, %v670, 0
      %v732 = vsel %vm703, %v671, 0
      %v735 = vsel %vm703, %v672, 0
      %v738 = vsel %vm703, %v673, 0
      %v741 = vsel %vm703, %v674, 0
      %v744 = vsel %vm703, %v675, 0
      %v747 = vsel %vm703, %v676, 0
      %v750 = vsel %vm703, %v677, 0
      %v753 = vsel %vm703, %v678, 0
      %v756 = vsel %vm703, %v679, 0
      %v759 = vsel %vm703, %v680, 0
      %v762 = vsel %vm703, %v681, 0
      %v765 = vsel %vm703, %v682, 0
      %v768 = vsel %vm703, %v683, 0
      %v771 = vsel %vm703, %v684, 0
      %v774 = vsel %vm703, %v685, 0
      %v777 = vsel %vm703, %v686, 0
      %v780 = vsel %vm703, %v687, 0
      %v783 = vsel %vm703, %v688, 0
      %v786 = vsel %vm703, %v689, 0
      %v789 = vsel %vm703, %v690, 0
      %v792 = vsel %vm703, %v691, 0
      %v795 = vsel %vm703, %v692, 0
      %v798 = vsel %vm703, %v693, 0
      %vm800 = vcmask 1043456
      %v802 = vsel %vm800, %v701, 0
      %804 = vmatprep.subr.bf16.mxu0 0
      %805 = vmatpush1.bf16.msra.mxu0 %v700
      %806 = vmatprep.subr.bf16.mxu0 0
      %807 = vmatpush1.bf16.msra.mxu0 %v802
      %808 = vmatprep.subr.bf16.mxu0 0
      %809 = vmatpush1.bf16.msra.mxu0 0
      %810 = vmatprep.subr.bf16.mxu0 0
      %811 = vmatpush1.bf16.msra.mxu0 0
      %812 = vmatprep.subr.bf16.mxu0 0
      %813 = vmatpush1.bf16.msra.mxu0 0
      %814 = vmatprep.subr.bf16.mxu0 0
      %815 = vmatpush1.bf16.msra.mxu0 0
      %816 = vmatprep.subr.bf16.mxu0 0
      %817 = vmatpush1.bf16.msra.mxu0 0
      %818 = vmatprep.subr.bf16.mxu0 0
      %819 = vmatpush1.bf16.msra.mxu0 0
      %820 = vmatprep.subr.bf16.mxu0 0
      %821 = vmatpush1.bf16.msra.mxu0 0
      %822 = vmatprep.subr.bf16.mxu0 0
      %823 = vmatpush1.bf16.msra.mxu0 0
      %824 = vmatprep.subr.bf16.mxu0 0
      %825 = vmatpush1.bf16.msra.mxu0 0
      %826 = vmatprep.subr.bf16.mxu0 0
      %827 = vmatpush1.bf16.msra.mxu0 0
      %828 = vmatprep.subr.bf16.mxu0 0
      %829 = vmatpush1.bf16.msra.mxu0 0
      %830 = vmatprep.subr.bf16.mxu0 0
      %831 = vmatpush1.bf16.msra.mxu0 0
      %832 = vmatprep.subr.bf16.mxu0 0
      %833 = vmatpush1.bf16.msra.mxu0 0
      %834 = vmatprep.subr.bf16.mxu0 0
      %835 = vmatpush1.bf16.msra.mxu0 0
      %836 = vmatprep.mubr.bf16.mxu0 0
      %837 = vmatmul.mubr.bf16.gmra.mrb[0].mxu0 %v705
      %v838 = vpop.f32.mrb[0].mxu0
      %v839 = vadd.f32 %v532, %v838
      %v840 = vpop.f32.mrb[0].mxu0
      %v841 = vpop.f32.mrb[0].mxu0
      %v842 = vadd.f32 %v532, %v841
      %v843 = vpop.f32.mrb[0].mxu0
      %844 = vmatprep.mubr.bf16.mxu0 0
      %845 = vmatmul.mubr.bf16.gmra.mrb[0].mxu0 %v708
      %v846 = vpop.f32.mrb[0].mxu0
      %v847 = vadd.f32 %v532, %v846
      %v848 = vpop.f32.mrb[0].mxu0
      %v849 = vpop.f32.mrb[0].mxu0
      %v850 = vadd.f32 %v532, %v849
      %v851 = vpop.f32.mrb[0].mxu0
      %852 = vmatprep.mubr.bf16.mxu0 0
      %853 = vmatmul.mubr.bf16.gmra.mrb[0].mxu0 %v711
      %v854 = vpop.f32.mrb[0].mxu0
      %v855 = vadd.f32 %v532, %v854
      %v856 = vpop.f32.mrb[0].mxu0
      %v857 = vpop.f32.mrb[0].mxu0
      %v858 = vadd.f32 %v532, %v857
      %v859 = vpop.f32.mrb[0].mxu0
      %860 = vmatprep.mubr.bf16.mxu0 0
      %861 = vmatmul.mubr.bf16.gmra.mrb[0].mxu0 %v714
      %v862 = vpop.f32.mrb[0].mxu0
      %v863 = vadd.f32 %v532, %v862
      %v864 = vpop.f32.mrb[0].mxu0
      %v865 = vpop.f32.mrb[0].mxu0
      %v866 = vadd.f32 %v532, %v865
      %v867 = vpop.f32.mrb[0].mxu0
      %868 = vmatprep.mubr.bf16.mxu0 0
      %869 = vmatmul.mubr.bf16.gmra.mrb[0].mxu0 %v717
      %v870 = vpop.f32.mrb[0].mxu0
      %v871 = vadd.f32 %v532, %v870
      %v872 = vpop.f32.mrb[0].mxu0
      %v873 = vpop.f32.mrb[0].mxu0
      %v874 = vadd.f32 %v532, %v873
      %v875 = vpop.f32.mrb[0].mxu0
      %876 = vmatprep.mubr.bf16.mxu0 0
      %877 = vmatmul.mubr.bf16.gmra.mrb[0].mxu0 %v720
      %v878 = vpop.f32.mrb[0].mxu0
      %v879 = vadd.f32 %v532, %v878
      %v880 = vpop.f32.mrb[0].mxu0
      %v881 = vpop.f32.mrb[0].mxu0
      %v882 = vadd.f32 %v532, %v881
      %v883 = vpop.f32.mrb[0].mxu0
      %884 = vmatprep.mubr.bf16.mxu0 0
      %885 = vmatmul.mubr.bf16.gmra.mrb[0].mxu0 %v723
      %v886 = vpop.f32.mrb[0].mxu0
      %v887 = vadd.f32 %v532, %v886
      %v888 = vpop.f32.mrb[0].mxu0
      %v889 = vpop.f32.mrb[0].mxu0
      %v890 = vadd.f32 %v532, %v889
      %v891 = vpop.f32.mrb[0].mxu0
      %892 = vmatprep.mubr.bf16.mxu0 0
      %893 = vmatmul.mubr.bf16.gmra.mrb[0].mxu0 %v726
      %v894 = vpop.f32.mrb[0].mxu0
      %v895 = vadd.f32 %v532, %v894
      %v896 = vpop.f32.mrb[0].mxu0
      %v897 = vpop.f32.mrb[0].mxu0
      %v898 = vadd.f32 %v532, %v897
      %v899 = vpop.f32.mrb[0].mxu0
      %900 = vmatprep.mubr.bf16.mxu0 0
      %901 = vmatmul.mubr.bf16.gmra.mrb[0].mxu0 %v729
      %v902 = vpop.f32.mrb[0].mxu0
      %v903 = vadd.f32 %v532, %v902
      %v904 = vpop.f32.mrb[0].mxu0
      %v905 = vpop.f32.mrb[0].mxu0
      %v906 = vadd.f32 %v532, %v905
      %v907 = vpop.f32.mrb[0].mxu0
      %908 = vmatprep.mubr.bf16.mxu0 0
      %909 = vmatmul.mubr.bf16.gmra.mrb[0].mxu0 %v732
      %v910 = vpop.f32.mrb[0].mxu0
      %v911 = vadd.f32 %v532, %v910
      %v912 = vpop.f32.mrb[0].mxu0
      %v913 = vpop.f32.mrb[0].mxu0
      %v914 = vadd.f32 %v532, %v913
      %v915 = vpop.f32.mrb[0].mxu0
      %916 = vmatprep.mubr.bf16.mxu0 0
      %917 = vmatmul.mubr.bf16.gmra.mrb[0].mxu0 %v735
      %v918 = vpop.f32.mrb[0].mxu0
      %v919 = vadd.f32 %v532, %v918
      %v920 = vpop.f32.mrb[0].mxu0
      %v921 = vpop.f32.mrb[0].mxu0
      %v922 = vadd.f32 %v532, %v921
      %v923 = vpop.f32.mrb[0].mxu0
      %924 = vmatprep.mubr.bf16.mxu0 0
      %925 = vmatmul.mubr.bf16.gmra.mrb[0].mxu0 %v738
      %v926 = vpop.f32.mrb[0].mxu0
      %v927 = vadd.f32 %v532, %v926
      %v928 = vpop.f32.mrb[0].mxu0
      %v929 = vpop.f32.mrb[0].mxu0
      %v930 = vadd.f32 %v532, %v929
      %v931 = vpop.f32.mrb[0].mxu0
      %932 = vmatprep.mubr.bf16.mxu0 0
      %933 = vmatmul.mubr.bf16.gmra.mrb[0].mxu0 %v741
      %v934 = vpop.f32.mrb[0].mxu0
      %v935 = vadd.f32 %v532, %v934
      %v936 = vpop.f32.mrb[0].mxu0
      %v937 = vpop.f32.mrb[0].mxu0
      %v938 = vadd.f32 %v532, %v937
      %v939 = vpop.f32.mrb[0].mxu0
      %940 = vmatprep.mubr.bf16.mxu0 0
      %941 = vmatmul.mubr.bf16.gmra.mrb[0].mxu0 %v744
      %v942 = vpop.f32.mrb[0].mxu0
      %v943 = vadd.f32 %v532, %v942
      %v944 = vpop.f32.mrb[0].mxu0
      %v945 = vpop.f32.mrb[0].mxu0
      %v946 = vadd.f32 %v532, %v945
      %v947 = vpop.f32.mrb[0].mxu0
      %948 = vmatprep.mubr.bf16.mxu0 0
      %949 = vmatmul.mubr.bf16.gmra.mrb[0].mxu0 %v747
      %v950 = vpop.f32.mrb[0].mxu0
      %v951 = vadd.f32 %v532, %v950
      %v952 = vpop.f32.mrb[0].mxu0
      %v953 = vpop.f32.mrb[0].mxu0
      %v954 = vadd.f32 %v532, %v953
      %v955 = vpop.f32.mrb[0].mxu0
      %956 = vmatprep.mubr.bf16.mxu0 0
      %957 = vmatmul.mubr.bf16.gmra.mrb[0].mxu0 %v750
      %v958 = vpop.f32.mrb[0].mxu0
      %v959 = vadd.f32 %v532, %v958
      %v960 = vpop.f32.mrb[0].mxu0
      %v961 = vpop.f32.mrb[0].mxu0
      %v962 = vadd.f32 %v532, %v961
      %v963 = vpop.f32.mrb[0].mxu0
      %964 = vmatprep.mubr.bf16.mxu0 0
      %965 = vmatmul.mubr.bf16.gmra.mrb[0].mxu0 %v753
      %v966 = vpop.f32.mrb[0].mxu0
      %v967 = vadd.f32 %v532, %v966
      %v968 = vpop.f32.mrb[0].mxu0
      %v969 = vpop.f32.mrb[0].mxu0
      %v970 = vadd.f32 %v532, %v969
      %v971 = vpop.f32.mrb[0].mxu0
      %972 = vmatprep.mubr.bf16.mxu0 0
      %973 = vmatmul.mubr.bf16.gmra.mrb[0].mxu0 %v756
      %v974 = vpop.f32.mrb[0].mxu0
      %v975 = vadd.f32 %v532, %v974
      %v976 = vpop.f32.mrb[0].mxu0
      %v977 = vpop.f32.mrb[0].mxu0
      %v978 = vadd.f32 %v532, %v977
      %v979 = vpop.f32.mrb[0].mxu0
      %980 = vmatprep.mubr.bf16.mxu0 0
      %981 = vmatmul.mubr.bf16.gmra.mrb[0].mxu0 %v759
      %v982 = vpop.f32.mrb[0].mxu0
      %v983 = vadd.f32 %v532, %v982
      %v984 = vpop.f32.mrb[0].mxu0
      %v985 = vpop.f32.mrb[0].mxu0
      %v986 = vadd.f32 %v532, %v985
      %v987 = vpop.f32.mrb[0].mxu0
      %988 = vmatprep.mubr.bf16.mxu0 0
      %989 = vmatmul.mubr.bf16.gmra.mrb[0].mxu0 %v762
      %v990 = vpop.f32.mrb[0].mxu0
      %v991 = vadd.f32 %v532, %v990
      %v992 = vpop.f32.mrb[0].mxu0
      %v993 = vpop.f32.mrb[0].mxu0
      %v994 = vadd.f32 %v532, %v993
      %v995 = vpop.f32.mrb[0].mxu0
      %996 = vmatprep.mubr.bf16.mxu0 0
      %997 = vmatmul.mubr.bf16.gmra.mrb[0].mxu0 %v765
      %v998 = vpop.f32.mrb[0].mxu0
      %v999 = vadd.f32 %v532, %v998
      %v1000 = vpop.f32.mrb[0].mxu0
      %v1001 = vpop.f32.mrb[0].mxu0
      %v1002 = vadd.f32 %v532, %v1001
      %v1003 = vpop.f32.mrb[0].mxu0
      %1004 = vmatprep.mubr.bf16.mxu0 0
      %1005 = vmatmul.mubr.bf16.gmra.mrb[0].mxu0 %v768
      %v1006 = vpop.f32.mrb[0].mxu0
      %v1007 = vadd.f32 %v532, %v1006
      %v1008 = vpop.f32.mrb[0].mxu0
      %v1009 = vpop.f32.mrb[0].mxu0
      %v1010 = vadd.f32 %v532, %v1009
      %v1011 = vpop.f32.mrb[0].mxu0
      %1012 = vmatprep.mubr.bf16.mxu0 0
      %1013 = vmatmul.mubr.bf16.gmra.mrb[0].mxu0 %v771
      %v1014 = vpop.f32.mrb[0].mxu0
      %v1015 = vadd.f32 %v532, %v1014
      %v1016 = vpop.f32.mrb[0].mxu0
      %v1017 = vpop.f32.mrb[0].mxu0
      %v1018 = vadd.f32 %v532, %v1017
      %v1019 = vpop.f32.mrb[0].mxu0
      %1020 = vmatprep.mubr.bf16.mxu0 0
      %1021 = vmatmul.mubr.bf16.gmra.mrb[0].mxu0 %v774
      %v1022 = vpop.f32.mrb[0].mxu0
      %v1023 = vadd.f32 %v532, %v1022
      %v1024 = vpop.f32.mrb[0].mxu0
      %v1025 = vpop.f32.mrb[0].mxu0
      %v1026 = vadd.f32 %v532, %v1025
      %v1027 = vpop.f32.mrb[0].mxu0
      %1028 = vmatprep.mubr.bf16.mxu0 0
      %1029 = vmatmul.mubr.bf16.gmra.mrb[0].mxu0 %v777
      %v1030 = vpop.f32.mrb[0].mxu0
      %v1031 = vadd.f32 %v532, %v1030
      %v1032 = vpop.f32.mrb[0].mxu0
      %v1033 = vpop.f32.mrb[0].mxu0
      %v1034 = vadd.f32 %v532, %v1033
      %v1035 = vpop.f32.mrb[0].mxu0
      %1036 = vmatprep.mubr.bf16.mxu0 0
      %1037 = vmatmul.mubr.bf16.gmra.mrb[0].mxu0 %v780
      %v1038 = vpop.f32.mrb[0].mxu0
      %v1039 = vadd.f32 %v532, %v1038
      %v1040 = vpop.f32.mrb[0].mxu0
      %v1041 = vpop.f32.mrb[0].mxu0
      %v1042 = vadd.f32 %v532, %v1041
      %v1043 = vpop.f32.mrb[0].mxu0
      %1044 = vmatprep.mubr.bf16.mxu0 0
      %1045 = vmatmul.mubr.bf16.gmra.mrb[0].mxu0 %v783
      %v1046 = vpop.f32.mrb[0].mxu0
      %v1047 = vadd.f32 %v532, %v1046
      %v1048 = vpop.f32.mrb[0].mxu0
      %v1049 = vpop.f32.mrb[0].mxu0
      %v1050 = vadd.f32 %v532, %v1049
      %v1051 = vpop.f32.mrb[0].mxu0
      %1052 = vmatprep.mubr.bf16.mxu0 0
      %1053 = vmatmul.mubr.bf16.gmra.mrb[0].mxu0 %v786
      %v1054 = vpop.f32.mrb[0].mxu0
      %v1055 = vadd.f32 %v532, %v1054
      %v1056 = vpop.f32.mrb[0].mxu0
      %v1057 = vpop.f32.mrb[0].mxu0
      %v1058 = vadd.f32 %v532, %v1057
      %v1059 = vpop.f32.mrb[0].mxu0
      %1060 = vmatprep.mubr.bf16.mxu0 0
      %1061 = vmatmul.mubr.bf16.gmra.mrb[0].mxu0 %v789
      %v1062 = vpop.f32.mrb[0].mxu0
      %v1063 = vadd.f32 %v532, %v1062
      %v1064 = vpop.f32.mrb[0].mxu0
      %v1065 = vpop.f32.mrb[0].mxu0
      %v1066 = vadd.f32 %v532, %v1065
      %v1067 = vpop.f32.mrb[0].mxu0
      %1068 = vmatprep.mubr.bf16.mxu0 0
      %1069 = vmatmul.mubr.bf16.gmra.mrb[0].mxu0 %v792
      %v1070 = vpop.f32.mrb[0].mxu0
      %v1071 = vadd.f32 %v532, %v1070
      %v1072 = vpop.f32.mrb[0].mxu0
      %v1073 = vpop.f32.mrb[0].mxu0
      %v1074 = vadd.f32 %v532, %v1073
      %v1075 = vpop.f32.mrb[0].mxu0
      %1076 = vmatprep.mubr.bf16.mxu0 0
      %1077 = vmatmul.mubr.bf16.gmra.mrb[0].mxu0 %v795
      %v1078 = vpop.f32.mrb[0].mxu0
      %v1079 = vadd.f32 %v532, %v1078
      %v1080 = vpop.f32.mrb[0].mxu0
      %v1081 = vpop.f32.mrb[0].mxu0
      %v1082 = vadd.f32 %v532, %v1081
      %v1083 = vpop.f32.mrb[0].mxu0
      %1084 = vmatprep.mubr.bf16.mxu0 0
      %1085 = vmatmul.mubr.bf16.gmra.mrb[0].mxu0 %v798
      %v1086 = vpop.f32.mrb[0].mxu0
      %v1087 = vadd.f32 %v532, %v1086
      %v1088 = vpop.f32.mrb[0].mxu0
      %v1089 = vpop.f32.mrb[0].mxu0
      %v1090 = vadd.f32 %v532, %v1089
      %v1091 = vpop.f32.mrb[0].mxu0
      %1092 = vdwg.mxu0
      %v1093 = vmax.f32 %v839, 0.0
      %v1094 = vmax.f32 %v842, 0.0
      %v1095 = vmax.f32 %v847, 0.0
      %v1096 = vmax.f32 %v850, 0.0
      %v1097 = vmax.f32 %v855, 0.0
      %v1098 = vmax.f32 %v858, 0.0
      %v1099 = vmax.f32 %v863, 0.0
      %v1100 = vmax.f32 %v866, 0.0
      %v1101 = vmax.f32 %v871, 0.0
      %v1102 = vmax.f32 %v874, 0.0
      %v1103 = vmax.f32 %v879, 0.0
      %v1104 = vmax.f32 %v882, 0.0
      %v1105 = vmax.f32 %v887, 0.0
      %v1106 = vmax.f32 %v890, 0.0
      %v1107 = vmax.f32 %v895, 0.0
      %v1108 = vmax.f32 %v898, 0.0
      %v1109 = vmax.f32 %v903, 0.0
      %v1110 = vmax.f32 %v906, 0.0
      %v1111 = vmax.f32 %v911, 0.0
      %v1112 = vmax.f32 %v914, 0.0
      %v1113 = vmax.f32 %v919, 0.0
      %v1114 = vmax.f32 %v922, 0.0
      %v1115 = vmax.f32 %v927, 0.0
      %v1116 = vmax.f32 %v930, 0.0
      %v1117 = vmax.f32 %v935, 0.0
      %v1118 = vmax.f32 %v938, 0.0
      %v1119 = vmax.f32 %v943, 0.0
      %v1120 = vmax.f32 %v946, 0.0
      %v1121 = vmax.f32 %v951, 0.0
      %v1122 = vmax.f32 %v954, 0.0
      %v1123 = vmax.f32 %v959, 0.0
      %v1124 = vmax.f32 %v962, 0.0
      %v1125 = vmax.f32 %v967, 0.0
      %v1126 = vmax.f32 %v970, 0.0
      %v1127 = vmax.f32 %v975, 0.0
      %v1128 = vmax.f32 %v978, 0.0
      %v1129 = vmax.f32 %v983, 0.0
      %v1130 = vmax.f32 %v986, 0.0
      %v1131 = vmax.f32 %v991, 0.0
      %v1132 = vmax.f32 %v994, 0.0
      %v1133 = vmax.f32 %v999, 0.0
      %v1134 = vmax.f32 %v1002, 0.0
      %v1135 = vmax.f32 %v1007, 0.0
      %v1136 = vmax.f32 %v1010, 0.0
      %v1137 = vmax.f32 %v1015, 0.0
      %v1138 = vmax.f32 %v1018, 0.0
      %v1139 = vmax.f32 %v1023, 0.0
      %v1140 = vmax.f32 %v1026, 0.0
      %v1141 = vmax.f32 %v1031, 0.0
      %v1142 = vmax.f32 %v1034, 0.0
      %v1143 = vmax.f32 %v1039, 0.0
      %v1144 = vmax.f32 %v1042, 0.0
      %v1145 = vmax.f32 %v1047, 0.0
      %v1146 = vmax.f32 %v1050, 0.0
      %v1147 = vmax.f32 %v1055, 0.0
      %v1148 = vmax.f32 %v1058, 0.0
      %v1149 = vmax.f32 %v1063, 0.0
      %v1150 = vmax.f32 %v1066, 0.0
      %v1151 = vmax.f32 %v1071, 0.0
      %v1152 = vmax.f32 %v1074, 0.0
      %v1153 = vmax.f32 %v1079, 0.0
      %v1154 = vmax.f32 %v1082, 0.0
      %v1155 = vmax.f32 %v1087, 0.0
      %v1156 = vmax.f32 %v1090, 0.0
      %v1157 = vpack.c.bf16 %v1094, %v1093
      %v1158 = vpack.c.bf16 %v1096, %v1095
      %v1159 = vpack.c.bf16 %v1098, %v1097
      %v1160 = vpack.c.bf16 %v1100, %v1099
      %v1161 = vpack.c.bf16 %v1102, %v1101
      %v1162 = vpack.c.bf16 %v1104, %v1103
      %v1163 = vpack.c.bf16 %v1106, %v1105
      %v1164 = vpack.c.bf16 %v1108, %v1107
      %v1165 = vpack.c.bf16 %v1110, %v1109
      %v1166 = vpack.c.bf16 %v1112, %v1111
      %v1167 = vpack.c.bf16 %v1114, %v1113
      %v1168 = vpack.c.bf16 %v1116, %v1115
      %v1169 = vpack.c.bf16 %v1118, %v1117
      %v1170 = vpack.c.bf16 %v1120, %v1119
      %v1171 = vpack.c.bf16 %v1122, %v1121
      %v1172 = vpack.c.bf16 %v1124, %v1123
      %v1173 = vpack.c.bf16 %v1126, %v1125
      %v1174 = vpack.c.bf16 %v1128, %v1127
      %v1175 = vpack.c.bf16 %v1130, %v1129
      %v1176 = vpack.c.bf16 %v1132, %v1131
      %v1177 = vpack.c.bf16 %v1134, %v1133
      %v1178 = vpack.c.bf16 %v1136, %v1135
      %v1179 = vpack.c.bf16 %v1138, %v1137
      %v1180 = vpack.c.bf16 %v1140, %v1139
      %v1181 = vpack.c.bf16 %v1142, %v1141
      %v1182 = vpack.c.bf16 %v1144, %v1143
      %v1183 = vpack.c.bf16 %v1146, %v1145
      %v1184 = vpack.c.bf16 %v1148, %v1147
      %v1185 = vpack.c.bf16 %v1150, %v1149
      %v1186 = vpack.c.bf16 %v1152, %v1151
      %v1187 = vpack.c.bf16 %v1154, %v1153
      %v1188 = vpack.c.bf16 %v1156, %v1155
      %v1189 = vld [vmem:[%s4] sm:$0xff]
      %v1190 = vld [vmem:[%s4 + $0x8] sm:$0xff]
      %v1191 = vld [vmem:[%s4 + $0x10] sm:$0xff]
      %v1192 = vld [vmem:[%s4 + $0x18] sm:$0xff]
      %v1193 = vld [vmem:[%s4 + $0x20] sm:$0xff]
      %v1194 = vld [vmem:[%s4 + $0x28] sm:$0xff]
      %v1195 = vld [vmem:[%s4 + $0x30] sm:$0xff]
      %v1196 = vld [vmem:[%s4 + $0x38] sm:$0xff]
      %v1197 = vld [vmem:[%s4 + $0x40] sm:$0xff]
      %v1198 = vld [vmem:[%s5] sm:$0x3]
      %v1200 = vlaneseq
      %v1201 = vshrl.u32 %v1200, 7
      %v1202 = vsub.s32 0, %v1201
      %v1203 = vrot.slane %v1198, %v1202
      %v1204 = vlaneseq
      %v1205 = vshrl.u32 %v1204, 7
      %v1206 = vsub.s32 1, %v1205
      %v1207 = vrot.slane %v1198, %v1206
      %v1219 = vunpack.c.l.b16 %v1189
      %v1220 = vunpack.c.h.b16 %v1189
      %v1221 = vunpack.c.l.b16 %v1190
      %v1222 = vunpack.c.h.b16 %v1190
      %v1223 = vunpack.c.l.b16 %v1191
      %v1224 = vunpack.c.h.b16 %v1191
      %v1225 = vunpack.c.l.b16 %v1192
      %v1226 = vunpack.c.h.b16 %v1192
      %v1227 = vunpack.c.l.b16 %v1193
      %v1228 = vunpack.c.h.b16 %v1193
      %v1229 = vunpack.c.l.b16 %v1194
      %v1230 = vunpack.c.h.b16 %v1194
      %v1231 = vunpack.c.l.b16 %v1195
      %v1232 = vunpack.c.h.b16 %v1195
      %v1233 = vunpack.c.l.b16 %v1196
      %v1234 = vunpack.c.h.b16 %v1196
      %v1235 = vunpack.c.l.b16 %v1197
      %v1236 = vunpack.c.h.b16 %v1197
      %v1237 = vpack.c.b16 %v1221, %v1219
      %v1238 = vpack.c.b16 %v1222, %v1220
      %v1239 = vpack.c.b16 %v1225, %v1223
      %v1240 = vpack.c.b16 %v1226, %v1224
      %v1241 = vpack.c.b16 %v1229, %v1227
      %v1242 = vpack.c.b16 %v1230, %v1228
      %v1243 = vpack.c.b16 %v1233, %v1231
      %v1244 = vpack.c.b16 %v1234, %v1232
      %v1245 = vpack.c.b16 %v1235, %v1235
      %v1246 = vpack.c.b16 %v1236, %v1236
      %vm1255 = vcmask 588800
      %v1257 = vsel %vm1255, %v1157, 0
      %v1260 = vsel %vm1255, %v1158, 0
      %v1263 = vsel %vm1255, %v1159, 0
      %v1266 = vsel %vm1255, %v1160, 0
      %v1269 = vsel %vm1255, %v1161, 0
      %v1272 = vsel %vm1255, %v1162, 0
      %v1275 = vsel %vm1255, %v1163, 0
      %v1278 = vsel %vm1255, %v1164, 0
      %v1281 = vsel %vm1255, %v1165, 0
      %v1284 = vsel %vm1255, %v1166, 0
      %v1287 = vsel %vm1255, %v1167, 0
      %v1290 = vsel %vm1255, %v1168, 0
      %v1293 = vsel %vm1255, %v1169, 0
      %v1296 = vsel %vm1255, %v1170, 0
      %v1299 = vsel %vm1255, %v1171, 0
      %v1302 = vsel %vm1255, %v1172, 0
      %v1305 = vsel %vm1255, %v1173, 0
      %v1308 = vsel %vm1255, %v1174, 0
      %v1311 = vsel %vm1255, %v1175, 0
      %v1314 = vsel %vm1255, %v1176, 0
      %v1317 = vsel %vm1255, %v1177, 0
      %v1320 = vsel %vm1255, %v1178, 0
      %v1323 = vsel %vm1255, %v1179, 0
      %v1326 = vsel %vm1255, %v1180, 0
      %v1329 = vsel %vm1255, %v1181, 0
      %v1332 = vsel %vm1255, %v1182, 0
      %v1335 = vsel %vm1255, %v1183, 0
      %v1338 = vsel %vm1255, %v1184, 0
      %v1341 = vsel %vm1255, %v1185, 0
      %v1344 = vsel %vm1255, %v1186, 0
      %v1347 = vsel %vm1255, %v1187, 0
      %v1350 = vsel %vm1255, %v1188, 0
      %v1353 = vsel %vm800, %v1245, 0
      %v1356 = vsel %vm800, %v1246, 0
      %1358 = vmatprep.subr.bf16.mxu0 %v1238
      %1359 = vmatpush1.bf16.msra.mxu0 %v1237
      %1360 = vmatprep.subr.bf16.mxu0 %v1240
      %1361 = vmatpush1.bf16.msra.mxu0 %v1239
      %1362 = vmatprep.subr.bf16.mxu0 %v1242
      %1363 = vmatpush1.bf16.msra.mxu0 %v1241
      %1364 = vmatprep.subr.bf16.mxu0 %v1244
      %1365 = vmatpush1.bf16.msra.mxu0 %v1243
      %1366 = vmatprep.subr.bf16.mxu0 %v1356
      %1367 = vmatpush1.bf16.msra.mxu0 %v1353
      %1368 = vmatprep.subr.bf16.mxu0 0
      %1369 = vmatpush1.bf16.msra.mxu0 0
      %1370 = vmatprep.subr.bf16.mxu0 0
      %1371 = vmatpush1.bf16.msra.mxu0 0
      %1372 = vmatprep.subr.bf16.mxu0 0
      %1373 = vmatpush1.bf16.msra.mxu0 0
      %1374 = vmatprep.subr.bf16.mxu0 0
      %1375 = vmatpush1.bf16.msra.mxu0 0
      %1376 = vmatprep.subr.bf16.mxu0 0
      %1377 = vmatpush1.bf16.msra.mxu0 0
      %1378 = vmatprep.subr.bf16.mxu0 0
      %1379 = vmatpush1.bf16.msra.mxu0 0
      %1380 = vmatprep.subr.bf16.mxu0 0
      %1381 = vmatpush1.bf16.msra.mxu0 0
      %1382 = vmatprep.subr.bf16.mxu0 0
      %1383 = vmatpush1.bf16.msra.mxu0 0
      %1384 = vmatprep.subr.bf16.mxu0 0
      %1385 = vmatpush1.bf16.msra.mxu0 0
      %1386 = vmatprep.subr.bf16.mxu0 0
      %1387 = vmatpush1.bf16.msra.mxu0 0
      %1388 = vmatprep.subr.bf16.mxu0 0
      %1389 = vmatpush1.bf16.msra.mxu0 0
      %1390 = vmatprep.mubr.bf16.mxu0 0
      %1391 = vmatmul.mubr.bf16.gmra.mrb[0].mxu0 %v1257
      %v1392 = vpop.f32.mrb[0].mxu0
      %v1393 = vadd.f32 %v1203, %v1392
      %v1394 = vpop.f32.mrb[0].mxu0
      %v1395 = vadd.f32 %v1207, %v1394
      %v1396 = vpop.f32.mrb[0].mxu0
      %v1397 = vadd.f32 %v1203, %v1396
      %v1398 = vpop.f32.mrb[0].mxu0
      %v1399 = vadd.f32 %v1207, %v1398
      %1400 = vmatprep.mubr.bf16.mxu0 0
      %1401 = vmatmul.mubr.bf16.gmra.mrb[0].mxu0 %v1260
      %v1402 = vpop.f32.mrb[0].mxu0
      %v1403 = vadd.f32 %v1203, %v1402
      %v1404 = vpop.f32.mrb[0].mxu0
      %v1405 = vadd.f32 %v1207, %v1404
      %v1406 = vpop.f32.mrb[0].mxu0
      %v1407 = vadd.f32 %v1203, %v1406
      %v1408 = vpop.f32.mrb[0].mxu0
      %v1409 = vadd.f32 %v1207, %v1408
      %1410 = vmatprep.mubr.bf16.mxu0 0
      %1411 = vmatmul.mubr.bf16.gmra.mrb[0].mxu0 %v1263
      %v1412 = vpop.f32.mrb[0].mxu0
      %v1413 = vadd.f32 %v1203, %v1412
      %v1414 = vpop.f32.mrb[0].mxu0
      %v1415 = vadd.f32 %v1207, %v1414
      %v1416 = vpop.f32.mrb[0].mxu0
      %v1417 = vadd.f32 %v1203, %v1416
      %v1418 = vpop.f32.mrb[0].mxu0
      %v1419 = vadd.f32 %v1207, %v1418
      %1420 = vmatprep.mubr.bf16.mxu0 0
      %1421 = vmatmul.mubr.bf16.gmra.mrb[0].mxu0 %v1266
      %v1422 = vpop.f32.mrb[0].mxu0
      %v1423 = vadd.f32 %v1203, %v1422
      %v1424 = vpop.f32.mrb[0].mxu0
      %v1425 = vadd.f32 %v1207, %v1424
      %v1426 = vpop.f32.mrb[0].mxu0
      %v1427 = vadd.f32 %v1203, %v1426
      %v1428 = vpop.f32.mrb[0].mxu0
      %v1429 = vadd.f32 %v1207, %v1428
      %1430 = vmatprep.mubr.bf16.mxu0 0
      %1431 = vmatmul.mubr.bf16.gmra.mrb[0].mxu0 %v1269
      %v1432 = vpop.f32.mrb[0].mxu0
      %v1433 = vadd.f32 %v1203, %v1432
      %v1434 = vpop.f32.mrb[0].mxu0
      %v1435 = vadd.f32 %v1207, %v1434
      %v1436 = vpop.f32.mrb[0].mxu0
      %v1437 = vadd.f32 %v1203, %v1436
      %v1438 = vpop.f32.mrb[0].mxu0
      %v1439 = vadd.f32 %v1207, %v1438
      %1440 = vmatprep.mubr.bf16.mxu0 0
      %1441 = vmatmul.mubr.bf16.gmra.mrb[0].mxu0 %v1272
      %v1442 = vpop.f32.mrb[0].mxu0
      %v1443 = vadd.f32 %v1203, %v1442
      %v1444 = vpop.f32.mrb[0].mxu0
      %v1445 = vadd.f32 %v1207, %v1444
      %v1446 = vpop.f32.mrb[0].mxu0
      %v1447 = vadd.f32 %v1203, %v1446
      %v1448 = vpop.f32.mrb[0].mxu0
      %v1449 = vadd.f32 %v1207, %v1448
      %1450 = vmatprep.mubr.bf16.mxu0 0
      %1451 = vmatmul.mubr.bf16.gmra.mrb[0].mxu0 %v1275
      %v1452 = vpop.f32.mrb[0].mxu0
      %v1453 = vadd.f32 %v1203, %v1452
      %v1454 = vpop.f32.mrb[0].mxu0
      %v1455 = vadd.f32 %v1207, %v1454
      %v1456 = vpop.f32.mrb[0].mxu0
      %v1457 = vadd.f32 %v1203, %v1456
      %v1458 = vpop.f32.mrb[0].mxu0
      %v1459 = vadd.f32 %v1207, %v1458
      %1460 = vmatprep.mubr.bf16.mxu0 0
      %1461 = vmatmul.mubr.bf16.gmra.mrb[0].mxu0 %v1278
      %v1462 = vpop.f32.mrb[0].mxu0
      %v1463 = vadd.f32 %v1203, %v1462
      %v1464 = vpop.f32.mrb[0].mxu0
      %v1465 = vadd.f32 %v1207, %v1464
      %v1466 = vpop.f32.mrb[0].mxu0
      %v1467 = vadd.f32 %v1203, %v1466
      %v1468 = vpop.f32.mrb[0].mxu0
      %v1469 = vadd.f32 %v1207, %v1468
      %1470 = vmatprep.mubr.bf16.mxu0 0
      %1471 = vmatmul.mubr.bf16.gmra.mrb[0].mxu0 %v1281
      %v1472 = vpop.f32.mrb[0].mxu0
      %v1473 = vadd.f32 %v1203, %v1472
      %v1474 = vpop.f32.mrb[0].mxu0
      %v1475 = vadd.f32 %v1207, %v1474
      %v1476 = vpop.f32.mrb[0].mxu0
      %v1477 = vadd.f32 %v1203, %v1476
      %v1478 = vpop.f32.mrb[0].mxu0
      %v1479 = vadd.f32 %v1207, %v1478
      %1480 = vmatprep.mubr.bf16.mxu0 0
      %1481 = vmatmul.mubr.bf16.gmra.mrb[0].mxu0 %v1284
      %v1482 = vpop.f32.mrb[0].mxu0
      %v1483 = vadd.f32 %v1203, %v1482
      %v1484 = vpop.f32.mrb[0].mxu0
      %v1485 = vadd.f32 %v1207, %v1484
      %v1486 = vpop.f32.mrb[0].mxu0
      %v1487 = vadd.f32 %v1203, %v1486
      %v1488 = vpop.f32.mrb[0].mxu0
      %v1489 = vadd.f32 %v1207, %v1488
      %1490 = vmatprep.mubr.bf16.mxu0 0
      %1491 = vmatmul.mubr.bf16.gmra.mrb[0].mxu0 %v1287
      %v1492 = vpop.f32.mrb[0].mxu0
      %v1493 = vadd.f32 %v1203, %v1492
      %v1494 = vpop.f32.mrb[0].mxu0
      %v1495 = vadd.f32 %v1207, %v1494
      %v1496 = vpop.f32.mrb[0].mxu0
      %v1497 = vadd.f32 %v1203, %v1496
      %v1498 = vpop.f32.mrb[0].mxu0
      %v1499 = vadd.f32 %v1207, %v1498
      %1500 = vmatprep.mubr.bf16.mxu0 0
      %1501 = vmatmul.mubr.bf16.gmra.mrb[0].mxu0 %v1290
      %v1502 = vpop.f32.mrb[0].mxu0
      %v1503 = vadd.f32 %v1203, %v1502
      %v1504 = vpop.f32.mrb[0].mxu0
      %v1505 = vadd.f32 %v1207, %v1504
      %v1506 = vpop.f32.mrb[0].mxu0
      %v1507 = vadd.f32 %v1203, %v1506
      %v1508 = vpop.f32.mrb[0].mxu0
      %v1509 = vadd.f32 %v1207, %v1508
      %1510 = vmatprep.mubr.bf16.mxu0 0
      %1511 = vmatmul.mubr.bf16.gmra.mrb[0].mxu0 %v1293
      %v1512 = vpop.f32.mrb[0].mxu0
      %v1513 = vadd.f32 %v1203, %v1512
      %v1514 = vpop.f32.mrb[0].mxu0
      %v1515 = vadd.f32 %v1207, %v1514
      %v1516 = vpop.f32.mrb[0].mxu0
      %v1517 = vadd.f32 %v1203, %v1516
      %v1518 = vpop.f32.mrb[0].mxu0
      %v1519 = vadd.f32 %v1207, %v1518
      %1520 = vmatprep.mubr.bf16.mxu0 0
      %1521 = vmatmul.mubr.bf16.gmra.mrb[0].mxu0 %v1296
      %v1522 = vpop.f32.mrb[0].mxu0
      %v1523 = vadd.f32 %v1203, %v1522
      %v1524 = vpop.f32.mrb[0].mxu0
      %v1525 = vadd.f32 %v1207, %v1524
      %v1526 = vpop.f32.mrb[0].mxu0
      %v1527 = vadd.f32 %v1203, %v1526
      %v1528 = vpop.f32.mrb[0].mxu0
      %v1529 = vadd.f32 %v1207, %v1528
      %1530 = vmatprep.mubr.bf16.mxu0 0
      %1531 = vmatmul.mubr.bf16.gmra.mrb[0].mxu0 %v1299
      %v1532 = vpop.f32.mrb[0].mxu0
      %v1533 = vadd.f32 %v1203, %v1532
      %v1534 = vpop.f32.mrb[0].mxu0
      %v1535 = vadd.f32 %v1207, %v1534
      %v1536 = vpop.f32.mrb[0].mxu0
      %v1537 = vadd.f32 %v1203, %v1536
      %v1538 = vpop.f32.mrb[0].mxu0
      %v1539 = vadd.f32 %v1207, %v1538
      %1540 = vmatprep.mubr.bf16.mxu0 0
      %1541 = vmatmul.mubr.bf16.gmra.mrb[0].mxu0 %v1302
      %v1542 = vpop.f32.mrb[0].mxu0
      %v1543 = vadd.f32 %v1203, %v1542
      %v1544 = vpop.f32.mrb[0].mxu0
      %v1545 = vadd.f32 %v1207, %v1544
      %v1546 = vpop.f32.mrb[0].mxu0
      %v1547 = vadd.f32 %v1203, %v1546
      %v1548 = vpop.f32.mrb[0].mxu0
      %v1549 = vadd.f32 %v1207, %v1548
      %1550 = vmatprep.mubr.bf16.mxu0 0
      %1551 = vmatmul.mubr.bf16.gmra.mrb[0].mxu0 %v1305
      %v1552 = vpop.f32.mrb[0].mxu0
      %v1553 = vadd.f32 %v1203, %v1552
      %v1554 = vpop.f32.mrb[0].mxu0
      %v1555 = vadd.f32 %v1207, %v1554
      %v1556 = vpop.f32.mrb[0].mxu0
      %v1557 = vadd.f32 %v1203, %v1556
      %v1558 = vpop.f32.mrb[0].mxu0
      %v1559 = vadd.f32 %v1207, %v1558
      %1560 = vmatprep.mubr.bf16.mxu0 0
      %1561 = vmatmul.mubr.bf16.gmra.mrb[0].mxu0 %v1308
      %v1562 = vpop.f32.mrb[0].mxu0
      %v1563 = vadd.f32 %v1203, %v1562
      %v1564 = vpop.f32.mrb[0].mxu0
      %v1565 = vadd.f32 %v1207, %v1564
      %v1566 = vpop.f32.mrb[0].mxu0
      %v1567 = vadd.f32 %v1203, %v1566
      %v1568 = vpop.f32.mrb[0].mxu0
      %v1569 = vadd.f32 %v1207, %v1568
      %1570 = vmatprep.mubr.bf16.mxu0 0
      %1571 = vmatmul.mubr.bf16.gmra.mrb[0].mxu0 %v1311
      %v1572 = vpop.f32.mrb[0].mxu0
      %v1573 = vadd.f32 %v1203, %v1572
      %v1574 = vpop.f32.mrb[0].mxu0
      %v1575 = vadd.f32 %v1207, %v1574
      %v1576 = vpop.f32.mrb[0].mxu0
      %v1577 = vadd.f32 %v1203, %v1576
      %v1578 = vpop.f32.mrb[0].mxu0
      %v1579 = vadd.f32 %v1207, %v1578
      %1580 = vmatprep.mubr.bf16.mxu0 0
      %1581 = vmatmul.mubr.bf16.gmra.mrb[0].mxu0 %v1314
      %v1582 = vpop.f32.mrb[0].mxu0
      %v1583 = vadd.f32 %v1203, %v1582
      %v1584 = vpop.f32.mrb[0].mxu0
      %v1585 = vadd.f32 %v1207, %v1584
      %v1586 = vpop.f32.mrb[0].mxu0
      %v1587 = vadd.f32 %v1203, %v1586
      %v1588 = vpop.f32.mrb[0].mxu0
      %v1589 = vadd.f32 %v1207, %v1588
      %1590 = vmatprep.mubr.bf16.mxu0 0
      %1591 = vmatmul.mubr.bf16.gmra.mrb[0].mxu0 %v1317
      %v1592 = vpop.f32.mrb[0].mxu0
      %v1593 = vadd.f32 %v1203, %v1592
      %v1594 = vpop.f32.mrb[0].mxu0
      %v1595 = vadd.f32 %v1207, %v1594
      %v1596 = vpop.f32.mrb[0].mxu0
      %v1597 = vadd.f32 %v1203, %v1596
      %v1598 = vpop.f32.mrb[0].mxu0
      %v1599 = vadd.f32 %v1207, %v1598
      %1600 = vmatprep.mubr.bf16.mxu0 0
      %1601 = vmatmul.mubr.bf16.gmra.mrb[0].mxu0 %v1320
      %v1602 = vpop.f32.mrb[0].mxu0
      %v1603 = vadd.f32 %v1203, %v1602
      %v1604 = vpop.f32.mrb[0].mxu0
      %v1605 = vadd.f32 %v1207, %v1604
      %v1606 = vpop.f32.mrb[0].mxu0
      %v1607 = vadd.f32 %v1203, %v1606
      %v1608 = vpop.f32.mrb[0].mxu0
      %v1609 = vadd.f32 %v1207, %v1608
      %1610 = vmatprep.mubr.bf16.mxu0 0
      %1611 = vmatmul.mubr.bf16.gmra.mrb[0].mxu0 %v1323
      %v1612 = vpop.f32.mrb[0].mxu0
      %v1613 = vadd.f32 %v1203, %v1612
      %v1614 = vpop.f32.mrb[0].mxu0
      %v1615 = vadd.f32 %v1207, %v1614
      %v1616 = vpop.f32.mrb[0].mxu0
      %v1617 = vadd.f32 %v1203, %v1616
      %v1618 = vpop.f32.mrb[0].mxu0
      %v1619 = vadd.f32 %v1207, %v1618
      %1620 = vmatprep.mubr.bf16.mxu0 0
      %1621 = vmatmul.mubr.bf16.gmra.mrb[0].mxu0 %v1326
      %v1622 = vpop.f32.mrb[0].mxu0
      %v1623 = vadd.f32 %v1203, %v1622
      %v1624 = vpop.f32.mrb[0].mxu0
      %v1625 = vadd.f32 %v1207, %v1624
      %v1626 = vpop.f32.mrb[0].mxu0
      %v1627 = vadd.f32 %v1203, %v1626
      %v1628 = vpop.f32.mrb[0].mxu0
      %v1629 = vadd.f32 %v1207, %v1628
      %1630 = vmatprep.mubr.bf16.mxu0 0
      %1631 = vmatmul.mubr.bf16.gmra.mrb[0].mxu0 %v1329
      %v1632 = vpop.f32.mrb[0].mxu0
      %v1633 = vadd.f32 %v1203, %v1632
      %v1634 = vpop.f32.mrb[0].mxu0
      %v1635 = vadd.f32 %v1207, %v1634
      %v1636 = vpop.f32.mrb[0].mxu0
      %v1637 = vadd.f32 %v1203, %v1636
      %v1638 = vpop.f32.mrb[0].mxu0
      %v1639 = vadd.f32 %v1207, %v1638
      %1640 = vmatprep.mubr.bf16.mxu0 0
      %1641 = vmatmul.mubr.bf16.gmra.mrb[0].mxu0 %v1332
      %v1642 = vpop.f32.mrb[0].mxu0
      %v1643 = vadd.f32 %v1203, %v1642
      %v1644 = vpop.f32.mrb[0].mxu0
      %v1645 = vadd.f32 %v1207, %v1644
      %v1646 = vpop.f32.mrb[0].mxu0
      %v1647 = vadd.f32 %v1203, %v1646
      %v1648 = vpop.f32.mrb[0].mxu0
      %v1649 = vadd.f32 %v1207, %v1648
      %1650 = vmatprep.mubr.bf16.mxu0 0
      %1651 = vmatmul.mubr.bf16.gmra.mrb[0].mxu0 %v1335
      %v1652 = vpop.f32.mrb[0].mxu0
      %v1653 = vadd.f32 %v1203, %v1652
      %v1654 = vpop.f32.mrb[0].mxu0
      %v1655 = vadd.f32 %v1207, %v1654
      %v1656 = vpop.f32.mrb[0].mxu0
      %v1657 = vadd.f32 %v1203, %v1656
      %v1658 = vpop.f32.mrb[0].mxu0
      %v1659 = vadd.f32 %v1207, %v1658
      %1660 = vmatprep.mubr.bf16.mxu0 0
      %1661 = vmatmul.mubr.bf16.gmra.mrb[0].mxu0 %v1338
      %v1662 = vpop.f32.mrb[0].mxu0
      %v1663 = vadd.f32 %v1203, %v1662
      %v1664 = vpop.f32.mrb[0].mxu0
      %v1665 = vadd.f32 %v1207, %v1664
      %v1666 = vpop.f32.mrb[0].mxu0
      %v1667 = vadd.f32 %v1203, %v1666
      %v1668 = vpop.f32.mrb[0].mxu0
      %v1669 = vadd.f32 %v1207, %v1668
      %1670 = vmatprep.mubr.bf16.mxu0 0
      %1671 = vmatmul.mubr.bf16.gmra.mrb[0].mxu0 %v1341
      %v1672 = vpop.f32.mrb[0].mxu0
      %v1673 = vadd.f32 %v1203, %v1672
      %v1674 = vpop.f32.mrb[0].mxu0
      %v1675 = vadd.f32 %v1207, %v1674
      %v1676 = vpop.f32.mrb[0].mxu0
      %v1677 = vadd.f32 %v1203, %v1676
      %v1678 = vpop.f32.mrb[0].mxu0
      %v1679 = vadd.f32 %v1207, %v1678
      %1680 = vmatprep.mubr.bf16.mxu0 0
      %1681 = vmatmul.mubr.bf16.gmra.mrb[0].mxu0 %v1344
      %v1682 = vpop.f32.mrb[0].mxu0
      %v1683 = vadd.f32 %v1203, %v1682
      %v1684 = vpop.f32.mrb[0].mxu0
      %v1685 = vadd.f32 %v1207, %v1684
      %v1686 = vpop.f32.mrb[0].mxu0
      %v1687 = vadd.f32 %v1203, %v1686
      %v1688 = vpop.f32.mrb[0].mxu0
      %v1689 = vadd.f32 %v1207, %v1688
      %1690 = vmatprep.mubr.bf16.mxu0 0
      %1691 = vmatmul.mubr.bf16.gmra.mrb[0].mxu0 %v1347
      %v1692 = vpop.f32.mrb[0].mxu0
      %v1693 = vadd.f32 %v1203, %v1692
      %v1694 = vpop.f32.mrb[0].mxu0
      %v1695 = vadd.f32 %v1207, %v1694
      %v1696 = vpop.f32.mrb[0].mxu0
      %v1697 = vadd.f32 %v1203, %v1696
      %v1698 = vpop.f32.mrb[0].mxu0
      %v1699 = vadd.f32 %v1207, %v1698
      %1700 = vmatprep.mubr.bf16.mxu0 0
      %1701 = vmatmul.mubr.bf16.gmra.mrb[0].mxu0 %v1350
      %v1702 = vpop.f32.mrb[0].mxu0
      %v1703 = vadd.f32 %v1203, %v1702
      %v1704 = vpop.f32.mrb[0].mxu0
      %v1705 = vadd.f32 %v1207, %v1704
      %v1706 = vpop.f32.mrb[0].mxu0
      %v1707 = vadd.f32 %v1203, %v1706
      %v1708 = vpop.f32.mrb[0].mxu0
      %v1709 = vadd.f32 %v1207, %v1708
      %1710 = vdwg.mxu0
      %v1711 = vxor.u32 %v1393, 2147483648
      %v1712 = vxor.u32 %v1395, 2147483648
      %v1713 = vxor.u32 %v1397, 2147483648
      %v1714 = vxor.u32 %v1399, 2147483648
      %v1715 = vxor.u32 %v1403, 2147483648
      %v1716 = vxor.u32 %v1405, 2147483648
      %v1717 = vxor.u32 %v1407, 2147483648
      %v1718 = vxor.u32 %v1409, 2147483648
      %v1719 = vxor.u32 %v1413, 2147483648
      %v1720 = vxor.u32 %v1415, 2147483648
      %v1721 = vxor.u32 %v1417, 2147483648
      %v1722 = vxor.u32 %v1419, 2147483648
      %v1723 = vxor.u32 %v1423, 2147483648
      %v1724 = vxor.u32 %v1425, 2147483648
      %v1725 = vxor.u32 %v1427, 2147483648
      %v1726 = vxor.u32 %v1429, 2147483648
      %v1727 = vxor.u32 %v1433, 2147483648
      %v1728 = vxor.u32 %v1435, 2147483648
      %v1729 = vxor.u32 %v1437, 2147483648
      %v1730 = vxor.u32 %v1439, 2147483648
      %v1731 = vxor.u32 %v1443, 2147483648
      %v1732 = vxor.u32 %v1445, 2147483648
      %v1733 = vxor.u32 %v1447, 2147483648
      %v1734 = vxor.u32 %v1449, 2147483648
      %v1735 = vxor.u32 %v1453, 2147483648
      %v1736 = vxor.u32 %v1455, 2147483648
      %v1737 = vxor.u32 %v1457, 2147483648
      %v1738 = vxor.u32 %v1459, 2147483648
      %v1739 = vxor.u32 %v1463, 2147483648
      %v1740 = vxor.u32 %v1465, 2147483648
      %v1741 = vxor.u32 %v1467, 2147483648
      %v1742 = vxor.u32 %v1469, 2147483648
      %v1743 = vxor.u32 %v1473, 2147483648
      %v1744 = vxor.u32 %v1475, 2147483648
      %v1745 = vxor.u32 %v1477, 2147483648
      %v1746 = vxor.u32 %v1479, 2147483648
      %v1747 = vxor.u32 %v1483, 2147483648
      %v1748 = vxor.u32 %v1485, 2147483648
      %v1749 = vxor.u32 %v1487, 2147483648
      %v1750 = vxor.u32 %v1489, 2147483648
      %v1751 = vxor.u32 %v1493, 2147483648
      %v1752 = vxor.u32 %v1495, 2147483648
      %v1753 = vxor.u32 %v1497, 2147483648
      %v1754 = vxor.u32 %v1499, 2147483648
      %v1755 = vxor.u32 %v1503, 2147483648
      %v1756 = vxor.u32 %v1505, 2147483648
      %v1757 = vxor.u32 %v1507, 2147483648
      %v1758 = vxor.u32 %v1509, 2147483648
      %v1759 = vxor.u32 %v1513, 2147483648
      %v1760 = vxor.u32 %v1515, 2147483648
      %v1761 = vxor.u32 %v1517, 2147483648
      %v1762 = vxor.u32 %v1519, 2147483648
      %v1763 = vxor.u32 %v1523, 2147483648
      %v1764 = vxor.u32 %v1525, 2147483648
      %v1765 = vxor.u32 %v1527, 2147483648
      %v1766 = vxor.u32 %v1529, 2147483648
      %v1767 = vxor.u32 %v1533, 2147483648
      %v1768 = vxor.u32 %v1535, 2147483648
      %v1769 = vxor.u32 %v1537, 2147483648
      %v1770 = vxor.u32 %v1539, 2147483648
      %v1771 = vxor.u32 %v1543, 2147483648
      %v1772 = vxor.u32 %v1545, 2147483648
      %v1773 = vxor.u32 %v1547, 2147483648
      %v1774 = vxor.u32 %v1549, 2147483648
      %v1775 = vxor.u32 %v1553, 2147483648
      %v1776 = vxor.u32 %v1555, 2147483648
      %v1777 = vxor.u32 %v1557, 2147483648
      %v1778 = vxor.u32 %v1559, 2147483648
      %v1779 = vxor.u32 %v1563, 2147483648
      %v1780 = vxor.u32 %v1565, 2147483648
      %v1781 = vxor.u32 %v1567, 2147483648
      %v1782 = vxor.u32 %v1569, 2147483648
      %v1783 = vxor.u32 %v1573, 2147483648
      %v1784 = vxor.u32 %v1575, 2147483648
      %v1785 = vxor.u32 %v1577, 2147483648
      %v1786 = vxor.u32 %v1579, 2147483648
      %v1787 = vxor.u32 %v1583, 2147483648
      %v1788 = vxor.u32 %v1585, 2147483648
      %v1789 = vxor.u32 %v1587, 2147483648
      %v1790 = vxor.u32 %v1589, 2147483648
      %v1791 = vxor.u32 %v1593, 2147483648
      %v1792 = vxor.u32 %v1595, 2147483648
      %v1793 = vxor.u32 %v1597, 2147483648
      %v1794 = vxor.u32 %v1599, 2147483648
      %v1795 = vxor.u32 %v1603, 2147483648
      %v1796 = vxor.u32 %v1605, 2147483648
      %v1797 = vxor.u32 %v1607, 2147483648
      %v1798 = vxor.u32 %v1609, 2147483648
      %v1799 = vxor.u32 %v1613, 2147483648
      %v1800 = vxor.u32 %v1615, 2147483648
      %v1801 = vxor.u32 %v1617, 2147483648
      %v1802 = vxor.u32 %v1619, 2147483648
      %v1803 = vxor.u32 %v1623, 2147483648
      %v1804 = vxor.u32 %v1625, 2147483648
      %v1805 = vxor.u32 %v1627, 2147483648
      %v1806 = vxor.u32 %v1629, 2147483648
      %v1807 = vxor.u32 %v1633, 2147483648
      %v1808 = vxor.u32 %v1635, 2147483648
      %v1809 = vxor.u32 %v1637, 2147483648
      %v1810 = vxor.u32 %v1639, 2147483648
      %v1811 = vxor.u32 %v1643, 2147483648
      %v1812 = vxor.u32 %v1645, 2147483648
      %v1813 = vxor.u32 %v1647, 2147483648
      %v1814 = vxor.u32 %v1649, 2147483648
      %v1815 = vxor.u32 %v1653, 2147483648
      %v1816 = vxor.u32 %v1655, 2147483648
      %v1817 = vxor.u32 %v1657, 2147483648
      %v1818 = vxor.u32 %v1659, 2147483648
      %v1819 = vxor.u32 %v1663, 2147483648
      %v1820 = vxor.u32 %v1665, 2147483648
      %v1821 = vxor.u32 %v1667, 2147483648
      %v1822 = vxor.u32 %v1669, 2147483648
      %v1823 = vxor.u32 %v1673, 2147483648
      %v1824 = vxor.u32 %v1675, 2147483648
      %v1825 = vxor.u32 %v1677, 2147483648
      %v1826 = vxor.u32 %v1679, 2147483648
      %v1827 = vxor.u32 %v1683, 2147483648
      %v1828 = vxor.u32 %v1685, 2147483648
      %v1829 = vxor.u32 %v1687, 2147483648
      %v1830 = vxor.u32 %v1689, 2147483648
      %v1831 = vxor.u32 %v1693, 2147483648
      %v1832 = vxor.u32 %v1695, 2147483648
      %v1833 = vxor.u32 %v1697, 2147483648
      %v1834 = vxor.u32 %v1699, 2147483648
      %v1835 = vxor.u32 %v1703, 2147483648
      %v1836 = vxor.u32 %v1705, 2147483648
      %v1837 = vxor.u32 %v1707, 2147483648
      %v1838 = vxor.u32 %v1709, 2147483648
      %v1839 = vmul.f32 %v1711, 1.442695
      %v1840 = vpow.pop %v1839
      %v1841 = vmul.f32 %v1712, 1.442695
      %v1842 = vpow.pop %v1841
      %v1843 = vmul.f32 %v1713, 1.442695
      %v1844 = vpow.pop %v1843
      %v1845 = vmul.f32 %v1714, 1.442695
      %v1846 = vpow.pop %v1845
      %v1847 = vmul.f32 %v1715, 1.442695
      %v1848 = vpow.pop %v1847
      %v1849 = vmul.f32 %v1716, 1.442695
      %v1850 = vpow.pop %v1849
      %v1851 = vmul.f32 %v1717, 1.442695
      %v1852 = vpow.pop %v1851
      %v1853 = vmul.f32 %v1718, 1.442695
      %v1854 = vpow.pop %v1853
      %v1855 = vmul.f32 %v1719, 1.442695
      %v1856 = vpow.pop %v1855
      %v1857 = vmul.f32 %v1720, 1.442695
      %v1858 = vpow.pop %v1857
      %v1859 = vmul.f32 %v1721, 1.442695
      %v1860 = vpow.pop %v1859
      %v1861 = vmul.f32 %v1722, 1.442695
      %v1862 = vpow.pop %v1861
      %v1863 = vmul.f32 %v1723, 1.442695
      %v1864 = vpow.pop %v1863
      %v1865 = vmul.f32 %v1724, 1.442695
      %v1866 = vpow.pop %v1865
      %v1867 = vmul.f32 %v1725, 1.442695
      %v1868 = vpow.pop %v1867
      %v1869 = vmul.f32 %v1726, 1.442695
      %v1870 = vpow.pop %v1869
      %v1871 = vmul.f32 %v1727, 1.442695
      %v1872 = vpow.pop %v1871
      %v1873 = vmul.f32 %v1728, 1.442695
      %v1874 = vpow.pop %v1873
      %v1875 = vmul.f32 %v1729, 1.442695
      %v1876 = vpow.pop %v1875
      %v1877 = vmul.f32 %v1730, 1.442695
      %v1878 = vpow.pop %v1877
      %v1879 = vmul.f32 %v1731, 1.442695
      %v1880 = vpow.pop %v1879
      %v1881 = vmul.f32 %v1732, 1.442695
      %v1882 = vpow.pop %v1881
      %v1883 = vmul.f32 %v1733, 1.442695
      %v1884 = vpow.pop %v1883
      %v1885 = vmul.f32 %v1734, 1.442695
      %v1886 = vpow.pop %v1885
      %v1887 = vmul.f32 %v1735, 1.442695
      %v1888 = vpow.pop %v1887
      %v1889 = vmul.f32 %v1736, 1.442695
      %v1890 = vpow.pop %v1889
      %v1891 = vmul.f32 %v1737, 1.442695
      %v1892 = vpow.pop %v1891
      %v1893 = vmul.f32 %v1738, 1.442695
      %v1894 = vpow.pop %v1893
      %v1895 = vmul.f32 %v1739, 1.442695
      %v1896 = vpow.pop %v1895
      %v1897 = vmul.f32 %v1740, 1.442695
      %v1898 = vpow.pop %v1897
      %v1899 = vmul.f32 %v1741, 1.442695
      %v1900 = vpow.pop %v1899
      %v1901 = vmul.f32 %v1742, 1.442695
      %v1902 = vpow.pop %v1901
      %v1903 = vmul.f32 %v1743, 1.442695
      %v1904 = vpow.pop %v1903
      %v1905 = vmul.f32 %v1744, 1.442695
      %v1906 = vpow.pop %v1905
      %v1907 = vmul.f32 %v1745, 1.442695
      %v1908 = vpow.pop %v1907
      %v1909 = vmul.f32 %v1746, 1.442695
      %v1910 = vpow.pop %v1909
      %v1911 = vmul.f32 %v1747, 1.442695
      %v1912 = vpow.pop %v1911
      %v1913 = vmul.f32 %v1748, 1.442695
      %v1914 = vpow.pop %v1913
      %v1915 = vmul.f32 %v1749, 1.442695
      %v1916 = vpow.pop %v1915
      %v1917 = vmul.f32 %v1750, 1.442695
      %v1918 = vpow.pop %v1917
      %v1919 = vmul.f32 %v1751, 1.442695
      %v1920 = vpow.pop %v1919
      %v1921 = vmul.f32 %v1752, 1.442695
      %v1922 = vpow.pop %v1921
      %v1923 = vmul.f32 %v1753, 1.442695
      %v1924 = vpow.pop %v1923
      %v1925 = vmul.f32 %v1754, 1.442695
      %v1926 = vpow.pop %v1925
      %v1927 = vmul.f32 %v1755, 1.442695
      %v1928 = vpow.pop %v1927
      %v1929 = vmul.f32 %v1756, 1.442695
      %v1930 = vpow.pop %v1929
      %v1931 = vmul.f32 %v1757, 1.442695
      %v1932 = vpow.pop %v1931
      %v1933 = vmul.f32 %v1758, 1.442695
      %v1934 = vpow.pop %v1933
      %v1935 = vmul.f32 %v1759, 1.442695
      %v1936 = vpow.pop %v1935
      %v1937 = vmul.f32 %v1760, 1.442695
      %v1938 = vpow.pop %v1937
      %v1939 = vmul.f32 %v1761, 1.442695
      %v1940 = vpow.pop %v1939
      %v1941 = vmul.f32 %v1762, 1.442695
      %v1942 = vpow.pop %v1941
      %v1943 = vmul.f32 %v1763, 1.442695
      %v1944 = vpow.pop %v1943
      %v1945 = vmul.f32 %v1764, 1.442695
      %v1946 = vpow.pop %v1945
      %v1947 = vmul.f32 %v1765, 1.442695
      %v1948 = vpow.pop %v1947
      %v1949 = vmul.f32 %v1766, 1.442695
      %v1950 = vpow.pop %v1949
      %v1951 = vmul.f32 %v1767, 1.442695
      %v1952 = vpow.pop %v1951
      %v1953 = vmul.f32 %v1768, 1.442695
      %v1954 = vpow.pop %v1953
      %v1955 = vmul.f32 %v1769, 1.442695
      %v1956 = vpow.pop %v1955
      %v1957 = vmul.f32 %v1770, 1.442695
      %v1958 = vpow.pop %v1957
      %v1959 = vmul.f32 %v1771, 1.442695
      %v1960 = vpow.pop %v1959
      %v1961 = vmul.f32 %v1772, 1.442695
      %v1962 = vpow.pop %v1961
      %v1963 = vmul.f32 %v1773, 1.442695
      %v1964 = vpow.pop %v1963
      %v1965 = vmul.f32 %v1774, 1.442695
      %v1966 = vpow.pop %v1965
      %v1967 = vmul.f32 %v1775, 1.442695
      %v1968 = vpow.pop %v1967
      %v1969 = vmul.f32 %v1776, 1.442695
      %v1970 = vpow.pop %v1969
      %v1971 = vmul.f32 %v1777, 1.442695
      %v1972 = vpow.pop %v1971
      %v1973 = vmul.f32 %v1778, 1.442695
      %v1974 = vpow.pop %v1973
      %v1975 = vmul.f32 %v1779, 1.442695
      %v1976 = vpow.pop %v1975
      %v1977 = vmul.f32 %v1780, 1.442695
      %v1978 = vpow.pop %v1977
      %v1979 = vmul.f32 %v1781, 1.442695
      %v1980 = vpow.pop %v1979
      %v1981 = vmul.f32 %v1782, 1.442695
      %v1982 = vpow.pop %v1981
      %v1983 = vmul.f32 %v1783, 1.442695
      %v1984 = vpow.pop %v1983
      %v1985 = vmul.f32 %v1784, 1.442695
      %v1986 = vpow.pop %v1985
      %v1987 = vmul.f32 %v1785, 1.442695
      %v1988 = vpow.pop %v1987
      %v1989 = vmul.f32 %v1786, 1.442695
      %v1990 = vpow.pop %v1989
      %v1991 = vmul.f32 %v1787, 1.442695
      %v1992 = vpow.pop %v1991
      %v1993 = vmul.f32 %v1788, 1.442695
      %v1994 = vpow.pop %v1993
      %v1995 = vmul.f32 %v1789, 1.442695
      %v1996 = vpow.pop %v1995
      %v1997 = vmul.f32 %v1790, 1.442695
      %v1998 = vpow.pop %v1997
      %v1999 = vmul.f32 %v1791, 1.442695
      %v2000 = vpow.pop %v1999
      %v2001 = vmul.f32 %v1792, 1.442695
      %v2002 = vpow.pop %v2001
      %v2003 = vmul.f32 %v1793, 1.442695
      %v2004 = vpow.pop %v2003
      %v2005 = vmul.f32 %v1794, 1.442695
      %v2006 = vpow.pop %v2005
      %v2007 = vmul.f32 %v1795, 1.442695
      %v2008 = vpow.pop %v2007
      %v2009 = vmul.f32 %v1796, 1.442695
      %v2010 = vpow.pop %v2009
      %v2011 = vmul.f32 %v1797, 1.442695
      %v2012 = vpow.pop %v2011
      %v2013 = vmul.f32 %v1798, 1.442695
      %v2014 = vpow.pop %v2013
      %v2015 = vmul.f32 %v1799, 1.442695
      %v2016 = vpow.pop %v2015
      %v2017 = vmul.f32 %v1800, 1.442695
      %v2018 = vpow.pop %v2017
      %v2019 = vmul.f32 %v1801, 1.442695
      %v2020 = vpow.pop %v2019
      %v2021 = vmul.f32 %v1802, 1.442695
      %v2022 = vpow.pop %v2021
      %v2023 = vmul.f32 %v1803, 1.442695
      %v2024 = vpow.pop %v2023
      %v2025 = vmul.f32 %v1804, 1.442695
      %v2026 = vpow.pop %v2025
      %v2027 = vmul.f32 %v1805, 1.442695
      %v2028 = vpow.pop %v2027
      %v2029 = vmul.f32 %v1806, 1.442695
      %v2030 = vpow.pop %v2029
      %v2031 = vmul.f32 %v1807, 1.442695
      %v2032 = vpow.pop %v2031
      %v2033 = vmul.f32 %v1808, 1.442695
      %v2034 = vpow.pop %v2033
      %v2035 = vmul.f32 %v1809, 1.442695
      %v2036 = vpow.pop %v2035
      %v2037 = vmul.f32 %v1810, 1.442695
      %v2038 = vpow.pop %v2037
      %v2039 = vmul.f32 %v1811, 1.442695
      %v2040 = vpow.pop %v2039
      %v2041 = vmul.f32 %v1812, 1.442695
      %v2042 = vpow.pop %v2041
      %v2043 = vmul.f32 %v1813, 1.442695
      %v2044 = vpow.pop %v2043
      %v2045 = vmul.f32 %v1814, 1.442695
      %v2046 = vpow.pop %v2045
      %v2047 = vmul.f32 %v1815, 1.442695
      %v2048 = vpow.pop %v2047
      %v2049 = vmul.f32 %v1816, 1.442695
      %v2050 = vpow.pop %v2049
      %v2051 = vmul.f32 %v1817, 1.442695
      %v2052 = vpow.pop %v2051
      %v2053 = vmul.f32 %v1818, 1.442695
      %v2054 = vpow.pop %v2053
      %v2055 = vmul.f32 %v1819, 1.442695
      %v2056 = vpow.pop %v2055
      %v2057 = vmul.f32 %v1820, 1.442695
      %v2058 = vpow.pop %v2057
      %v2059 = vmul.f32 %v1821, 1.442695
      %v2060 = vpow.pop %v2059
      %v2061 = vmul.f32 %v1822, 1.442695
      %v2062 = vpow.pop %v2061
      %v2063 = vmul.f32 %v1823, 1.442695
      %v2064 = vpow.pop %v2063
      %v2065 = vmul.f32 %v1824, 1.442695
      %v2066 = vpow.pop %v2065
      %v2067 = vmul.f32 %v1825, 1.442695
      %v2068 = vpow.pop %v2067
      %v2069 = vmul.f32 %v1826, 1.442695
      %v2070 = vpow.pop %v2069
      %v2071 = vmul.f32 %v1827, 1.442695
      %v2072 = vpow.pop %v2071
      %v2073 = vmul.f32 %v1828, 1.442695
      %v2074 = vpow.pop %v2073
      %v2075 = vmul.f32 %v1829, 1.442695
      %v2076 = vpow.pop %v2075
      %v2077 = vmul.f32 %v1830, 1.442695
      %v2078 = vpow.pop %v2077
      %v2079 = vmul.f32 %v1831, 1.442695
      %v2080 = vpow.pop %v2079
      %v2081 = vmul.f32 %v1832, 1.442695
      %v2082 = vpow.pop %v2081
      %v2083 = vmul.f32 %v1833, 1.442695
      %v2084 = vpow.pop %v2083
      %v2085 = vmul.f32 %v1834, 1.442695
      %v2086 = vpow.pop %v2085
      %v2087 = vmul.f32 %v1835, 1.442695
      %v2088 = vpow.pop %v2087
      %v2089 = vmul.f32 %v1836, 1.442695
      %v2090 = vpow.pop %v2089
      %v2091 = vmul.f32 %v1837, 1.442695
      %v2092 = vpow.pop %v2091
      %v2093 = vmul.f32 %v1838, 1.442695
      %v2094 = vpow.pop %v2093
      %v2095 = vadd.f32 %v1840, 1.0
      %v2096 = vadd.f32 %v1842, 1.0
      %v2097 = vadd.f32 %v1844, 1.0
      %v2098 = vadd.f32 %v1846, 1.0
      %v2099 = vadd.f32 %v1848, 1.0
      %v2100 = vadd.f32 %v1850, 1.0
      %v2101 = vadd.f32 %v1852, 1.0
      %v2102 = vadd.f32 %v1854, 1.0
      %v2103 = vadd.f32 %v1856, 1.0
      %v2104 = vadd.f32 %v1858, 1.0
      %v2105 = vadd.f32 %v1860, 1.0
      %v2106 = vadd.f32 %v1862, 1.0
      %v2107 = vadd.f32 %v1864, 1.0
      %v2108 = vadd.f32 %v1866, 1.0
      %v2109 = vadd.f32 %v1868, 1.0
      %v2110 = vadd.f32 %v1870, 1.0
      %v2111 = vadd.f32 %v1872, 1.0
      %v2112 = vadd.f32 %v1874, 1.0
      %v2113 = vadd.f32 %v1876, 1.0
      %v2114 = vadd.f32 %v1878, 1.0
      %v2115 = vadd.f32 %v1880, 1.0
      %v2116 = vadd.f32 %v1882, 1.0
      %v2117 = vadd.f32 %v1884, 1.0
      %v2118 = vadd.f32 %v1886, 1.0
      %v2119 = vadd.f32 %v1888, 1.0
      %v2120 = vadd.f32 %v1890, 1.0
      %v2121 = vadd.f32 %v1892, 1.0
      %v2122 = vadd.f32 %v1894, 1.0
      %v2123 = vadd.f32 %v1896, 1.0
      %v2124 = vadd.f32 %v1898, 1.0
      %v2125 = vadd.f32 %v1900, 1.0
      %v2126 = vadd.f32 %v1902, 1.0
      %v2127 = vadd.f32 %v1904, 1.0
      %v2128 = vadd.f32 %v1906, 1.0
      %v2129 = vadd.f32 %v1908, 1.0
      %v2130 = vadd.f32 %v1910, 1.0
      %v2131 = vadd.f32 %v1912, 1.0
      %v2132 = vadd.f32 %v1914, 1.0
      %v2133 = vadd.f32 %v1916, 1.0
      %v2134 = vadd.f32 %v1918, 1.0
      %v2135 = vadd.f32 %v1920, 1.0
      %v2136 = vadd.f32 %v1922, 1.0
      %v2137 = vadd.f32 %v1924, 1.0
      %v2138 = vadd.f32 %v1926, 1.0
      %v2139 = vadd.f32 %v1928, 1.0
      %v2140 = vadd.f32 %v1930, 1.0
      %v2141 = vadd.f32 %v1932, 1.0
      %v2142 = vadd.f32 %v1934, 1.0
      %v2143 = vadd.f32 %v1936, 1.0
      %v2144 = vadd.f32 %v1938, 1.0
      %v2145 = vadd.f32 %v1940, 1.0
      %v2146 = vadd.f32 %v1942, 1.0
      %v2147 = vadd.f32 %v1944, 1.0
      %v2148 = vadd.f32 %v1946, 1.0
      %v2149 = vadd.f32 %v1948, 1.0
      %v2150 = vadd.f32 %v1950, 1.0
      %v2151 = vadd.f32 %v1952, 1.0
      %v2152 = vadd.f32 %v1954, 1.0
      %v2153 = vadd.f32 %v1956, 1.0
      %v2154 = vadd.f32 %v1958, 1.0
      %v2155 = vadd.f32 %v1960, 1.0
      %v2156 = vadd.f32 %v1962, 1.0
      %v2157 = vadd.f32 %v1964, 1.0
      %v2158 = vadd.f32 %v1966, 1.0
      %v2159 = vadd.f32 %v1968, 1.0
      %v2160 = vadd.f32 %v1970, 1.0
      %v2161 = vadd.f32 %v1972, 1.0
      %v2162 = vadd.f32 %v1974, 1.0
      %v2163 = vadd.f32 %v1976, 1.0
      %v2164 = vadd.f32 %v1978, 1.0
      %v2165 = vadd.f32 %v1980, 1.0
      %v2166 = vadd.f32 %v1982, 1.0
      %v2167 = vadd.f32 %v1984, 1.0
      %v2168 = vadd.f32 %v1986, 1.0
      %v2169 = vadd.f32 %v1988, 1.0
      %v2170 = vadd.f32 %v1990, 1.0
      %v2171 = vadd.f32 %v1992, 1.0
      %v2172 = vadd.f32 %v1994, 1.0
      %v2173 = vadd.f32 %v1996, 1.0
      %v2174 = vadd.f32 %v1998, 1.0
      %v2175 = vadd.f32 %v2000, 1.0
      %v2176 = vadd.f32 %v2002, 1.0
      %v2177 = vadd.f32 %v2004, 1.0
      %v2178 = vadd.f32 %v2006, 1.0
      %v2179 = vadd.f32 %v2008, 1.0
      %v2180 = vadd.f32 %v2010, 1.0
      %v2181 = vadd.f32 %v2012, 1.0
      %v2182 = vadd.f32 %v2014, 1.0
      %v2183 = vadd.f32 %v2016, 1.0
      %v2184 = vadd.f32 %v2018, 1.0
      %v2185 = vadd.f32 %v2020, 1.0
      %v2186 = vadd.f32 %v2022, 1.0
      %v2187 = vadd.f32 %v2024, 1.0
      %v2188 = vadd.f32 %v2026, 1.0
      %v2189 = vadd.f32 %v2028, 1.0
      %v2190 = vadd.f32 %v2030, 1.0
      %v2191 = vadd.f32 %v2032, 1.0
      %v2192 = vadd.f32 %v2034, 1.0
      %v2193 = vadd.f32 %v2036, 1.0
      %v2194 = vadd.f32 %v2038, 1.0
      %v2195 = vadd.f32 %v2040, 1.0
      %v2196 = vadd.f32 %v2042, 1.0
      %v2197 = vadd.f32 %v2044, 1.0
      %v2198 = vadd.f32 %v2046, 1.0
      %v2199 = vadd.f32 %v2048, 1.0
      %v2200 = vadd.f32 %v2050, 1.0
      %v2201 = vadd.f32 %v2052, 1.0
      %v2202 = vadd.f32 %v2054, 1.0
      %v2203 = vadd.f32 %v2056, 1.0
      %v2204 = vadd.f32 %v2058, 1.0
      %v2205 = vadd.f32 %v2060, 1.0
      %v2206 = vadd.f32 %v2062, 1.0
      %v2207 = vadd.f32 %v2064, 1.0
      %v2208 = vadd.f32 %v2066, 1.0
      %v2209 = vadd.f32 %v2068, 1.0
      %v2210 = vadd.f32 %v2070, 1.0
      %v2211 = vadd.f32 %v2072, 1.0
      %v2212 = vadd.f32 %v2074, 1.0
      %v2213 = vadd.f32 %v2076, 1.0
      %v2214 = vadd.f32 %v2078, 1.0
      %v2215 = vadd.f32 %v2080, 1.0
      %v2216 = vadd.f32 %v2082, 1.0
      %v2217 = vadd.f32 %v2084, 1.0
      %v2218 = vadd.f32 %v2086, 1.0
      %v2219 = vadd.f32 %v2088, 1.0
      %v2220 = vadd.f32 %v2090, 1.0
      %v2221 = vadd.f32 %v2092, 1.0
      %v2222 = vadd.f32 %v2094, 1.0
      %v2223 = vrcp.pop %v2095
      %v2224 = vmul.f32 1.0, %v2223
      %v2225 = vrcp.pop %v2096
      %v2226 = vmul.f32 1.0, %v2225
      %v2227 = vrcp.pop %v2097
      %v2228 = vmul.f32 1.0, %v2227
      %v2229 = vrcp.pop %v2098
      %v2230 = vmul.f32 1.0, %v2229
      %v2231 = vrcp.pop %v2099
      %v2232 = vmul.f32 1.0, %v2231
      %v2233 = vrcp.pop %v2100
      %v2234 = vmul.f32 1.0, %v2233
      %v2235 = vrcp.pop %v2101
      %v2236 = vmul.f32 1.0, %v2235
      %v2237 = vrcp.pop %v2102
      %v2238 = vmul.f32 1.0, %v2237
      %v2239 = vrcp.pop %v2103
      %v2240 = vmul.f32 1.0, %v2239
      %v2241 = vrcp.pop %v2104
      %v2242 = vmul.f32 1.0, %v2241
      %v2243 = vrcp.pop %v2105
      %v2244 = vmul.f32 1.0, %v2243
      %v2245 = vrcp.pop %v2106
      %v2246 = vmul.f32 1.0, %v2245
      %v2247 = vrcp.pop %v2107
      %v2248 = vmul.f32 1.0, %v2247
      %v2249 = vrcp.pop %v2108
      %v2250 = vmul.f32 1.0, %v2249
      %v2251 = vrcp.pop %v2109
      %v2252 = vmul.f32 1.0, %v2251
      %v2253 = vrcp.pop %v2110
      %v2254 = vmul.f32 1.0, %v2253
      %v2255 = vrcp.pop %v2111
      %v2256 = vmul.f32 1.0, %v2255
      %v2257 = vrcp.pop %v2112
      %v2258 = vmul.f32 1.0, %v2257
      %v2259 = vrcp.pop %v2113
      %v2260 = vmul.f32 1.0, %v2259
      %v2261 = vrcp.pop %v2114
      %v2262 = vmul.f32 1.0, %v2261
      %v2263 = vrcp.pop %v2115
      %v2264 = vmul.f32 1.0, %v2263
      %v2265 = vrcp.pop %v2116
      %v2266 = vmul.f32 1.0, %v2265
      %v2267 = vrcp.pop %v2117
      %v2268 = vmul.f32 1.0, %v2267
      %v2269 = vrcp.pop %v2118
      %v2270 = vmul.f32 1.0, %v2269
      %v2271 = vrcp.pop %v2119
      %v2272 = vmul.f32 1.0, %v2271
      %v2273 = vrcp.pop %v2120
      %v2274 = vmul.f32 1.0, %v2273
      %v2275 = vrcp.pop %v2121
      %v2276 = vmul.f32 1.0, %v2275
      %v2277 = vrcp.pop %v2122
      %v2278 = vmul.f32 1.0, %v2277
      %v2279 = vrcp.pop %v2123
      %v2280 = vmul.f32 1.0, %v2279
      %v2281 = vrcp.pop %v2124
      %v2282 = vmul.f32 1.0, %v2281
      %v2283 = vrcp.pop %v2125
      %v2284 = vmul.f32 1.0, %v2283
      %v2285 = vrcp.pop %v2126
      %v2286 = vmul.f32 1.0, %v2285
      %v2287 = vrcp.pop %v2127
      %v2288 = vmul.f32 1.0, %v2287
      %v2289 = vrcp.pop %v2128
      %v2290 = vmul.f32 1.0, %v2289
      %v2291 = vrcp.pop %v2129
      %v2292 = vmul.f32 1.0, %v2291
      %v2293 = vrcp.pop %v2130
      %v2294 = vmul.f32 1.0, %v2293
      %v2295 = vrcp.pop %v2131
      %v2296 = vmul.f32 1.0, %v2295
      %v2297 = vrcp.pop %v2132
      %v2298 = vmul.f32 1.0, %v2297
      %v2299 = vrcp.pop %v2133
      %v2300 = vmul.f32 1.0, %v2299
      %v2301 = vrcp.pop %v2134
      %v2302 = vmul.f32 1.0, %v2301
      %v2303 = vrcp.pop %v2135
      %v2304 = vmul.f32 1.0, %v2303
      %v2305 = vrcp.pop %v2136
      %v2306 = vmul.f32 1.0, %v2305
      %v2307 = vrcp.pop %v2137
      %v2308 = vmul.f32 1.0, %v2307
      %v2309 = vrcp.pop %v2138
      %v2310 = vmul.f32 1.0, %v2309
      %v2311 = vrcp.pop %v2139
      %v2312 = vmul.f32 1.0, %v2311
      %v2313 = vrcp.pop %v2140
      %v2314 = vmul.f32 1.0, %v2313
      %v2315 = vrcp.pop %v2141
      %v2316 = vmul.f32 1.0, %v2315
      %v2317 = vrcp.pop %v2142
      %v2318 = vmul.f32 1.0, %v2317
      %v2319 = vrcp.pop %v2143
      %v2320 = vmul.f32 1.0, %v2319
      %v2321 = vrcp.pop %v2144
      %v2322 = vmul.f32 1.0, %v2321
      %v2323 = vrcp.pop %v2145
      %v2324 = vmul.f32 1.0, %v2323
      %v2325 = vrcp.pop %v2146
      %v2326 = vmul.f32 1.0, %v2325
      %v2327 = vrcp.pop %v2147
      %v2328 = vmul.f32 1.0, %v2327
      %v2329 = vrcp.pop %v2148
      %v2330 = vmul.f32 1.0, %v2329
      %v2331 = vrcp.pop %v2149
      %v2332 = vmul.f32 1.0, %v2331
      %v2333 = vrcp.pop %v2150
      %v2334 = vmul.f32 1.0, %v2333
      %v2335 = vrcp.pop %v2151
      %v2336 = vmul.f32 1.0, %v2335
      %v2337 = vrcp.pop %v2152
      %v2338 = vmul.f32 1.0, %v2337
      %v2339 = vrcp.pop %v2153
      %v2340 = vmul.f32 1.0, %v2339
      %v2341 = vrcp.pop %v2154
      %v2342 = vmul.f32 1.0, %v2341
      %v2343 = vrcp.pop %v2155
      %v2344 = vmul.f32 1.0, %v2343
      %v2345 = vrcp.pop %v2156
      %v2346 = vmul.f32 1.0, %v2345
      %v2347 = vrcp.pop %v2157
      %v2348 = vmul.f32 1.0, %v2347
      %v2349 = vrcp.pop %v2158
      %v2350 = vmul.f32 1.0, %v2349
      %v2351 = vrcp.pop %v2159
      %v2352 = vmul.f32 1.0, %v2351
      %v2353 = vrcp.pop %v2160
      %v2354 = vmul.f32 1.0, %v2353
      %v2355 = vrcp.pop %v2161
      %v2356 = vmul.f32 1.0, %v2355
      %v2357 = vrcp.pop %v2162
      %v2358 = vmul.f32 1.0, %v2357
      %v2359 = vrcp.pop %v2163
      %v2360 = vmul.f32 1.0, %v2359
      %v2361 = vrcp.pop %v2164
      %v2362 = vmul.f32 1.0, %v2361
      %v2363 = vrcp.pop %v2165
      %v2364 = vmul.f32 1.0, %v2363
      %v2365 = vrcp.pop %v2166
      %v2366 = vmul.f32 1.0, %v2365
      %v2367 = vrcp.pop %v2167
      %v2368 = vmul.f32 1.0, %v2367
      %v2369 = vrcp.pop %v2168
      %v2370 = vmul.f32 1.0, %v2369
      %v2371 = vrcp.pop %v2169
      %v2372 = vmul.f32 1.0, %v2371
      %v2373 = vrcp.pop %v2170
      %v2374 = vmul.f32 1.0, %v2373
      %v2375 = vrcp.pop %v2171
      %v2376 = vmul.f32 1.0, %v2375
      %v2377 = vrcp.pop %v2172
      %v2378 = vmul.f32 1.0, %v2377
      %v2379 = vrcp.pop %v2173
      %v2380 = vmul.f32 1.0, %v2379
      %v2381 = vrcp.pop %v2174
      %v2382 = vmul.f32 1.0, %v2381
      %v2383 = vrcp.pop %v2175
      %v2384 = vmul.f32 1.0, %v2383
      %v2385 = vrcp.pop %v2176
      %v2386 = vmul.f32 1.0, %v2385
      %v2387 = vrcp.pop %v2177
      %v2388 = vmul.f32 1.0, %v2387
      %v2389 = vrcp.pop %v2178
      %v2390 = vmul.f32 1.0, %v2389
      %v2391 = vrcp.pop %v2179
      %v2392 = vmul.f32 1.0, %v2391
      %v2393 = vrcp.pop %v2180
      %v2394 = vmul.f32 1.0, %v2393
      %v2395 = vrcp.pop %v2181
      %v2396 = vmul.f32 1.0, %v2395
      %v2397 = vrcp.pop %v2182
      %v2398 = vmul.f32 1.0, %v2397
      %v2399 = vrcp.pop %v2183
      %v2400 = vmul.f32 1.0, %v2399
      %v2401 = vrcp.pop %v2184
      %v2402 = vmul.f32 1.0, %v2401
      %v2403 = vrcp.pop %v2185
      %v2404 = vmul.f32 1.0, %v2403
      %v2405 = vrcp.pop %v2186
      %v2406 = vmul.f32 1.0, %v2405
      %v2407 = vrcp.pop %v2187
      %v2408 = vmul.f32 1.0, %v2407
      %v2409 = vrcp.pop %v2188
      %v2410 = vmul.f32 1.0, %v2409
      %v2411 = vrcp.pop %v2189
      %v2412 = vmul.f32 1.0, %v2411
      %v2413 = vrcp.pop %v2190
      %v2414 = vmul.f32 1.0, %v2413
      %v2415 = vrcp.pop %v2191
      %v2416 = vmul.f32 1.0, %v2415
      %v2417 = vrcp.pop %v2192
      %v2418 = vmul.f32 1.0, %v2417
      %v2419 = vrcp.pop %v2193
      %v2420 = vmul.f32 1.0, %v2419
      %v2421 = vrcp.pop %v2194
      %v2422 = vmul.f32 1.0, %v2421
      %v2423 = vrcp.pop %v2195
      %v2424 = vmul.f32 1.0, %v2423
      %v2425 = vrcp.pop %v2196
      %v2426 = vmul.f32 1.0, %v2425
      %v2427 = vrcp.pop %v2197
      %v2428 = vmul.f32 1.0, %v2427
      %v2429 = vrcp.pop %v2198
      %v2430 = vmul.f32 1.0, %v2429
      %v2431 = vrcp.pop %v2199
      %v2432 = vmul.f32 1.0, %v2431
      %v2433 = vrcp.pop %v2200
      %v2434 = vmul.f32 1.0, %v2433
      %v2435 = vrcp.pop %v2201
      %v2436 = vmul.f32 1.0, %v2435
      %v2437 = vrcp.pop %v2202
      %v2438 = vmul.f32 1.0, %v2437
      %v2439 = vrcp.pop %v2203
      %v2440 = vmul.f32 1.0, %v2439
      %v2441 = vrcp.pop %v2204
      %v2442 = vmul.f32 1.0, %v2441
      %v2443 = vrcp.pop %v2205
      %v2444 = vmul.f32 1.0, %v2443
      %v2445 = vrcp.pop %v2206
      %v2446 = vmul.f32 1.0, %v2445
      %v2447 = vrcp.pop %v2207
      %v2448 = vmul.f32 1.0, %v2447
      %v2449 = vrcp.pop %v2208
      %v2450 = vmul.f32 1.0, %v2449
      %v2451 = vrcp.pop %v2209
      %v2452 = vmul.f32 1.0, %v2451
      %v2453 = vrcp.pop %v2210
      %v2454 = vmul.f32 1.0, %v2453
      %v2455 = vrcp.pop %v2211
      %v2456 = vmul.f32 1.0, %v2455
      %v2457 = vrcp.pop %v2212
      %v2458 = vmul.f32 1.0, %v2457
      %v2459 = vrcp.pop %v2213
      %v2460 = vmul.f32 1.0, %v2459
      %v2461 = vrcp.pop %v2214
      %v2462 = vmul.f32 1.0, %v2461
      %v2463 = vrcp.pop %v2215
      %v2464 = vmul.f32 1.0, %v2463
      %v2465 = vrcp.pop %v2216
      %v2466 = vmul.f32 1.0, %v2465
      %v2467 = vrcp.pop %v2217
      %v2468 = vmul.f32 1.0, %v2467
      %v2469 = vrcp.pop %v2218
      %v2470 = vmul.f32 1.0, %v2469
      %v2471 = vrcp.pop %v2219
      %v2472 = vmul.f32 1.0, %v2471
      %v2473 = vrcp.pop %v2220
      %v2474 = vmul.f32 1.0, %v2473
      %v2475 = vrcp.pop %v2221
      %v2476 = vmul.f32 1.0, %v2475
      %v2477 = vrcp.pop %v2222
      %v2478 = vmul.f32 1.0, %v2477
      %2543 = vrot.lane.b32.xlu0 %v460, 64
      %v2544 = vpop.permute.xlu0 %2543
      %2545 = vrot.lane.b32.xlu0 %v461, 64
      %v2546 = vpop.permute.xlu0 %2545
      %2547 = vrot.lane.b32.xlu0 %v462, 64
      %v2548 = vpop.permute.xlu0 %2547
      %2549 = vrot.lane.b32.xlu0 %v463, 64
      %v2550 = vpop.permute.xlu0 %2549
      %2551 = vrot.lane.b32.xlu0 %v464, 64
      %v2552 = vpop.permute.xlu0 %2551
      %2553 = vrot.lane.b32.xlu0 %v465, 64
      %v2554 = vpop.permute.xlu0 %2553
      %2555 = vrot.lane.b32.xlu0 %v466, 64
      %v2556 = vpop.permute.xlu0 %2555
      %2557 = vrot.lane.b32.xlu0 %v467, 64
      %v2558 = vpop.permute.xlu0 %2557
      %2559 = vrot.lane.b32.xlu0 %v468, 64
      %v2560 = vpop.permute.xlu0 %2559
      %2561 = vrot.lane.b32.xlu0 %v469, 64
      %v2562 = vpop.permute.xlu0 %2561
      %2563 = vrot.lane.b32.xlu0 %v470, 64
      %v2564 = vpop.permute.xlu0 %2563
      %2565 = vrot.lane.b32.xlu0 %v471, 64
      %v2566 = vpop.permute.xlu0 %2565
      %2567 = vrot.lane.b32.xlu0 %v472, 64
      %v2568 = vpop.permute.xlu0 %2567
      %2569 = vrot.lane.b32.xlu0 %v473, 64
      %v2570 = vpop.permute.xlu0 %2569
      %2571 = vrot.lane.b32.xlu0 %v474, 64
      %v2572 = vpop.permute.xlu0 %2571
      %2573 = vrot.lane.b32.xlu0 %v475, 64
      %v2574 = vpop.permute.xlu0 %2573
      %2575 = vrot.lane.b32.xlu0 %v476, 64
      %v2576 = vpop.permute.xlu0 %2575
      %2577 = vrot.lane.b32.xlu0 %v477, 64
      %v2578 = vpop.permute.xlu0 %2577
      %2579 = vrot.lane.b32.xlu0 %v478, 64
      %v2580 = vpop.permute.xlu0 %2579
      %2581 = vrot.lane.b32.xlu0 %v479, 64
      %v2582 = vpop.permute.xlu0 %2581
      %2583 = vrot.lane.b32.xlu0 %v480, 64
      %v2584 = vpop.permute.xlu0 %2583
      %2585 = vrot.lane.b32.xlu0 %v481, 64
      %v2586 = vpop.permute.xlu0 %2585
      %2587 = vrot.lane.b32.xlu0 %v482, 64
      %v2588 = vpop.permute.xlu0 %2587
      %2589 = vrot.lane.b32.xlu0 %v483, 64
      %v2590 = vpop.permute.xlu0 %2589
      %2591 = vrot.lane.b32.xlu0 %v484, 64
      %v2592 = vpop.permute.xlu0 %2591
      %2593 = vrot.lane.b32.xlu0 %v485, 64
      %v2594 = vpop.permute.xlu0 %2593
      %2595 = vrot.lane.b32.xlu0 %v486, 64
      %v2596 = vpop.permute.xlu0 %2595
      %2597 = vrot.lane.b32.xlu0 %v487, 64
      %v2598 = vpop.permute.xlu0 %2597
      %2599 = vrot.lane.b32.xlu0 %v488, 64
      %v2600 = vpop.permute.xlu0 %2599
      %2601 = vrot.lane.b32.xlu0 %v489, 64
      %v2602 = vpop.permute.xlu0 %2601
      %2603 = vrot.lane.b32.xlu0 %v490, 64
      %v2604 = vpop.permute.xlu0 %2603
      %2605 = vrot.lane.b32.xlu0 %v491, 64
      %v2606 = vpop.permute.xlu0 %2605
      %2607 = vrot.lane.b32.xlu0 %v492, 64
      %v2608 = vpop.permute.xlu0 %2607
      %2609 = vrot.lane.b32.xlu0 %v493, 64
      %v2610 = vpop.permute.xlu0 %2609
      %2611 = vrot.lane.b32.xlu0 %v494, 64
      %v2612 = vpop.permute.xlu0 %2611
      %2613 = vrot.lane.b32.xlu0 %v495, 64
      %v2614 = vpop.permute.xlu0 %2613
      %2615 = vrot.lane.b32.xlu0 %v496, 64
      %v2616 = vpop.permute.xlu0 %2615
      %2617 = vrot.lane.b32.xlu0 %v497, 64
      %v2618 = vpop.permute.xlu0 %2617
      %2619 = vrot.lane.b32.xlu0 %v498, 64
      %v2620 = vpop.permute.xlu0 %2619
      %2621 = vrot.lane.b32.xlu0 %v499, 64
      %v2622 = vpop.permute.xlu0 %2621
      %2623 = vrot.lane.b32.xlu0 %v500, 64
      %v2624 = vpop.permute.xlu0 %2623
      %2625 = vrot.lane.b32.xlu0 %v501, 64
      %v2626 = vpop.permute.xlu0 %2625
      %2627 = vrot.lane.b32.xlu0 %v502, 64
      %v2628 = vpop.permute.xlu0 %2627
      %2629 = vrot.lane.b32.xlu0 %v503, 64
      %v2630 = vpop.permute.xlu0 %2629
      %2631 = vrot.lane.b32.xlu0 %v504, 64
      %v2632 = vpop.permute.xlu0 %2631
      %2633 = vrot.lane.b32.xlu0 %v505, 64
      %v2634 = vpop.permute.xlu0 %2633
      %2635 = vrot.lane.b32.xlu0 %v506, 64
      %v2636 = vpop.permute.xlu0 %2635
      %2637 = vrot.lane.b32.xlu0 %v507, 64
      %v2638 = vpop.permute.xlu0 %2637
      %2639 = vrot.lane.b32.xlu0 %v508, 64
      %v2640 = vpop.permute.xlu0 %2639
      %2641 = vrot.lane.b32.xlu0 %v509, 64
      %v2642 = vpop.permute.xlu0 %2641
      %2643 = vrot.lane.b32.xlu0 %v510, 64
      %v2644 = vpop.permute.xlu0 %2643
      %2645 = vrot.lane.b32.xlu0 %v511, 64
      %v2646 = vpop.permute.xlu0 %2645
      %2647 = vrot.lane.b32.xlu0 %v512, 64
      %v2648 = vpop.permute.xlu0 %2647
      %2649 = vrot.lane.b32.xlu0 %v513, 64
      %v2650 = vpop.permute.xlu0 %2649
      %2651 = vrot.lane.b32.xlu0 %v514, 64
      %v2652 = vpop.permute.xlu0 %2651
      %2653 = vrot.lane.b32.xlu0 %v515, 64
      %v2654 = vpop.permute.xlu0 %2653
      %2655 = vrot.lane.b32.xlu0 %v516, 64
      %v2656 = vpop.permute.xlu0 %2655
      %2657 = vrot.lane.b32.xlu0 %v517, 64
      %v2658 = vpop.permute.xlu0 %2657
      %2659 = vrot.lane.b32.xlu0 %v518, 64
      %v2660 = vpop.permute.xlu0 %2659
      %2661 = vrot.lane.b32.xlu0 %v519, 64
      %v2662 = vpop.permute.xlu0 %2661
      %2663 = vrot.lane.b32.xlu0 %v520, 64
      %v2664 = vpop.permute.xlu0 %2663
      %2665 = vrot.lane.b32.xlu0 %v521, 64
      %v2666 = vpop.permute.xlu0 %2665
      %2667 = vrot.lane.b32.xlu0 %v522, 64
      %v2668 = vpop.permute.xlu0 %2667
      %2669 = vrot.lane.b32.xlu0 %v523, 64
      %v2670 = vpop.permute.xlu0 %2669
      %vm2735 = vcmask 523264
      %v2736 = vsel %vm2735, %v460, %v2544
      %v2737 = vsel %vm2735, %v461, %v2546
      %v2738 = vsel %vm2735, %v462, %v2548
      %v2739 = vsel %vm2735, %v463, %v2550
      %v2740 = vsel %vm2735, %v464, %v2552
      %v2741 = vsel %vm2735, %v465, %v2554
      %v2742 = vsel %vm2735, %v466, %v2556
      %v2743 = vsel %vm2735, %v467, %v2558
      %v2744 = vsel %vm2735, %v468, %v2560
      %v2745 = vsel %vm2735, %v469, %v2562
      %v2746 = vsel %vm2735, %v470, %v2564
      %v2747 = vsel %vm2735, %v471, %v2566
      %v2748 = vsel %vm2735, %v472, %v2568
      %v2749 = vsel %vm2735, %v473, %v2570
      %v2750 = vsel %vm2735, %v474, %v2572
      %v2751 = vsel %vm2735, %v475, %v2574
      %v2752 = vsel %vm2735, %v476, %v2576
      %v2753 = vsel %vm2735, %v477, %v2578
      %v2754 = vsel %vm2735, %v478, %v2580
      %v2755 = vsel %vm2735, %v479, %v2582
      %v2756 = vsel %vm2735, %v480, %v2584
      %v2757 = vsel %vm2735, %v481, %v2586
      %v2758 = vsel %vm2735, %v482, %v2588
      %v2759 = vsel %vm2735, %v483, %v2590
      %v2760 = vsel %vm2735, %v484, %v2592
      %v2761 = vsel %vm2735, %v485, %v2594
      %v2762 = vsel %vm2735, %v486, %v2596
      %v2763 = vsel %vm2735, %v487, %v2598
      %v2764 = vsel %vm2735, %v488, %v2600
      %v2765 = vsel %vm2735, %v489, %v2602
      %v2766 = vsel %vm2735, %v490, %v2604
      %v2767 = vsel %vm2735, %v491, %v2606
      %v2768 = vsel %vm2735, %v492, %v2608
      %v2769 = vsel %vm2735, %v493, %v2610
      %v2770 = vsel %vm2735, %v494, %v2612
      %v2771 = vsel %vm2735, %v495, %v2614
      %v2772 = vsel %vm2735, %v496, %v2616
      %v2773 = vsel %vm2735, %v497, %v2618
      %v2774 = vsel %vm2735, %v498, %v2620
      %v2775 = vsel %vm2735, %v499, %v2622
      %v2776 = vsel %vm2735, %v500, %v2624
      %v2777 = vsel %vm2735, %v501, %v2626
      %v2778 = vsel %vm2735, %v502, %v2628
      %v2779 = vsel %vm2735, %v503, %v2630
      %v2780 = vsel %vm2735, %v504, %v2632
      %v2781 = vsel %vm2735, %v505, %v2634
      %v2782 = vsel %vm2735, %v506, %v2636
      %v2783 = vsel %vm2735, %v507, %v2638
      %v2784 = vsel %vm2735, %v508, %v2640
      %v2785 = vsel %vm2735, %v509, %v2642
      %v2786 = vsel %vm2735, %v510, %v2644
      %v2787 = vsel %vm2735, %v511, %v2646
      %v2788 = vsel %vm2735, %v512, %v2648
      %v2789 = vsel %vm2735, %v513, %v2650
      %v2790 = vsel %vm2735, %v514, %v2652
      %v2791 = vsel %vm2735, %v515, %v2654
      %v2792 = vsel %vm2735, %v516, %v2656
      %v2793 = vsel %vm2735, %v517, %v2658
      %v2794 = vsel %vm2735, %v518, %v2660
      %v2795 = vsel %vm2735, %v519, %v2662
      %v2796 = vsel %vm2735, %v520, %v2664
      %v2797 = vsel %vm2735, %v521, %v2666
      %v2798 = vsel %vm2735, %v522, %v2668
      %v2799 = vsel %vm2735, %v523, %v2670
      %v2800 = vmul.f32 %v2736, %v2224
      %v2801 = vmul.f32 %v460, %v2226
      %v2802 = vmul.f32 %v2737, %v2228
      %v2803 = vmul.f32 %v461, %v2230
      %v2804 = vmul.f32 %v2738, %v2232
      %v2805 = vmul.f32 %v462, %v2234
      %v2806 = vmul.f32 %v2739, %v2236
      %v2807 = vmul.f32 %v463, %v2238
      %v2808 = vmul.f32 %v2740, %v2240
      %v2809 = vmul.f32 %v464, %v2242
      %v2810 = vmul.f32 %v2741, %v2244
      %v2811 = vmul.f32 %v465, %v2246
      %v2812 = vmul.f32 %v2742, %v2248
      %v2813 = vmul.f32 %v466, %v2250
      %v2814 = vmul.f32 %v2743, %v2252
      %v2815 = vmul.f32 %v467, %v2254
      %v2816 = vmul.f32 %v2744, %v2256
      %v2817 = vmul.f32 %v468, %v2258
      %v2818 = vmul.f32 %v2745, %v2260
      %v2819 = vmul.f32 %v469, %v2262
      %v2820 = vmul.f32 %v2746, %v2264
      %v2821 = vmul.f32 %v470, %v2266
      %v2822 = vmul.f32 %v2747, %v2268
      %v2823 = vmul.f32 %v471, %v2270
      %v2824 = vmul.f32 %v2748, %v2272
      %v2825 = vmul.f32 %v472, %v2274
      %v2826 = vmul.f32 %v2749, %v2276
      %v2827 = vmul.f32 %v473, %v2278
      %v2828 = vmul.f32 %v2750, %v2280
      %v2829 = vmul.f32 %v474, %v2282
      %v2830 = vmul.f32 %v2751, %v2284
      %v2831 = vmul.f32 %v475, %v2286
      %v2832 = vmul.f32 %v2752, %v2288
      %v2833 = vmul.f32 %v476, %v2290
      %v2834 = vmul.f32 %v2753, %v2292
      %v2835 = vmul.f32 %v477, %v2294
      %v2836 = vmul.f32 %v2754, %v2296
      %v2837 = vmul.f32 %v478, %v2298
      %v2838 = vmul.f32 %v2755, %v2300
      %v2839 = vmul.f32 %v479, %v2302
      %v2840 = vmul.f32 %v2756, %v2304
      %v2841 = vmul.f32 %v480, %v2306
      %v2842 = vmul.f32 %v2757, %v2308
      %v2843 = vmul.f32 %v481, %v2310
      %v2844 = vmul.f32 %v2758, %v2312
      %v2845 = vmul.f32 %v482, %v2314
      %v2846 = vmul.f32 %v2759, %v2316
      %v2847 = vmul.f32 %v483, %v2318
      %v2848 = vmul.f32 %v2760, %v2320
      %v2849 = vmul.f32 %v484, %v2322
      %v2850 = vmul.f32 %v2761, %v2324
      %v2851 = vmul.f32 %v485, %v2326
      %v2852 = vmul.f32 %v2762, %v2328
      %v2853 = vmul.f32 %v486, %v2330
      %v2854 = vmul.f32 %v2763, %v2332
      %v2855 = vmul.f32 %v487, %v2334
      %v2856 = vmul.f32 %v2764, %v2336
      %v2857 = vmul.f32 %v488, %v2338
      %v2858 = vmul.f32 %v2765, %v2340
      %v2859 = vmul.f32 %v489, %v2342
      %v2860 = vmul.f32 %v2766, %v2344
      %v2861 = vmul.f32 %v490, %v2346
      %v2862 = vmul.f32 %v2767, %v2348
      %v2863 = vmul.f32 %v491, %v2350
      %v2864 = vmul.f32 %v2768, %v2352
      %v2865 = vmul.f32 %v492, %v2354
      %v2866 = vmul.f32 %v2769, %v2356
      %v2867 = vmul.f32 %v493, %v2358
      %v2868 = vmul.f32 %v2770, %v2360
      %v2869 = vmul.f32 %v494, %v2362
      %v2870 = vmul.f32 %v2771, %v2364
      %v2871 = vmul.f32 %v495, %v2366
      %v2872 = vmul.f32 %v2772, %v2368
      %v2873 = vmul.f32 %v496, %v2370
      %v2874 = vmul.f32 %v2773, %v2372
      %v2875 = vmul.f32 %v497, %v2374
      %v2876 = vmul.f32 %v2774, %v2376
      %v2877 = vmul.f32 %v498, %v2378
      %v2878 = vmul.f32 %v2775, %v2380
      %v2879 = vmul.f32 %v499, %v2382
      %v2880 = vmul.f32 %v2776, %v2384
      %v2881 = vmul.f32 %v500, %v2386
      %v2882 = vmul.f32 %v2777, %v2388
      %v2883 = vmul.f32 %v501, %v2390
      %v2884 = vmul.f32 %v2778, %v2392
      %v2885 = vmul.f32 %v502, %v2394
      %v2886 = vmul.f32 %v2779, %v2396
      %v2887 = vmul.f32 %v503, %v2398
      %v2888 = vmul.f32 %v2780, %v2400
      %v2889 = vmul.f32 %v504, %v2402
      %v2890 = vmul.f32 %v2781, %v2404
      %v2891 = vmul.f32 %v505, %v2406
      %v2892 = vmul.f32 %v2782, %v2408
      %v2893 = vmul.f32 %v506, %v2410
      %v2894 = vmul.f32 %v2783, %v2412
      %v2895 = vmul.f32 %v507, %v2414
      %v2896 = vmul.f32 %v2784, %v2416
      %v2897 = vmul.f32 %v508, %v2418
      %v2898 = vmul.f32 %v2785, %v2420
      %v2899 = vmul.f32 %v509, %v2422
      %v2900 = vmul.f32 %v2786, %v2424
      %v2901 = vmul.f32 %v510, %v2426
      %v2902 = vmul.f32 %v2787, %v2428
      %v2903 = vmul.f32 %v511, %v2430
      %v2904 = vmul.f32 %v2788, %v2432
      %v2905 = vmul.f32 %v512, %v2434
      %v2906 = vmul.f32 %v2789, %v2436
      %v2907 = vmul.f32 %v513, %v2438
      %v2908 = vmul.f32 %v2790, %v2440
      %v2909 = vmul.f32 %v514, %v2442
      %v2910 = vmul.f32 %v2791, %v2444
      %v2911 = vmul.f32 %v515, %v2446
      %v2912 = vmul.f32 %v2792, %v2448
      %v2913 = vmul.f32 %v516, %v2450
      %v2914 = vmul.f32 %v2793, %v2452
      %v2915 = vmul.f32 %v517, %v2454
      %v2916 = vmul.f32 %v2794, %v2456
      %v2917 = vmul.f32 %v518, %v2458
      %v2918 = vmul.f32 %v2795, %v2460
      %v2919 = vmul.f32 %v519, %v2462
      %v2920 = vmul.f32 %v2796, %v2464
      %v2921 = vmul.f32 %v520, %v2466
      %v2922 = vmul.f32 %v2797, %v2468
      %v2923 = vmul.f32 %v521, %v2470
      %v2924 = vmul.f32 %v2798, %v2472
      %v2925 = vmul.f32 %v522, %v2474
      %v2926 = vmul.f32 %v2799, %v2476
      %v2927 = vmul.f32 %v523, %v2478
      %v2928 = vpack.c.bf16 %v2802, %v2800
      %v2929 = vpack.c.bf16 %v2803, %v2801
      %v2930 = vpack.c.bf16 %v2806, %v2804
      %v2931 = vpack.c.bf16 %v2807, %v2805
      %v2932 = vpack.c.bf16 %v2810, %v2808
      %v2933 = vpack.c.bf16 %v2811, %v2809
      %v2934 = vpack.c.bf16 %v2814, %v2812
      %v2935 = vpack.c.bf16 %v2815, %v2813
      %v2936 = vpack.c.bf16 %v2818, %v2816
      %v2937 = vpack.c.bf16 %v2819, %v2817
      %v2938 = vpack.c.bf16 %v2822, %v2820
      %v2939 = vpack.c.bf16 %v2823, %v2821
      %v2940 = vpack.c.bf16 %v2826, %v2824
      %v2941 = vpack.c.bf16 %v2827, %v2825
      %v2942 = vpack.c.bf16 %v2830, %v2828
      %v2943 = vpack.c.bf16 %v2831, %v2829
      %v2944 = vpack.c.bf16 %v2834, %v2832
      %v2945 = vpack.c.bf16 %v2835, %v2833
      %v2946 = vpack.c.bf16 %v2838, %v2836
      %v2947 = vpack.c.bf16 %v2839, %v2837
      %v2948 = vpack.c.bf16 %v2842, %v2840
      %v2949 = vpack.c.bf16 %v2843, %v2841
      %v2950 = vpack.c.bf16 %v2846, %v2844
      %v2951 = vpack.c.bf16 %v2847, %v2845
      %v2952 = vpack.c.bf16 %v2850, %v2848
      %v2953 = vpack.c.bf16 %v2851, %v2849
      %v2954 = vpack.c.bf16 %v2854, %v2852
      %v2955 = vpack.c.bf16 %v2855, %v2853
      %v2956 = vpack.c.bf16 %v2858, %v2856
      %v2957 = vpack.c.bf16 %v2859, %v2857
      %v2958 = vpack.c.bf16 %v2862, %v2860
      %v2959 = vpack.c.bf16 %v2863, %v2861
      %v2960 = vpack.c.bf16 %v2866, %v2864
      %v2961 = vpack.c.bf16 %v2867, %v2865
      %v2962 = vpack.c.bf16 %v2870, %v2868
      %v2963 = vpack.c.bf16 %v2871, %v2869
      %v2964 = vpack.c.bf16 %v2874, %v2872
      %v2965 = vpack.c.bf16 %v2875, %v2873
      %v2966 = vpack.c.bf16 %v2878, %v2876
      %v2967 = vpack.c.bf16 %v2879, %v2877
      %v2968 = vpack.c.bf16 %v2882, %v2880
      %v2969 = vpack.c.bf16 %v2883, %v2881
      %v2970 = vpack.c.bf16 %v2886, %v2884
      %v2971 = vpack.c.bf16 %v2887, %v2885
      %v2972 = vpack.c.bf16 %v2890, %v2888
      %v2973 = vpack.c.bf16 %v2891, %v2889
      %v2974 = vpack.c.bf16 %v2894, %v2892
      %v2975 = vpack.c.bf16 %v2895, %v2893
      %v2976 = vpack.c.bf16 %v2898, %v2896
      %v2977 = vpack.c.bf16 %v2899, %v2897
      %v2978 = vpack.c.bf16 %v2902, %v2900
      %v2979 = vpack.c.bf16 %v2903, %v2901
      %v2980 = vpack.c.bf16 %v2906, %v2904
      %v2981 = vpack.c.bf16 %v2907, %v2905
      %v2982 = vpack.c.bf16 %v2910, %v2908
      %v2983 = vpack.c.bf16 %v2911, %v2909
      %v2984 = vpack.c.bf16 %v2914, %v2912
      %v2985 = vpack.c.bf16 %v2915, %v2913
      %v2986 = vpack.c.bf16 %v2918, %v2916
      %v2987 = vpack.c.bf16 %v2919, %v2917
      %v2988 = vpack.c.bf16 %v2922, %v2920
      %v2989 = vpack.c.bf16 %v2923, %v2921
      %v2990 = vpack.c.bf16 %v2926, %v2924
      %v2991 = vpack.c.bf16 %v2927, %v2925
      %v2992 = vld [vmem:[%s6] sm:$0xf]
      %v2993 = vld [vmem:[%s6 + $0x4] sm:$0xf]
      %v2994 = vld [vmem:[%s6 + $0x8] sm:$0xf]
      %v2995 = vld [vmem:[%s6 + $0xc] sm:$0xf]
      %v2996 = vld [vmem:[%s6 + $0x10] sm:$0xf]
      %v2997 = vld [vmem:[%s6 + $0x14] sm:$0xf]
      %v2998 = vld [vmem:[%s6 + $0x18] sm:$0xf]
      %v2999 = vld [vmem:[%s6 + $0x1c] sm:$0xf]
      %v3000 = vld [vmem:[%s6 + $0x20] sm:$0xf]
      %v3001 = vld [vmem:[%s6 + $0x24] sm:$0xf]
      %v3002 = vld [vmem:[%s6 + $0x28] sm:$0xf]
      %v3003 = vld [vmem:[%s6 + $0x2c] sm:$0xf]
      %v3004 = vld [vmem:[%s6 + $0x30] sm:$0xf]
      %v3005 = vld [vmem:[%s6 + $0x34] sm:$0xf]
      %v3006 = vld [vmem:[%s6 + $0x38] sm:$0xf]
      %v3007 = vld [vmem:[%s6 + $0x3c] sm:$0xf]
      %v3008 = vld [vmem:[%s6 + $0x40] sm:$0xf]
      %v3009 = vld [vmem:[%s6 + $0x44] sm:$0xf]
      %v3010 = vld [vmem:[%s6 + $0x48] sm:$0xf]
      %v3011 = vld [vmem:[%s6 + $0x4c] sm:$0xf]
      %v3012 = vld [vmem:[%s6 + $0x50] sm:$0xf]
      %v3013 = vld [vmem:[%s6 + $0x54] sm:$0xf]
      %v3014 = vld [vmem:[%s6 + $0x58] sm:$0xf]
      %v3015 = vld [vmem:[%s6 + $0x5c] sm:$0xf]
      %v3016 = vld [vmem:[%s7] sm:$0x1]
      %v3018 = vlaneseq
      %v3019 = vshrl.u32 %v3018, 7
      %v3020 = vsub.s32 0, %v3019
      %v3021 = vrot.slane %v3016, %v3020
      %v3047 = vunpack.c.l.b16 %v2992
      %v3048 = vunpack.c.l.b16 %v2993
      %v3049 = vunpack.c.l.b16 %v2994
      %v3050 = vunpack.c.l.b16 %v2995
      %v3051 = vunpack.c.l.b16 %v2996
      %v3052 = vunpack.c.l.b16 %v2997
      %v3053 = vunpack.c.l.b16 %v2998
      %v3054 = vunpack.c.l.b16 %v2999
      %v3055 = vunpack.c.l.b16 %v3000
      %v3056 = vunpack.c.l.b16 %v3001
      %v3057 = vunpack.c.l.b16 %v3002
      %v3058 = vunpack.c.l.b16 %v3003
      %v3059 = vunpack.c.l.b16 %v3004
      %v3060 = vunpack.c.l.b16 %v3005
      %v3061 = vunpack.c.l.b16 %v3006
      %v3062 = vunpack.c.l.b16 %v3007
      %v3063 = vunpack.c.l.b16 %v3008
      %v3064 = vunpack.c.l.b16 %v3009
      %v3065 = vunpack.c.l.b16 %v3010
      %v3066 = vunpack.c.l.b16 %v3011
      %v3067 = vunpack.c.l.b16 %v3012
      %v3068 = vunpack.c.l.b16 %v3013
      %v3069 = vunpack.c.l.b16 %v3014
      %v3070 = vunpack.c.l.b16 %v3015
      %v3071 = vpack.c.b16 %v3048, %v3047
      %v3072 = vpack.c.b16 %v3050, %v3049
      %v3073 = vpack.c.b16 %v3052, %v3051
      %v3074 = vpack.c.b16 %v3054, %v3053
      %v3075 = vpack.c.b16 %v3056, %v3055
      %v3076 = vpack.c.b16 %v3058, %v3057
      %v3077 = vpack.c.b16 %v3060, %v3059
      %v3078 = vpack.c.b16 %v3062, %v3061
      %v3079 = vpack.c.b16 %v3064, %v3063
      %v3080 = vpack.c.b16 %v3066, %v3065
      %v3081 = vpack.c.b16 %v3068, %v3067
      %v3082 = vpack.c.b16 %v3070, %v3069
      %v3096 = vsel %vm2735, %v2929, 0
      %v3099 = vsel %vm2735, %v2931, 0
      %v3102 = vsel %vm2735, %v2933, 0
      %v3105 = vsel %vm2735, %v2935, 0
      %v3108 = vsel %vm2735, %v2937, 0
      %v3111 = vsel %vm2735, %v2939, 0
      %v3114 = vsel %vm2735, %v2941, 0
      %v3117 = vsel %vm2735, %v2943, 0
      %v3120 = vsel %vm2735, %v2945, 0
      %v3123 = vsel %vm2735, %v2947, 0
      %v3126 = vsel %vm2735, %v2949, 0
      %v3129 = vsel %vm2735, %v2951, 0
      %v3132 = vsel %vm2735, %v2953, 0
      %v3135 = vsel %vm2735, %v2955, 0
      %v3138 = vsel %vm2735, %v2957, 0
      %v3141 = vsel %vm2735, %v2959, 0
      %v3144 = vsel %vm2735, %v2961, 0
      %v3147 = vsel %vm2735, %v2963, 0
      %v3150 = vsel %vm2735, %v2965, 0
      %v3153 = vsel %vm2735, %v2967, 0
      %v3156 = vsel %vm2735, %v2969, 0
      %v3159 = vsel %vm2735, %v2971, 0
      %v3162 = vsel %vm2735, %v2973, 0
      %v3165 = vsel %vm2735, %v2975, 0
      %v3168 = vsel %vm2735, %v2977, 0
      %v3171 = vsel %vm2735, %v2979, 0
      %v3174 = vsel %vm2735, %v2981, 0
      %v3177 = vsel %vm2735, %v2983, 0
      %v3180 = vsel %vm2735, %v2985, 0
      %v3183 = vsel %vm2735, %v2987, 0
      %v3186 = vsel %vm2735, %v2989, 0
      %v3189 = vsel %vm2735, %v2991, 0
      %3191 = vmatprep.subr.bf16.mxu0 0
      %3192 = vmatpush1.bf16.msra.mxu0 %v3071
      %3193 = vmatprep.subr.bf16.mxu0 0
      %3194 = vmatpush1.bf16.msra.mxu0 %v3072
      %3195 = vmatprep.subr.bf16.mxu0 0
      %3196 = vmatpush1.bf16.msra.mxu0 %v3073
      %3197 = vmatprep.subr.bf16.mxu0 0
      %3198 = vmatpush1.bf16.msra.mxu0 %v3074
      %3199 = vmatprep.subr.bf16.mxu0 0
      %3200 = vmatpush1.bf16.msra.mxu0 %v3075
      %3201 = vmatprep.subr.bf16.mxu0 0
      %3202 = vmatpush1.bf16.msra.mxu0 %v3076
      %3203 = vmatprep.subr.bf16.mxu0 0
      %3204 = vmatpush1.bf16.msra.mxu0 %v3077
      %3205 = vmatprep.subr.bf16.mxu0 0
      %3206 = vmatpush1.bf16.msra.mxu0 %v3078
      %3207 = vmatprep.subr.bf16.mxu0 0
      %3208 = vmatpush1.bf16.msra.mxu0 %v3079
      %3209 = vmatprep.subr.bf16.mxu0 0
      %3210 = vmatpush1.bf16.msra.mxu0 %v3080
      %3211 = vmatprep.subr.bf16.mxu0 0
      %3212 = vmatpush1.bf16.msra.mxu0 %v3081
      %3213 = vmatprep.subr.bf16.mxu0 0
      %3214 = vmatpush1.bf16.msra.mxu0 %v3082
      %3215 = vmatprep.subr.bf16.mxu0 0
      %3216 = vmatpush1.bf16.msra.mxu0 0
      %3217 = vmatprep.subr.bf16.mxu0 0
      %3218 = vmatpush1.bf16.msra.mxu0 0
      %3219 = vmatprep.subr.bf16.mxu0 0
      %3220 = vmatpush1.bf16.msra.mxu0 0
      %3221 = vmatprep.subr.bf16.mxu0 0
      %3222 = vmatpush1.bf16.msra.mxu0 0
      %3223 = vmatprep.mubr.bf16.mxu0 %v3096
      %3224 = vmatmul.mubr.bf16.gmra.mrb[0].mxu0 %v2928
      %v3225 = vpop.f32.mrb[0].mxu0
      %v3226 = vadd.f32 %v3021, %v3225
      %v3227 = vpop.f32.mrb[0].mxu0
      %v3228 = vpop.f32.mrb[0].mxu0
      %v3229 = vadd.f32 %v3021, %v3228
      %v3230 = vpop.f32.mrb[0].mxu0
      %3231 = vmatprep.mubr.bf16.mxu0 %v3099
      %3232 = vmatmul.mubr.bf16.gmra.mrb[0].mxu0 %v2930
      %v3233 = vpop.f32.mrb[0].mxu0
      %v3234 = vadd.f32 %v3021, %v3233
      %v3235 = vpop.f32.mrb[0].mxu0
      %v3236 = vpop.f32.mrb[0].mxu0
      %v3237 = vadd.f32 %v3021, %v3236
      %v3238 = vpop.f32.mrb[0].mxu0
      %3239 = vmatprep.mubr.bf16.mxu0 %v3102
      %3240 = vmatmul.mubr.bf16.gmra.mrb[0].mxu0 %v2932
      %v3241 = vpop.f32.mrb[0].mxu0
      %v3242 = vadd.f32 %v3021, %v3241
      %v3243 = vpop.f32.mrb[0].mxu0
      %v3244 = vpop.f32.mrb[0].mxu0
      %v3245 = vadd.f32 %v3021, %v3244
      %v3246 = vpop.f32.mrb[0].mxu0
      %3247 = vmatprep.mubr.bf16.mxu0 %v3105
      %3248 = vmatmul.mubr.bf16.gmra.mrb[0].mxu0 %v2934
      %v3249 = vpop.f32.mrb[0].mxu0
      %v3250 = vadd.f32 %v3021, %v3249
      %v3251 = vpop.f32.mrb[0].mxu0
      %v3252 = vpop.f32.mrb[0].mxu0
      %v3253 = vadd.f32 %v3021, %v3252
      %v3254 = vpop.f32.mrb[0].mxu0
      %3255 = vmatprep.mubr.bf16.mxu0 %v3108
      %3256 = vmatmul.mubr.bf16.gmra.mrb[0].mxu0 %v2936
      %v3257 = vpop.f32.mrb[0].mxu0
      %v3258 = vadd.f32 %v3021, %v3257
      %v3259 = vpop.f32.mrb[0].mxu0
      %v3260 = vpop.f32.mrb[0].mxu0
      %v3261 = vadd.f32 %v3021, %v3260
      %v3262 = vpop.f32.mrb[0].mxu0
      %3263 = vmatprep.mubr.bf16.mxu0 %v3111
      %3264 = vmatmul.mubr.bf16.gmra.mrb[0].mxu0 %v2938
      %v3265 = vpop.f32.mrb[0].mxu0
      %v3266 = vadd.f32 %v3021, %v3265
      %v3267 = vpop.f32.mrb[0].mxu0
      %v3268 = vpop.f32.mrb[0].mxu0
      %v3269 = vadd.f32 %v3021, %v3268
      %v3270 = vpop.f32.mrb[0].mxu0
      %3271 = vmatprep.mubr.bf16.mxu0 %v3114
      %3272 = vmatmul.mubr.bf16.gmra.mrb[0].mxu0 %v2940
      %v3273 = vpop.f32.mrb[0].mxu0
      %v3274 = vadd.f32 %v3021, %v3273
      %v3275 = vpop.f32.mrb[0].mxu0
      %v3276 = vpop.f32.mrb[0].mxu0
      %v3277 = vadd.f32 %v3021, %v3276
      %v3278 = vpop.f32.mrb[0].mxu0
      %3279 = vmatprep.mubr.bf16.mxu0 %v3117
      %3280 = vmatmul.mubr.bf16.gmra.mrb[0].mxu0 %v2942
      %v3281 = vpop.f32.mrb[0].mxu0
      %v3282 = vadd.f32 %v3021, %v3281
      %v3283 = vpop.f32.mrb[0].mxu0
      %v3284 = vpop.f32.mrb[0].mxu0
      %v3285 = vadd.f32 %v3021, %v3284
      %v3286 = vpop.f32.mrb[0].mxu0
      %3287 = vmatprep.mubr.bf16.mxu0 %v3120
      %3288 = vmatmul.mubr.bf16.gmra.mrb[0].mxu0 %v2944
      %v3289 = vpop.f32.mrb[0].mxu0
      %v3290 = vadd.f32 %v3021, %v3289
      %v3291 = vpop.f32.mrb[0].mxu0
      %v3292 = vpop.f32.mrb[0].mxu0
      %v3293 = vadd.f32 %v3021, %v3292
      %v3294 = vpop.f32.mrb[0].mxu0
      %3295 = vmatprep.mubr.bf16.mxu0 %v3123
      %3296 = vmatmul.mubr.bf16.gmra.mrb[0].mxu0 %v2946
      %v3297 = vpop.f32.mrb[0].mxu0
      %v3298 = vadd.f32 %v3021, %v3297
      %v3299 = vpop.f32.mrb[0].mxu0
      %v3300 = vpop.f32.mrb[0].mxu0
      %v3301 = vadd.f32 %v3021, %v3300
      %v3302 = vpop.f32.mrb[0].mxu0
      %3303 = vmatprep.mubr.bf16.mxu0 %v3126
      %3304 = vmatmul.mubr.bf16.gmra.mrb[0].mxu0 %v2948
      %v3305 = vpop.f32.mrb[0].mxu0
      %v3306 = vadd.f32 %v3021, %v3305
      %v3307 = vpop.f32.mrb[0].mxu0
      %v3308 = vpop.f32.mrb[0].mxu0
      %v3309 = vadd.f32 %v3021, %v3308
      %v3310 = vpop.f32.mrb[0].mxu0
      %3311 = vmatprep.mubr.bf16.mxu0 %v3129
      %3312 = vmatmul.mubr.bf16.gmra.mrb[0].mxu0 %v2950
      %v3313 = vpop.f32.mrb[0].mxu0
      %v3314 = vadd.f32 %v3021, %v3313
      %v3315 = vpop.f32.mrb[0].mxu0
      %v3316 = vpop.f32.mrb[0].mxu0
      %v3317 = vadd.f32 %v3021, %v3316
      %v3318 = vpop.f32.mrb[0].mxu0
      %3319 = vmatprep.mubr.bf16.mxu0 %v3132
      %3320 = vmatmul.mubr.bf16.gmra.mrb[0].mxu0 %v2952
      %v3321 = vpop.f32.mrb[0].mxu0
      %v3322 = vadd.f32 %v3021, %v3321
      %v3323 = vpop.f32.mrb[0].mxu0
      %v3324 = vpop.f32.mrb[0].mxu0
      %v3325 = vadd.f32 %v3021, %v3324
      %v3326 = vpop.f32.mrb[0].mxu0
      %3327 = vmatprep.mubr.bf16.mxu0 %v3135
      %3328 = vmatmul.mubr.bf16.gmra.mrb[0].mxu0 %v2954
      %v3329 = vpop.f32.mrb[0].mxu0
      %v3330 = vadd.f32 %v3021, %v3329
      %v3331 = vpop.f32.mrb[0].mxu0
      %v3332 = vpop.f32.mrb[0].mxu0
      %v3333 = vadd.f32 %v3021, %v3332
      %v3334 = vpop.f32.mrb[0].mxu0
      %3335 = vmatprep.mubr.bf16.mxu0 %v3138
      %3336 = vmatmul.mubr.bf16.gmra.mrb[0].mxu0 %v2956
      %v3337 = vpop.f32.mrb[0].mxu0
      %v3338 = vadd.f32 %v3021, %v3337
      %v3339 = vpop.f32.mrb[0].mxu0
      %v3340 = vpop.f32.mrb[0].mxu0
      %v3341 = vadd.f32 %v3021, %v3340
      %v3342 = vpop.f32.mrb[0].mxu0
      %3343 = vmatprep.mubr.bf16.mxu0 %v3141
      %3344 = vmatmul.mubr.bf16.gmra.mrb[0].mxu0 %v2958
      %v3345 = vpop.f32.mrb[0].mxu0
      %v3346 = vadd.f32 %v3021, %v3345
      %v3347 = vpop.f32.mrb[0].mxu0
      %v3348 = vpop.f32.mrb[0].mxu0
      %v3349 = vadd.f32 %v3021, %v3348
      %v3350 = vpop.f32.mrb[0].mxu0
      %3351 = vmatprep.mubr.bf16.mxu0 %v3144
      %3352 = vmatmul.mubr.bf16.gmra.mrb[0].mxu0 %v2960
      %v3353 = vpop.f32.mrb[0].mxu0
      %v3354 = vadd.f32 %v3021, %v3353
      %v3355 = vpop.f32.mrb[0].mxu0
      %v3356 = vpop.f32.mrb[0].mxu0
      %v3357 = vadd.f32 %v3021, %v3356
      %v3358 = vpop.f32.mrb[0].mxu0
      %3359 = vmatprep.mubr.bf16.mxu0 %v3147
      %3360 = vmatmul.mubr.bf16.gmra.mrb[0].mxu0 %v2962
      %v3361 = vpop.f32.mrb[0].mxu0
      %v3362 = vadd.f32 %v3021, %v3361
      %v3363 = vpop.f32.mrb[0].mxu0
      %v3364 = vpop.f32.mrb[0].mxu0
      %v3365 = vadd.f32 %v3021, %v3364
      %v3366 = vpop.f32.mrb[0].mxu0
      %3367 = vmatprep.mubr.bf16.mxu0 %v3150
      %3368 = vmatmul.mubr.bf16.gmra.mrb[0].mxu0 %v2964
      %v3369 = vpop.f32.mrb[0].mxu0
      %v3370 = vadd.f32 %v3021, %v3369
      %v3371 = vpop.f32.mrb[0].mxu0
      %v3372 = vpop.f32.mrb[0].mxu0
      %v3373 = vadd.f32 %v3021, %v3372
      %v3374 = vpop.f32.mrb[0].mxu0
      %3375 = vmatprep.mubr.bf16.mxu0 %v3153
      %3376 = vmatmul.mubr.bf16.gmra.mrb[0].mxu0 %v2966
      %v3377 = vpop.f32.mrb[0].mxu0
      %v3378 = vadd.f32 %v3021, %v3377
      %v3379 = vpop.f32.mrb[0].mxu0
      %v3380 = vpop.f32.mrb[0].mxu0
      %v3381 = vadd.f32 %v3021, %v3380
      %v3382 = vpop.f32.mrb[0].mxu0
      %3383 = vmatprep.mubr.bf16.mxu0 %v3156
      %3384 = vmatmul.mubr.bf16.gmra.mrb[0].mxu0 %v2968
      %v3385 = vpop.f32.mrb[0].mxu0
      %v3386 = vadd.f32 %v3021, %v3385
      %v3387 = vpop.f32.mrb[0].mxu0
      %v3388 = vpop.f32.mrb[0].mxu0
      %v3389 = vadd.f32 %v3021, %v3388
      %v3390 = vpop.f32.mrb[0].mxu0
      %3391 = vmatprep.mubr.bf16.mxu0 %v3159
      %3392 = vmatmul.mubr.bf16.gmra.mrb[0].mxu0 %v2970
      %v3393 = vpop.f32.mrb[0].mxu0
      %v3394 = vadd.f32 %v3021, %v3393
      %v3395 = vpop.f32.mrb[0].mxu0
      %v3396 = vpop.f32.mrb[0].mxu0
      %v3397 = vadd.f32 %v3021, %v3396
      %v3398 = vpop.f32.mrb[0].mxu0
      %3399 = vmatprep.mubr.bf16.mxu0 %v3162
      %3400 = vmatmul.mubr.bf16.gmra.mrb[0].mxu0 %v2972
      %v3401 = vpop.f32.mrb[0].mxu0
      %v3402 = vadd.f32 %v3021, %v3401
      %v3403 = vpop.f32.mrb[0].mxu0
      %v3404 = vpop.f32.mrb[0].mxu0
      %v3405 = vadd.f32 %v3021, %v3404
      %v3406 = vpop.f32.mrb[0].mxu0
      %3407 = vmatprep.mubr.bf16.mxu0 %v3165
      %3408 = vmatmul.mubr.bf16.gmra.mrb[0].mxu0 %v2974
      %v3409 = vpop.f32.mrb[0].mxu0
      %v3410 = vadd.f32 %v3021, %v3409
      %v3411 = vpop.f32.mrb[0].mxu0
      %v3412 = vpop.f32.mrb[0].mxu0
      %v3413 = vadd.f32 %v3021, %v3412
      %v3414 = vpop.f32.mrb[0].mxu0
      %3415 = vmatprep.mubr.bf16.mxu0 %v3168
      %3416 = vmatmul.mubr.bf16.gmra.mrb[0].mxu0 %v2976
      %v3417 = vpop.f32.mrb[0].mxu0
      %v3418 = vadd.f32 %v3021, %v3417
      %v3419 = vpop.f32.mrb[0].mxu0
      %v3420 = vpop.f32.mrb[0].mxu0
      %v3421 = vadd.f32 %v3021, %v3420
      %v3422 = vpop.f32.mrb[0].mxu0
      %3423 = vmatprep.mubr.bf16.mxu0 %v3171
      %3424 = vmatmul.mubr.bf16.gmra.mrb[0].mxu0 %v2978
      %v3425 = vpop.f32.mrb[0].mxu0
      %v3426 = vadd.f32 %v3021, %v3425
      %v3427 = vpop.f32.mrb[0].mxu0
      %v3428 = vpop.f32.mrb[0].mxu0
      %v3429 = vadd.f32 %v3021, %v3428
      %v3430 = vpop.f32.mrb[0].mxu0
      %3431 = vmatprep.mubr.bf16.mxu0 %v3174
      %3432 = vmatmul.mubr.bf16.gmra.mrb[0].mxu0 %v2980
      %v3433 = vpop.f32.mrb[0].mxu0
      %v3434 = vadd.f32 %v3021, %v3433
      %v3435 = vpop.f32.mrb[0].mxu0
      %v3436 = vpop.f32.mrb[0].mxu0
      %v3437 = vadd.f32 %v3021, %v3436
      %v3438 = vpop.f32.mrb[0].mxu0
      %3439 = vmatprep.mubr.bf16.mxu0 %v3177
      %3440 = vmatmul.mubr.bf16.gmra.mrb[0].mxu0 %v2982
      %v3441 = vpop.f32.mrb[0].mxu0
      %v3442 = vadd.f32 %v3021, %v3441
      %v3443 = vpop.f32.mrb[0].mxu0
      %v3444 = vpop.f32.mrb[0].mxu0
      %v3445 = vadd.f32 %v3021, %v3444
      %v3446 = vpop.f32.mrb[0].mxu0
      %3447 = vmatprep.mubr.bf16.mxu0 %v3180
      %3448 = vmatmul.mubr.bf16.gmra.mrb[0].mxu0 %v2984
      %v3449 = vpop.f32.mrb[0].mxu0
      %v3450 = vadd.f32 %v3021, %v3449
      %v3451 = vpop.f32.mrb[0].mxu0
      %v3452 = vpop.f32.mrb[0].mxu0
      %v3453 = vadd.f32 %v3021, %v3452
      %v3454 = vpop.f32.mrb[0].mxu0
      %3455 = vmatprep.mubr.bf16.mxu0 %v3183
      %3456 = vmatmul.mubr.bf16.gmra.mrb[0].mxu0 %v2986
      %v3457 = vpop.f32.mrb[0].mxu0
      %v3458 = vadd.f32 %v3021, %v3457
      %v3459 = vpop.f32.mrb[0].mxu0
      %v3460 = vpop.f32.mrb[0].mxu0
      %v3461 = vadd.f32 %v3021, %v3460
      %v3462 = vpop.f32.mrb[0].mxu0
      %3463 = vmatprep.mubr.bf16.mxu0 %v3186
      %3464 = vmatmul.mubr.bf16.gmra.mrb[0].mxu0 %v2988
      %v3465 = vpop.f32.mrb[0].mxu0
      %v3466 = vadd.f32 %v3021, %v3465
      %v3467 = vpop.f32.mrb[0].mxu0
      %v3468 = vpop.f32.mrb[0].mxu0
      %v3469 = vadd.f32 %v3021, %v3468
      %v3470 = vpop.f32.mrb[0].mxu0
      %3471 = vmatprep.mubr.bf16.mxu0 %v3189
      %3472 = vmatmul.mubr.bf16.gmra.mrb[0].mxu0 %v2990
      %v3473 = vpop.f32.mrb[0].mxu0
      %v3474 = vadd.f32 %v3021, %v3473
      %v3475 = vpop.f32.mrb[0].mxu0
      %v3476 = vpop.f32.mrb[0].mxu0
      %v3477 = vadd.f32 %v3021, %v3476
      %v3478 = vpop.f32.mrb[0].mxu0
      %3479 = vdwg.mxu0
      %vm3480 = vcmask 261120
      %3481 = vst.msk [vmem:[%s329] sm:$0xff] %vm3480, %v3226
      %3482 = vst.msk [vmem:[%s329 + $0x8] sm:$0xff] %vm3480, %v3229
      %3483 = vst.msk [vmem:[%s329 + $0x10] sm:$0xff] %vm3480, %v3234
      %3484 = vst.msk [vmem:[%s329 + $0x18] sm:$0xff] %vm3480, %v3237
      %3485 = vst.msk [vmem:[%s329 + $0x20] sm:$0xff] %vm3480, %v3242
      %3486 = vst.msk [vmem:[%s329 + $0x28] sm:$0xff] %vm3480, %v3245
      %3487 = vst.msk [vmem:[%s329 + $0x30] sm:$0xff] %vm3480, %v3250
      %3488 = vst.msk [vmem:[%s329 + $0x38] sm:$0xff] %vm3480, %v3253
      %3489 = vst.msk [vmem:[%s329 + $0x40] sm:$0xff] %vm3480, %v3258
      %3490 = vst.msk [vmem:[%s329 + $0x48] sm:$0xff] %vm3480, %v3261
      %3491 = vst.msk [vmem:[%s329 + $0x50] sm:$0xff] %vm3480, %v3266
      %3492 = vst.msk [vmem:[%s329 + $0x58] sm:$0xff] %vm3480, %v3269
      %3493 = vst.msk [vmem:[%s329 + $0x60] sm:$0xff] %vm3480, %v3274
      %3494 = vst.msk [vmem:[%s329 + $0x68] sm:$0xff] %vm3480, %v3277
      %3495 = vst.msk [vmem:[%s329 + $0x70] sm:$0xff] %vm3480, %v3282
      %3496 = vst.msk [vmem:[%s329 + $0x78] sm:$0xff] %vm3480, %v3285
      %3497 = vst.msk [vmem:[%s329 + $0x80] sm:$0xff] %vm3480, %v3290
      %3498 = vst.msk [vmem:[%s329 + $0x88] sm:$0xff] %vm3480, %v3293
      %3499 = vst.msk [vmem:[%s329 + $0x90] sm:$0xff] %vm3480, %v3298
      %3500 = vst.msk [vmem:[%s329 + $0x98] sm:$0xff] %vm3480, %v3301
      %3501 = vst.msk [vmem:[%s329 + $0xa0] sm:$0xff] %vm3480, %v3306
      %3502 = vst.msk [vmem:[%s329 + $0xa8] sm:$0xff] %vm3480, %v3309
      %3503 = vst.msk [vmem:[%s329 + $0xb0] sm:$0xff] %vm3480, %v3314
      %3504 = vst.msk [vmem:[%s329 + $0xb8] sm:$0xff] %vm3480, %v3317
      %3505 = vst.msk [vmem:[%s329 + $0xc0] sm:$0xff] %vm3480, %v3322
      %3506 = vst.msk [vmem:[%s329 + $0xc8] sm:$0xff] %vm3480, %v3325
      %3507 = vst.msk [vmem:[%s329 + $0xd0] sm:$0xff] %vm3480, %v3330
      %3508 = vst.msk [vmem:[%s329 + $0xd8] sm:$0xff] %vm3480, %v3333
      %3509 = vst.msk [vmem:[%s329 + $0xe0] sm:$0xff] %vm3480, %v3338
      %3510 = vst.msk [vmem:[%s329 + $0xe8] sm:$0xff] %vm3480, %v3341
      %3511 = vst.msk [vmem:[%s329 + $0xf0] sm:$0xff] %vm3480, %v3346
      %3512 = vst.msk [vmem:[%s329 + $0xf8] sm:$0xff] %vm3480, %v3349
      %3513 = vst.msk [vmem:[%s329 + $0x100] sm:$0xff] %vm3480, %v3354
      %3514 = vst.msk [vmem:[%s329 + $0x108] sm:$0xff] %vm3480, %v3357
      %3515 = vst.msk [vmem:[%s329 + $0x110] sm:$0xff] %vm3480, %v3362
      %3516 = vst.msk [vmem:[%s329 + $0x118] sm:$0xff] %vm3480, %v3365
      %3517 = vst.msk [vmem:[%s329 + $0x120] sm:$0xff] %vm3480, %v3370
      %3518 = vst.msk [vmem:[%s329 + $0x128] sm:$0xff] %vm3480, %v3373
      %3519 = vst.msk [vmem:[%s329 + $0x130] sm:$0xff] %vm3480, %v3378
      %3520 = vst.msk [vmem:[%s329 + $0x138] sm:$0xff] %vm3480, %v3381
      %3521 = vst.msk [vmem:[%s329 + $0x140] sm:$0xff] %vm3480, %v3386
      %3522 = vst.msk [vmem:[%s329 + $0x148] sm:$0xff] %vm3480, %v3389
      %3523 = vst.msk [vmem:[%s329 + $0x150] sm:$0xff] %vm3480, %v3394
      %3524 = vst.msk [vmem:[%s329 + $0x158] sm:$0xff] %vm3480, %v3397
      %3525 = vst.msk [vmem:[%s329 + $0x160] sm:$0xff] %vm3480, %v3402
      %3526 = vst.msk [vmem:[%s329 + $0x168] sm:$0xff] %vm3480, %v3405
      %3527 = vst.msk [vmem:[%s329 + $0x170] sm:$0xff] %vm3480, %v3410
      %3528 = vst.msk [vmem:[%s329 + $0x178] sm:$0xff] %vm3480, %v3413
      %3529 = vst.msk [vmem:[%s329 + $0x180] sm:$0xff] %vm3480, %v3418
      %3530 = vst.msk [vmem:[%s329 + $0x188] sm:$0xff] %vm3480, %v3421
      %3531 = vst.msk [vmem:[%s329 + $0x190] sm:$0xff] %vm3480, %v3426
      %3532 = vst.msk [vmem:[%s329 + $0x198] sm:$0xff] %vm3480, %v3429
      %3533 = vst.msk [vmem:[%s329 + $0x1a0] sm:$0xff] %vm3480, %v3434
      %3534 = vst.msk [vmem:[%s329 + $0x1a8] sm:$0xff] %vm3480, %v3437
      %3535 = vst.msk [vmem:[%s329 + $0x1b0] sm:$0xff] %vm3480, %v3442
      %3536 = vst.msk [vmem:[%s329 + $0x1b8] sm:$0xff] %vm3480, %v3445
      %3537 = vst.msk [vmem:[%s329 + $0x1c0] sm:$0xff] %vm3480, %v3450
      %3538 = vst.msk [vmem:[%s329 + $0x1c8] sm:$0xff] %vm3480, %v3453
      %3539 = vst.msk [vmem:[%s329 + $0x1d0] sm:$0xff] %vm3480, %v3458
      %3540 = vst.msk [vmem:[%s329 + $0x1d8] sm:$0xff] %vm3480, %v3461
      %3541 = vst.msk [vmem:[%s329 + $0x1e0] sm:$0xff] %vm3480, %v3466
      %3542 = vst.msk [vmem:[%s329 + $0x1e8] sm:$0xff] %vm3480, %v3469
      %3543 = vst.msk [vmem:[%s329 + $0x1f0] sm:$0xff] %vm3480, %v3474
      %3544 = vst.msk [vmem:[%s329 + $0x1f8] sm:$0xff] %vm3480, %v3477
      %s3545 = smul.u32 64, %s19
      %p3546 = scmp.lt.s32.totalorder %s3545, 127
      %s3547 = scalar_select %p3546, %s3545, 127
      %s3548 = smul.addr %s3547, 8
      %s3549 = scalar_lea.vmem %s8, %s3548
      // Predicated region
      $region53: #{tpu_custom_call.1} parent=51 // pred_check
        %p3550 = pneg %p215
      $region54: #{tpu_custom_call.1} parent=51 // pred_check_branch
        %3552 = sbr.rel (%p3550) target = $region56
      $region55: #{tpu_custom_call.1} parent=51 // pred_region
        %s3553 = smul.u32 64, %s19
      $region56: #{tpu_custom_call.1} parent=51 // pred_fallthru
        _
    $region52: #{tpu_custom_call.1} parent=5 // pred_fallthru
      _
    %p3554 = scmp.le.s32.totalorder 2, %s14
    // Predicated region
    $region57: #{tpu_custom_call.1} parent=5 // pred_check
      %p3555 = pneg %p3554
    $region58: #{tpu_custom_call.1} parent=5 // pred_check_branch
      %3557 = sbr.rel (%p3555) target = $region60
    $region59: #{tpu_custom_call.1} parent=5 // pred_region
      %s3558 = ssub.s32 %s14, 2
      // Predicated region
      $region61: #{tpu_custom_call.1} parent=59 // pred_check
        %p3559 = pneg %p221
      $region62: #{tpu_custom_call.1} parent=59 // pred_check_branch
        %3561 = sbr.rel (%p3559) target = $region64
      $region63: #{tpu_custom_call.1} parent=59 // pred_region
        %s3562 = smul.u32 64, %s20
        %p3563 = scmp.lt.s32.totalorder %s3562, 127
        %s3564 = scalar_select %p3563, %s3562, 127
        %s3565 = smul.addr %s3564, 8
        %s3566 = scalar_lea.vmem %s8, %s3565
      $region64: #{tpu_custom_call.1} parent=59 // pred_fallthru
        _
    $region60: #{tpu_custom_call.1} parent=5 // pred_fallthru
      _
  $region6: #{tpu_custom_call.1} parent=0 // loop_footer
    %s18 = sadd.s32 1, %s14
  $region7: #{tpu_custom_call.1} parent=0 // loop_footer_branch
    %13 = sbr.rel target = $region3
  $region8: #{tpu_custom_call.1} parent=0 // loop_exit
    _

</llo_original>
